<compile_context>
chip_gen: v6e
topology: v6e:2x2x1
jax: 0.10.0
libtpu: 0.0.40
codegen_flags: <defaults>
</compile_context>

<pallas_src>
import functools
from typing import NamedTuple

import jax
import jax.numpy as jnp
from jax.experimental import pallas as pl
from jax.experimental.pallas import tpu as pltpu


class Config(NamedTuple):
    hidden: int = 32        # BERT hidden size H
    heads: int = 2
    inter: int = 64         # FFN intermediate size
    layers: int = 2
    lstm_hidden: int = 16   # Hl (per direction)
    classes: int = 2
    ln_eps: float = 1e-12
    lane_pad: int = 128     # lane-dense padded classifier / output width


# ------------------------------------------------------------------ in-kernel helpers
def _layernorm(x, g, b, eps):
    mu = jnp.mean(x, axis=-1, keepdims=True)
    var = jnp.mean((x - mu) ** 2, axis=-1, keepdims=True)
    return (x - mu) * jax.lax.rsqrt(var + eps) * g + b


def _gelu(y):
    # TODO(synk): PyTorch/HF BERT GELU is exact erf; tanh approximation differs ~1e-3.
    return 0.5 * y * (1.0 + jnp.tanh(0.7978845608028654 * (y + 0.044715 * y * y * y)))


def _sigmoid(z):
    # Exact sigmoid: approx-reciprocal error would compound through the LSTM recurrence.
    return 1.0 / (1.0 + jnp.exp(-z))


# ----------------------------------------------------------------------------- kernel
def _fused_forward_kernel(
        emb_ref, elng_ref, elnb_ref, bias_ref,
        wqkv_ref, bqkv_ref, wo_ref, bo_ref, ln1g_ref, ln1b_ref,
        w1_ref, b1_ref, w2_ref, b2_ref, ln2g_ref, ln2b_ref,
        wih_ref, bih_ref, whhf_ref, whhb_ref, wcls_ref, bcls_ref,
        o_ref, x_scr,
        *, B, S, H, nheads, Hl, eps):
    l = pl.program_id(0)
    n_layers = pl.num_programs(0)
    hd = H // nheads
    scale = 1.0 / (hd ** 0.5)

    # ---- embedding LayerNorm: only before the first transformer layer ----
    @pl.when(l == 0)
    def _():
        x_scr[...] = _layernorm(emb_ref[...], elng_ref[...], elnb_ref[...], eps)

    # ============================ transformer layer `l` ============================
    x = x_scr[...]                                                     # (B*S, H) resident

    # fused QKV projection: one MXU op with N = 3H
    qkv = jnp.dot(x, wqkv_ref[...], preferred_element_type=jnp.float32) + bqkv_ref[...]
    qkv3 = qkv.reshape(B, S, 3 * H)                                    # single reshape, all heads
    bias = bias_ref[...]                                               # (B, S) additive key mask

    ctx_parts = []
    for h in range(nheads):                                            # static per-head loop
        qh = qkv3[:, :, h * hd:(h + 1) * hd]
        kh = qkv3[:, :, H + h * hd:H + (h + 1) * hd]
        vh = qkv3[:, :, 2 * H + h * hd:2 * H + (h + 1) * hd]
        s = jnp.einsum("bqd,bkd->bqk", qh, kh,
                       preferred_element_type=jnp.float32) * scale
        s = s + bias[:, None, :]
        m = jnp.max(s, axis=-1, keepdims=True)
        p = jnp.exp(s - m)
        p = p * pl.reciprocal(jnp.sum(p, axis=-1, keepdims=True), approx=True)
        ctx_parts.append(jnp.einsum("bqk,bkd->bqd", p, vh,
                                    preferred_element_type=jnp.float32))
    ctx = jnp.concatenate(ctx_parts, axis=-1).reshape(B * S, H)

    attn = jnp.dot(ctx, wo_ref[...], preferred_element_type=jnp.float32) + bo_ref[...]
    h1 = _layernorm(attn + x, ln1g_ref[...], ln1b_ref[...], eps)

    ff = jnp.dot(h1, w1_ref[...], preferred_element_type=jnp.float32) + b1_ref[...]
    ff = _gelu(ff)
    ff = jnp.dot(ff, w2_ref[...], preferred_element_type=jnp.float32) + b2_ref[...]
    x_new = _layernorm(ff + h1, ln2g_ref[...], ln2b_ref[...], eps)
    x_scr[...] = x_new                                                 # stays in VMEM

    # ====== bidirectional LSTM -> mean pool -> classifier: only after last layer ======
    @pl.when(l == n_layers - 1)
    def _():
        G = 4 * Hl
        # Input gates for both directions in one lane-dense matmul (N = 8*Hl = 128).
        # Gate-column layout per direction: [i | f | o | g]; directions blocked [fwd | bwd].
        xg = jnp.dot(x_new, wih_ref[...], preferred_element_type=jnp.float32) + bih_ref[...]
        xg = xg.reshape(B, S, 2 * G)

        h_f = jnp.zeros((B, Hl), jnp.float32)
        c_f = jnp.zeros((B, Hl), jnp.float32)
        h_b = jnp.zeros((B, Hl), jnp.float32)
        c_b = jnp.zeros((B, Hl), jnp.float32)
        acc_f = jnp.zeros((B, Hl), jnp.float32)
        acc_b = jnp.zeros((B, Hl), jnp.float32)

        def cell(gates, c_prev):
            # sigmoid over one contiguous [i f o] slice, tanh over [g] only.
            sg = _sigmoid(gates[:, 0:3 * Hl])
            gg = jnp.tanh(gates[:, 3 * Hl:4 * Hl])
            i, f, o = sg[:, 0:Hl], sg[:, Hl:2 * Hl], sg[:, 2 * Hl:3 * Hl]
            c = f * c_prev + i * gg
            return o * jnp.tanh(c), c

        # Fully unrolled time loop (S small); fwd/bwd are independent dependency chains
        # with zero per-step concatenates. Backward direction walks position S-1-t.
        # TODO(synk): switch to lax.fori_loop(..., unroll=True) if S grows past ~16.
        for t in range(S):
            g_f = xg[:, t, 0:G] + jnp.dot(
                h_f, whhf_ref[...], preferred_element_type=jnp.float32)
            g_b = xg[:, S - 1 - t, G:2 * G] + jnp.dot(
                h_b, whhb_ref[...], preferred_element_type=jnp.float32)
            h_f, c_f = cell(g_f, c_f)
            h_b, c_b = cell(g_b, c_b)
            acc_f = acc_f + h_f
            acc_b = acc_b + h_b

        # mean over positions == mean over steps (order-invariant)
        pooled = jnp.concatenate([acc_f, acc_b], axis=-1) * (1.0 / S)  # (B, 2*Hl)
        # TODO(synk): dropout(p=0.3) is identity at inference; training mask not implemented.
        # Classifier weights are lane-padded to 128 cols -> unmasked lane-dense store.
        o_ref[...] = jnp.dot(pooled, wcls_ref[...],
                             preferred_element_type=jnp.float32) + bcls_ref[...]


# ----------------------------------------------------------------------------- wrapper
def _rep_spec(shape):
    """Full-array block, same block for every layer step (stays resident in VMEM)."""
    nd = len(shape)
    return pl.BlockSpec(shape, lambda l, _nd=nd: (0,) * _nd)


def _layer_spec(shape):
    """Per-layer block: leading (squeezed) layer axis indexed by the grid step."""
    nd = len(shape)
    return pl.BlockSpec((None,) + shape, lambda l, _nd=nd: (l,) + (0,) * _nd)


def fused_forward(packed, emb, bias, cfg, *, B, S):
    H, I, Hl, P = cfg.hidden, cfg.inter, cfg.lstm_hidden, cfg.lane_pad
    L = cfg.layers
    kernel = functools.partial(_fused_forward_kernel, B=B, S=S, H=H,
                               nheads=cfg.heads, Hl=Hl, eps=cfg.ln_eps)
    grid_spec = pltpu.PrefetchScalarGridSpec(
        num_scalar_prefetch=0,
        grid=(L,),
        in_specs=[
            _rep_spec((B * S, H)),      # emb (sum of embeddings, pre-LN)
            _rep_spec((1, H)),          # emb LN gamma
            _rep_spec((1, H)),          # emb LN beta
            _rep_spec((B, S)),          # attention additive key bias
            _layer_spec((H, 3 * H)),    # wqkv
            _layer_spec((1, 3 * H)),    # bqkv
            _layer_spec((H, H)),        # wo
            _layer_spec((1, H)),        # bo
            _layer_spec((1, H)),        # ln1 gamma
            _layer_spec((1, H)),        # ln1 beta
            _layer_spec((H, I)),        # w1
            _layer_spec((1, I)),        # b1
            _layer_spec((I, H)),        # w2
            _layer_spec((1, H)),        # b2
            _layer_spec((1, H)),        # ln2 gamma
            _layer_spec((1, H)),        # ln2 beta
            _rep_spec((H, 8 * Hl)),     # LSTM input weights, both directions
            _rep_spec((1, 8 * Hl)),     # LSTM gate biases (b_ih + b_hh), both directions
            _rep_spec((Hl, 4 * Hl)),    # LSTM recurrent weights, forward
            _rep_spec((Hl, 4 * Hl)),    # LSTM recurrent weights, backward
            _rep_spec((2 * Hl, P)),     # classifier weight (lane-padded)
            _rep_spec((1, P)),          # classifier bias (lane-padded)
        ],
        out_specs=_rep_spec((B, P)),
        scratch_shapes=[pltpu.VMEM((B * S, H), jnp.float32)],  # resident activation x
    )
    out = pl.pallas_call(
        kernel,
        grid_spec=grid_spec,
        out_shape=jax.ShapeDtypeStruct((B, P), jnp.float32),
        compiler_params=pltpu.CompilerParams(dimension_semantics=("arbitrary",)),
    )(emb, packed["emb_ln_g"], packed["emb_ln_b"], bias,
      packed["wqkv"], packed["bqkv"], packed["wo"], packed["bo"],
      packed["ln1_g"], packed["ln1_b"], packed["w1"], packed["b1"],
      packed["w2"], packed["b2"], packed["ln2_g"], packed["ln2_b"],
      packed["wih"], packed["bih"], packed["whh_f"], packed["whh_b"],
      packed["wcls"], packed["bcls"])
    return out[:, :cfg.classes]


# ----------------------------------------------------------------------------- params
def init_params(key, cfg, *, vocab=100, max_pos=8):
    """Synthetic weights stored in PyTorch layout (Linear weight = (out, in))."""
    H, I, Hl, C = cfg.hidden, cfg.inter, cfg.lstm_hidden, cfg.classes
    keys = iter(jax.random.split(key, 64))

    def nrm(shape, scale=0.02):
        return (scale * jax.random.normal(next(keys), shape)).astype(jnp.float32)

    p = {
        "word_emb": nrm((vocab, H)),
        "pos_emb": nrm((max_pos, H)),
        "type_emb": nrm((2, H)),
        "emb_ln_g": jnp.ones((H,), jnp.float32),
        "emb_ln_b": jnp.zeros((H,), jnp.float32),
        "layers": [],
    }
    for _ in range(cfg.layers):
        p["layers"].append({
            "wq": nrm((H, H)), "bq": jnp.zeros((H,), jnp.float32),
            "wk": nrm((H, H)), "bk": jnp.zeros((H,), jnp.float32),
            "wv": nrm((H, H)), "bv": jnp.zeros((H,), jnp.float32),
            "wo": nrm((H, H)), "bo": jnp.zeros((H,), jnp.float32),
            "ln1_g": jnp.ones((H,), jnp.float32), "ln1_b": jnp.zeros((H,), jnp.float32),
            "w1": nrm((I, H)), "b1": jnp.zeros((I,), jnp.float32),
            "w2": nrm((H, I)), "b2": jnp.zeros((H,), jnp.float32),
            "ln2_g": jnp.ones((H,), jnp.float32), "ln2_b": jnp.zeros((H,), jnp.float32),
        })
    # nn.LSTM layout: weight_ih (4*Hl, in), weight_hh (4*Hl, Hl), gate row order i,f,g,o
    p["lstm"] = {
        "w_ih_f": nrm((4 * Hl, H), 0.1), "w_hh_f": nrm((4 * Hl, Hl), 0.1),
        "b_ih_f": nrm((4 * Hl,), 0.1), "b_hh_f": nrm((4 * Hl,), 0.1),
        "w_ih_b": nrm((4 * Hl, H), 0.1), "w_hh_b": nrm((4 * Hl, Hl), 0.1),
        "b_ih_b": nrm((4 * Hl,), 0.1), "b_hh_b": nrm((4 * Hl,), 0.1),
    }
    p["cls_w"] = nrm((C, 2 * Hl), 0.1)
    p["cls_b"] = jnp.zeros((C,), jnp.float32)
    return p


def pack_params(p, cfg):
    """One-time packing of PyTorch-layout weights into kernel-ready fused layouts."""
    H, I, Hl, C, P = cfg.hidden, cfg.inter, cfg.lstm_hidden, cfg.classes, cfg.lane_pad

    def stack(fn):
        return jnp.stack([fn(l) for l in p["layers"]])

    packed = {
        "word_emb": p["word_emb"], "pos_emb": p["pos_emb"], "type_emb": p["type_emb"],
        "emb_ln_g": p["emb_ln_g"].reshape(1, H), "emb_ln_b": p["emb_ln_b"].reshape(1, H),
        # per-layer weights stacked along a leading layer axis: (L, ...)
        "wqkv": stack(lambda l: jnp.concatenate([l["wq"].T, l["wk"].T, l["wv"].T], axis=1)),
        "bqkv": stack(lambda l: jnp.concatenate([l["bq"], l["bk"], l["bv"]]).reshape(1, 3 * H)),
        "wo": stack(lambda l: l["wo"].T),
        "bo": stack(lambda l: l["bo"].reshape(1, H)),
        "ln1_g": stack(lambda l: l["ln1_g"].reshape(1, H)),
        "ln1_b": stack(lambda l: l["ln1_b"].reshape(1, H)),
        "w1": stack(lambda l: l["w1"].T),
        "b1": stack(lambda l: l["b1"].reshape(1, I)),
        "w2": stack(lambda l: l["w2"].T),
        "b2": stack(lambda l: l["b2"].reshape(1, H)),
        "ln2_g": stack(lambda l: l["ln2_g"].reshape(1, H)),
        "ln2_b": stack(lambda l: l["ln2_b"].reshape(1, H)),
    }

    lp = p["lstm"]

    def reorder(w):
        # PyTorch nn.LSTM gate row blocks [i, f, g, o] -> kernel layout [i, f, o, g]
        # (lets the kernel apply sigmoid to one contiguous [i f o] slice, tanh to [g]).
        return jnp.concatenate([w[0:Hl], w[Hl:2 * Hl], w[3 * Hl:4 * Hl], w[2 * Hl:3 * Hl]],
                               axis=0)

    # input-gate weights for both directions side by side: (H, 8*Hl = 128 lanes)
    packed["wih"] = jnp.concatenate([reorder(lp["w_ih_f"]).T, reorder(lp["w_ih_b"]).T], axis=1)
    packed["bih"] = jnp.concatenate([reorder(lp["b_ih_f"] + lp["b_hh_f"]),
                                     reorder(lp["b_ih_b"] + lp["b_hh_b"])]).reshape(1, 8 * Hl)
    packed["whh_f"] = reorder(lp["w_hh_f"]).T        # (Hl, 4*Hl)
    packed["whh_b"] = reorder(lp["w_hh_b"]).T        # (Hl, 4*Hl)
    # classifier lane-padded to 128 columns for an unmasked (lane-dense) output store
    packed["wcls"] = jnp.pad(p["cls_w"].T, ((0, 0), (0, P - C)))
    packed["bcls"] = jnp.pad(p["cls_b"].reshape(1, C), ((0, 0), (0, P - C)))
    return packed


# ----------------------------------------------------------------------------- forward
def forward(packed, input_ids, attention_mask, cfg):
    B, S = input_ids.shape
    H = cfg.hidden

    # frozen mini-BERT embeddings (table gather stays in XLA); LN happens in the kernel
    emb = (packed["word_emb"][input_ids]
           + packed["pos_emb"][None, :S, :]
           + packed["type_emb"][0][None, None, :]).astype(jnp.float32).reshape(B * S, H)

    # additive key mask, canonical BERT value
    bias = (attention_mask.astype(jnp.float32) - 1.0) * 10000.0        # (B, S)

    # single fused pallas_call: embed-LN + all layers + LSTM/pool/classifier
    return fused_forward(packed, emb, bias, cfg, B=B, S=S)


# ----------------------------------------------------------------------------- main
if __name__ == "__main__":
    cfg = Config(hidden=32, heads=2, inter=64, layers=2, lstm_hidden=16, classes=2)

    key = jax.random.PRNGKey(0)
    pkey, ikey = jax.random.split(key)

    B, S = 2, 8
    raw_params = init_params(pkey, cfg, vocab=100, max_pos=S)
    packed_params = pack_params(raw_params, cfg)     # one-time weight packing

    input_ids = jax.random.randint(ikey, (B, S), 0, 100, dtype=jnp.int32)
    attention_mask = jnp.array([[1] * 8, [1] * 6 + [0] * 2], dtype=jnp.int32)

    fwd = jax.jit(functools.partial(forward, cfg=cfg))
    logits = jax.block_until_ready(fwd(packed_params, input_ids, attention_mask))

    assert logits.shape == (B, cfg.classes) and logits.dtype == jnp.float32
    print("KERNEL_OK")
</pallas_src>

<mosaic_0001>
module attributes {stable_mosaic.version = 11 : i64} {
  func.func @_fused_forward_kernel(%arg0: i32, %arg1: memref<16x32xf32, #tpu.memory_space<vmem>>, %arg2: memref<1x32xf32, #tpu.memory_space<vmem>>, %arg3: memref<1x32xf32, #tpu.memory_space<vmem>>, %arg4: memref<2x8xf32, #tpu.memory_space<vmem>>, %arg5: memref<1x32x96xf32, #tpu.memory_space<vmem>>, %arg6: memref<1x1x96xf32, #tpu.memory_space<vmem>>, %arg7: memref<1x32x32xf32, #tpu.memory_space<vmem>>, %arg8: memref<1x1x32xf32, #tpu.memory_space<vmem>>, %arg9: memref<1x1x32xf32, #tpu.memory_space<vmem>>, %arg10: memref<1x1x32xf32, #tpu.memory_space<vmem>>, %arg11: memref<1x32x64xf32, #tpu.memory_space<vmem>>, %arg12: memref<1x1x64xf32, #tpu.memory_space<vmem>>, %arg13: memref<1x64x32xf32, #tpu.memory_space<vmem>>, %arg14: memref<1x1x32xf32, #tpu.memory_space<vmem>>, %arg15: memref<1x1x32xf32, #tpu.memory_space<vmem>>, %arg16: memref<1x1x32xf32, #tpu.memory_space<vmem>>, %arg17: memref<32x128xf32, #tpu.memory_space<vmem>>, %arg18: memref<1x128xf32, #tpu.memory_space<vmem>>, %arg19: memref<16x64xf32, #tpu.memory_space<vmem>>, %arg20: memref<16x64xf32, #tpu.memory_space<vmem>>, %arg21: memref<32x128xf32, #tpu.memory_space<vmem>>, %arg22: memref<1x128xf32, #tpu.memory_space<vmem>>, %arg23: memref<2x128xf32, #tpu.memory_space<vmem>>, %arg24: memref<16x32xf32, #tpu.memory_space<vmem>>) attributes {dimension_semantics = [#tpu.dimension_semantics<arbitrary>], iteration_bounds = array<i64: 2>, scalar_prefetch = 0 : i64, scratch_operands = 1 : i64, tpu.core_type = #tpu.core_type<tc>, window_params = [{pipeline_mode = #tpu.pipeline_mode<synchronous>, transform_indices = @transform_0, window_bounds = array<i64: 16, 32>}, {pipeline_mode = #tpu.pipeline_mode<synchronous>, transform_indices = @transform_1, window_bounds = array<i64: 1, 32>}, {pipeline_mode = #tpu.pipeline_mode<synchronous>, transform_indices = @transform_2, window_bounds = array<i64: 1, 32>}, {pipeline_mode = #tpu.pipeline_mode<synchronous>, transform_indices = @transform_3, window_bounds = array<i64: 2, 8>}, {transform_indices = @transform_4, window_bounds = array<i64: 1, 32, 96>}, {transform_indices = @transform_5, window_bounds = array<i64: 1, 1, 96>}, {transform_indices = @transform_6, window_bounds = array<i64: 1, 32, 32>}, {transform_indices = @transform_7, window_bounds = array<i64: 1, 1, 32>}, {transform_indices = @transform_8, window_bounds = array<i64: 1, 1, 32>}, {transform_indices = @transform_9, window_bounds = array<i64: 1, 1, 32>}, {transform_indices = @transform_10, window_bounds = array<i64: 1, 32, 64>}, {transform_indices = @transform_11, window_bounds = array<i64: 1, 1, 64>}, {transform_indices = @transform_12, window_bounds = array<i64: 1, 64, 32>}, {transform_indices = @transform_13, window_bounds = array<i64: 1, 1, 32>}, {transform_indices = @transform_14, window_bounds = array<i64: 1, 1, 32>}, {transform_indices = @transform_15, window_bounds = array<i64: 1, 1, 32>}, {pipeline_mode = #tpu.pipeline_mode<synchronous>, transform_indices = @transform_16, window_bounds = array<i64: 32, 128>}, {pipeline_mode = #tpu.pipeline_mode<synchronous>, transform_indices = @transform_17, window_bounds = array<i64: 1, 128>}, {pipeline_mode = #tpu.pipeline_mode<synchronous>, transform_indices = @transform_18, window_bounds = array<i64: 16, 64>}, {pipeline_mode = #tpu.pipeline_mode<synchronous>, transform_indices = @transform_19, window_bounds = array<i64: 16, 64>}, {pipeline_mode = #tpu.pipeline_mode<synchronous>, transform_indices = @transform_20, window_bounds = array<i64: 32, 128>}, {pipeline_mode = #tpu.pipeline_mode<synchronous>, transform_indices = @transform_21, window_bounds = array<i64: 1, 128>}, {pipeline_mode = #tpu.pipeline_mode<synchronous>, transform_indices = @transform_22, window_bounds = array<i64: 2, 128>}]} {
    %c0_i32 = arith.constant 0 : i32
    %0 = arith.cmpi eq, %arg0, %c0_i32 : i32
    %1 = arith.extui %0 : i1 to i32
    %c0_i32_0 = arith.constant 0 : i32
    %2 = arith.cmpi ne, %1, %c0_i32_0 : i32
    scf.if %2 {
      %c0_70 = arith.constant 0 : index
      %c0_71 = arith.constant 0 : index
      %147 = vector.load %arg1[%c0_70, %c0_71] : memref<16x32xf32, #tpu.memory_space<vmem>>, vector<16x32xf32>
      %c0_72 = arith.constant 0 : index
      %c0_73 = arith.constant 0 : index
      %148 = vector.load %arg2[%c0_72, %c0_73] : memref<1x32xf32, #tpu.memory_space<vmem>>, vector<1x32xf32>
      %c0_74 = arith.constant 0 : index
      %c0_75 = arith.constant 0 : index
      %149 = vector.load %arg3[%c0_74, %c0_75] : memref<1x32xf32, #tpu.memory_space<vmem>>, vector<1x32xf32>
      %cst_76 = arith.constant dense<0.000000e+00> : vector<16xf32>
      %150 = vector.multi_reduction <add>, %147, %cst_76 [1] : vector<16x32xf32> to vector<16xf32>
      %151 = vector.shape_cast %150 : vector<16xf32> to vector<16x1xf32>
      %cst_77 = arith.constant 3.200000e+01 : f32
      %152 = vector.broadcast %cst_77 : f32 to vector<16x1xf32>
      %153 = arith.divf %151, %152 : vector<16x1xf32>
      %154 = vector.broadcast %153 : vector<16x1xf32> to vector<16x32xf32>
      %155 = arith.subf %147, %154 : vector<16x32xf32>
      %156 = arith.mulf %155, %155 : vector<16x32xf32>
      %cst_78 = arith.constant dense<0.000000e+00> : vector<16xf32>
      %157 = vector.multi_reduction <add>, %156, %cst_78 [1] : vector<16x32xf32> to vector<16xf32>
      %158 = vector.shape_cast %157 : vector<16xf32> to vector<16x1xf32>
      %cst_79 = arith.constant 3.200000e+01 : f32
      %159 = vector.broadcast %cst_79 : f32 to vector<16x1xf32>
      %160 = arith.divf %158, %159 : vector<16x1xf32>
      %161 = vector.broadcast %153 : vector<16x1xf32> to vector<16x32xf32>
      %162 = arith.subf %147, %161 : vector<16x32xf32>
      %cst_80 = arith.constant 9.99999996E-13 : f32
      %163 = vector.broadcast %cst_80 : f32 to vector<16x1xf32>
      %164 = arith.addf %160, %163 : vector<16x1xf32>
      %165 = math.rsqrt %164 : vector<16x1xf32>
      %166 = vector.broadcast %165 : vector<16x1xf32> to vector<16x32xf32>
      %167 = arith.mulf %162, %166 : vector<16x32xf32>
      %168 = vector.broadcast %148 : vector<1x32xf32> to vector<16x32xf32>
      %169 = arith.mulf %167, %168 : vector<16x32xf32>
      %170 = vector.broadcast %149 : vector<1x32xf32> to vector<16x32xf32>
      %171 = arith.addf %169, %170 : vector<16x32xf32>
      %c0_81 = arith.constant 0 : index
      %c0_82 = arith.constant 0 : index
      %172 = vector.load %arg24[%c0_81, %c0_82] : memref<16x32xf32, #tpu.memory_space<vmem>>, vector<16x32xf32>
      tpu.vector_store %arg24[%c0_81, %c0_82], %171 {strides = array<i32>} : memref<16x32xf32, #tpu.memory_space<vmem>>, vector<16x32xf32>,
    } else {
    }
    %c0 = arith.constant 0 : index
    %c0_1 = arith.constant 0 : index
    %3 = vector.load %arg24[%c0, %c0_1] : memref<16x32xf32, #tpu.memory_space<vmem>>, vector<16x32xf32>
    %c0_2 = arith.constant 0 : index
    %c0_3 = arith.constant 0 : index
    %c0_4 = arith.constant 0 : index
    %4 = vector.load %arg5[%c0_2, %c0_3, %c0_4] : memref<1x32x96xf32, #tpu.memory_space<vmem>>, vector<1x32x96xf32>
    %5 = vector.shape_cast %4 : vector<1x32x96xf32> to vector<32x96xf32>
    %cst = arith.constant dense<0.000000e+00> : vector<16x96xf32>
    %6 = tpu.matmul %3, %5, %cst {dimension_numbers = #tpu.dot_dimension_numbers<[1], [0], [0], [1], [0, 0, 1, 1], [], []>} : vector<16x32xf32>, vector<32x96xf32>, vector<16x96xf32> -> vector<16x96xf32>
    %c0_5 = arith.constant 0 : index
    %c0_6 = arith.constant 0 : index
    %c0_7 = arith.constant 0 : index
    %7 = vector.load %arg6[%c0_5, %c0_6, %c0_7] : memref<1x1x96xf32, #tpu.memory_space<vmem>>, vector<1x1x96xf32>
    %8 = vector.shape_cast %7 : vector<1x1x96xf32> to vector<1x96xf32>
    %9 = vector.broadcast %8 : vector<1x96xf32> to vector<16x96xf32>
    %10 = arith.addf %6, %9 : vector<16x96xf32>
    %11 = vector.shape_cast %10 : vector<16x96xf32> to vector<2x8x96xf32>
    %c0_8 = arith.constant 0 : index
    %c0_9 = arith.constant 0 : index
    %12 = vector.load %arg4[%c0_8, %c0_9] : memref<2x8xf32, #tpu.memory_space<vmem>>, vector<2x8xf32>
    %13 = vector.extract_strided_slice %11 {offsets = [0, 0, 0], sizes = [2, 8, 16], strides = [1, 1, 1]} : vector<2x8x96xf32> to vector<2x8x16xf32>
    %14 = vector.extract_strided_slice %11 {offsets = [0, 0, 32], sizes = [2, 8, 16], strides = [1, 1, 1]} : vector<2x8x96xf32> to vector<2x8x16xf32>
    %15 = vector.extract_strided_slice %11 {offsets = [0, 0, 64], sizes = [2, 8, 16], strides = [1, 1, 1]} : vector<2x8x96xf32> to vector<2x8x16xf32>
    "tpu.trace_start"() <{level = 10 : i32, message = "bqd,bkd->bqk"}> : () -> ()
    %cst_10 = arith.constant dense<0.000000e+00> : vector<2x8x8xf32>
    %16 = tpu.matmul %13, %14, %cst_10 {dimension_numbers = #tpu.dot_dimension_numbers<[2], [2], [1], [1], [0, 0, 0, 1, 1, 1], [0], [0]>} : vector<2x8x16xf32>, vector<2x8x16xf32>, vector<2x8x8xf32> -> vector<2x8x8xf32>
    "tpu.trace_stop"() : () -> ()
    %cst_11 = arith.constant 2.500000e-01 : f32
    %17 = vector.broadcast %cst_11 : f32 to vector<2x8x8xf32>
    %18 = arith.mulf %16, %17 : vector<2x8x8xf32>
    %19 = vector.shape_cast %12 : vector<2x8xf32> to vector<2x1x8xf32>
    %20 = vector.broadcast %19 : vector<2x1x8xf32> to vector<2x8x8xf32>
    %21 = arith.addf %18, %20 : vector<2x8x8xf32>
    %cst_12 = arith.constant dense<0xFF800000> : vector<2x8xf32>
    %22 = vector.multi_reduction <maximumf>, %21, %cst_12 [2] : vector<2x8x8xf32> to vector<2x8xf32>
    %23 = vector.shape_cast %22 : vector<2x8xf32> to vector<2x8x1xf32>
    %24 = vector.broadcast %23 : vector<2x8x1xf32> to vector<2x8x8xf32>
    %25 = arith.subf %21, %24 : vector<2x8x8xf32>
    %26 = math.exp %25 : vector<2x8x8xf32>
    %cst_13 = arith.constant dense<0.000000e+00> : vector<2x8xf32>
    %27 = vector.multi_reduction <add>, %26, %cst_13 [2] : vector<2x8x8xf32> to vector<2x8xf32>
    %28 = vector.shape_cast %27 : vector<2x8xf32> to vector<2x8x1xf32>
    %29 = tpu.reciprocal %28 {approx = true} : vector<2x8x1xf32> -> vector<2x8x1xf32>
    %30 = vector.broadcast %29 : vector<2x8x1xf32> to vector<2x8x8xf32>
    %31 = arith.mulf %26, %30 : vector<2x8x8xf32>
    "tpu.trace_start"() <{level = 10 : i32, message = "bqk,bkd->bqd"}> : () -> ()
    %cst_14 = arith.constant dense<0.000000e+00> : vector<2x8x16xf32>
    %32 = tpu.matmul %31, %15, %cst_14 {dimension_numbers = #tpu.dot_dimension_numbers<[2], [1], [1], [2], [0, 0, 0, 1, 1, 2], [0], [0]>} : vector<2x8x8xf32>, vector<2x8x16xf32>, vector<2x8x16xf32> -> vector<2x8x16xf32>
    "tpu.trace_stop"() : () -> ()
    %33 = vector.extract_strided_slice %11 {offsets = [0, 0, 16], sizes = [2, 8, 16], strides = [1, 1, 1]} : vector<2x8x96xf32> to vector<2x8x16xf32>
    %34 = vector.extract_strided_slice %11 {offsets = [0, 0, 48], sizes = [2, 8, 16], strides = [1, 1, 1]} : vector<2x8x96xf32> to vector<2x8x16xf32>
    %35 = vector.extract_strided_slice %11 {offsets = [0, 0, 80], sizes = [2, 8, 16], strides = [1, 1, 1]} : vector<2x8x96xf32> to vector<2x8x16xf32>
    "tpu.trace_start"() <{level = 10 : i32, message = "bqd,bkd->bqk"}> : () -> ()
    %cst_15 = arith.constant dense<0.000000e+00> : vector<2x8x8xf32>
    %36 = tpu.matmul %33, %34, %cst_15 {dimension_numbers = #tpu.dot_dimension_numbers<[2], [2], [1], [1], [0, 0, 0, 1, 1, 1], [0], [0]>} : vector<2x8x16xf32>, vector<2x8x16xf32>, vector<2x8x8xf32> -> vector<2x8x8xf32>
    "tpu.trace_stop"() : () -> ()
    %cst_16 = arith.constant 2.500000e-01 : f32
    %37 = vector.broadcast %cst_16 : f32 to vector<2x8x8xf32>
    %38 = arith.mulf %36, %37 : vector<2x8x8xf32>
    %39 = vector.shape_cast %12 : vector<2x8xf32> to vector<2x1x8xf32>
    %40 = vector.broadcast %39 : vector<2x1x8xf32> to vector<2x8x8xf32>
    %41 = arith.addf %38, %40 : vector<2x8x8xf32>
    %cst_17 = arith.constant dense<0xFF800000> : vector<2x8xf32>
    %42 = vector.multi_reduction <maximumf>, %41, %cst_17 [2] : vector<2x8x8xf32> to vector<2x8xf32>
    %43 = vector.shape_cast %42 : vector<2x8xf32> to vector<2x8x1xf32>
    %44 = vector.broadcast %43 : vector<2x8x1xf32> to vector<2x8x8xf32>
    %45 = arith.subf %41, %44 : vector<2x8x8xf32>
    %46 = math.exp %45 : vector<2x8x8xf32>
    %cst_18 = arith.constant dense<0.000000e+00> : vector<2x8xf32>
    %47 = vector.multi_reduction <add>, %46, %cst_18 [2] : vector<2x8x8xf32> to vector<2x8xf32>
    %48 = vector.shape_cast %47 : vector<2x8xf32> to vector<2x8x1xf32>
    %49 = tpu.reciprocal %48 {approx = true} : vector<2x8x1xf32> -> vector<2x8x1xf32>
    %50 = vector.broadcast %49 : vector<2x8x1xf32> to vector<2x8x8xf32>
    %51 = arith.mulf %46, %50 : vector<2x8x8xf32>
    "tpu.trace_start"() <{level = 10 : i32, message = "bqk,bkd->bqd"}> : () -> ()
    %cst_19 = arith.constant dense<0.000000e+00> : vector<2x8x16xf32>
    %52 = tpu.matmul %51, %35, %cst_19 {dimension_numbers = #tpu.dot_dimension_numbers<[2], [1], [1], [2], [0, 0, 0, 1, 1, 2], [0], [0]>} : vector<2x8x8xf32>, vector<2x8x16xf32>, vector<2x8x16xf32> -> vector<2x8x16xf32>
    "tpu.trace_stop"() : () -> ()
    %53 = tpu.concatenate %32, %52 in 2 : vector<2x8x16xf32>, vector<2x8x16xf32> -> vector<2x8x32xf32>
    %54 = vector.shape_cast %53 : vector<2x8x32xf32> to vector<16x32xf32>
    %c0_20 = arith.constant 0 : index
    %c0_21 = arith.constant 0 : index
    %c0_22 = arith.constant 0 : index
    %55 = vector.load %arg7[%c0_20, %c0_21, %c0_22] : memref<1x32x32xf32, #tpu.memory_space<vmem>>, vector<1x32x32xf32>
    %56 = vector.shape_cast %55 : vector<1x32x32xf32> to vector<32x32xf32>
    %cst_23 = arith.constant dense<0.000000e+00> : vector<16x32xf32>
    %57 = tpu.matmul %54, %56, %cst_23 {dimension_numbers = #tpu.dot_dimension_numbers<[1], [0], [0], [1], [0, 0, 1, 1], [], []>} : vector<16x32xf32>, vector<32x32xf32>, vector<16x32xf32> -> vector<16x32xf32>
    %c0_24 = arith.constant 0 : index
    %c0_25 = arith.constant 0 : index
    %c0_26 = arith.constant 0 : index
    %58 = vector.load %arg8[%c0_24, %c0_25, %c0_26] : memref<1x1x32xf32, #tpu.memory_space<vmem>>, vector<1x1x32xf32>
    %59 = vector.shape_cast %58 : vector<1x1x32xf32> to vector<1x32xf32>
    %60 = vector.broadcast %59 : vector<1x32xf32> to vector<16x32xf32>
    %61 = arith.addf %57, %60 : vector<16x32xf32>
    %62 = arith.addf %61, %3 : vector<16x32xf32>
    %c0_27 = arith.constant 0 : index
    %c0_28 = arith.constant 0 : index
    %c0_29 = arith.constant 0 : index
    %63 = vector.load %arg9[%c0_27, %c0_28, %c0_29] : memref<1x1x32xf32, #tpu.memory_space<vmem>>, vector<1x1x32xf32>
    %64 = vector.shape_cast %63 : vector<1x1x32xf32> to vector<1x32xf32>
    %c0_30 = arith.constant 0 : index
    %c0_31 = arith.constant 0 : index
    %c0_32 = arith.constant 0 : index
    %65 = vector.load %arg10[%c0_30, %c0_31, %c0_32] : memref<1x1x32xf32, #tpu.memory_space<vmem>>, vector<1x1x32xf32>
    %66 = vector.shape_cast %65 : vector<1x1x32xf32> to vector<1x32xf32>
    %cst_33 = arith.constant dense<0.000000e+00> : vector<16xf32>
    %67 = vector.multi_reduction <add>, %62, %cst_33 [1] : vector<16x32xf32> to vector<16xf32>
    %68 = vector.shape_cast %67 : vector<16xf32> to vector<16x1xf32>
    %cst_34 = arith.constant 3.200000e+01 : f32
    %69 = vector.broadcast %cst_34 : f32 to vector<16x1xf32>
    %70 = arith.divf %68, %69 : vector<16x1xf32>
    %71 = vector.broadcast %70 : vector<16x1xf32> to vector<16x32xf32>
    %72 = arith.subf %62, %71 : vector<16x32xf32>
    %73 = arith.mulf %72, %72 : vector<16x32xf32>
    %cst_35 = arith.constant dense<0.000000e+00> : vector<16xf32>
    %74 = vector.multi_reduction <add>, %73, %cst_35 [1] : vector<16x32xf32> to vector<16xf32>
    %75 = vector.shape_cast %74 : vector<16xf32> to vector<16x1xf32>
    %cst_36 = arith.constant 3.200000e+01 : f32
    %76 = vector.broadcast %cst_36 : f32 to vector<16x1xf32>
    %77 = arith.divf %75, %76 : vector<16x1xf32>
    %78 = vector.broadcast %70 : vector<16x1xf32> to vector<16x32xf32>
    %79 = arith.subf %62, %78 : vector<16x32xf32>
    %cst_37 = arith.constant 9.99999996E-13 : f32
    %80 = vector.broadcast %cst_37 : f32 to vector<16x1xf32>
    %81 = arith.addf %77, %80 : vector<16x1xf32>
    %82 = math.rsqrt %81 : vector<16x1xf32>
    %83 = vector.broadcast %82 : vector<16x1xf32> to vector<16x32xf32>
    %84 = arith.mulf %79, %83 : vector<16x32xf32>
    %85 = vector.broadcast %64 : vector<1x32xf32> to vector<16x32xf32>
    %86 = arith.mulf %84, %85 : vector<16x32xf32>
    %87 = vector.broadcast %66 : vector<1x32xf32> to vector<16x32xf32>
    %88 = arith.addf %86, %87 : vector<16x32xf32>
    %c0_38 = arith.constant 0 : index
    %c0_39 = arith.constant 0 : index
    %c0_40 = arith.constant 0 : index
    %89 = vector.load %arg11[%c0_38, %c0_39, %c0_40] : memref<1x32x64xf32, #tpu.memory_space<vmem>>, vector<1x32x64xf32>
    %90 = vector.shape_cast %89 : vector<1x32x64xf32> to vector<32x64xf32>
    %cst_41 = arith.constant dense<0.000000e+00> : vector<16x64xf32>
    %91 = tpu.matmul %88, %90, %cst_41 {dimension_numbers = #tpu.dot_dimension_numbers<[1], [0], [0], [1], [0, 0, 1, 1], [], []>} : vector<16x32xf32>, vector<32x64xf32>, vector<16x64xf32> -> vector<16x64xf32>
    %c0_42 = arith.constant 0 : index
    %c0_43 = arith.constant 0 : index
    %c0_44 = arith.constant 0 : index
    %92 = vector.load %arg12[%c0_42, %c0_43, %c0_44] : memref<1x1x64xf32, #tpu.memory_space<vmem>>, vector<1x1x64xf32>
    %93 = vector.shape_cast %92 : vector<1x1x64xf32> to vector<1x64xf32>
    %94 = vector.broadcast %93 : vector<1x64xf32> to vector<16x64xf32>
    %95 = arith.addf %91, %94 : vector<16x64xf32>
    %cst_45 = arith.constant 5.000000e-01 : f32
    %96 = vector.broadcast %cst_45 : f32 to vector<16x64xf32>
    %97 = arith.mulf %96, %95 : vector<16x64xf32>
    %cst_46 = arith.constant 4.471500e-02 : f32
    %98 = vector.broadcast %cst_46 : f32 to vector<16x64xf32>
    %99 = arith.mulf %98, %95 : vector<16x64xf32>
    %100 = arith.mulf %99, %95 : vector<16x64xf32>
    %101 = arith.mulf %100, %95 : vector<16x64xf32>
    %102 = arith.addf %95, %101 : vector<16x64xf32>
    %cst_47 = arith.constant 0.797884583 : f32
    %103 = vector.broadcast %cst_47 : f32 to vector<16x64xf32>
    %104 = arith.mulf %103, %102 : vector<16x64xf32>
    %105 = math.tanh %104 : vector<16x64xf32>
    %cst_48 = arith.constant 1.000000e+00 : f32
    %106 = vector.broadcast %cst_48 : f32 to vector<16x64xf32>
    %107 = arith.addf %106, %105 : vector<16x64xf32>
    %108 = arith.mulf %97, %107 : vector<16x64xf32>
    %c0_49 = arith.constant 0 : index
    %c0_50 = arith.constant 0 : index
    %c0_51 = arith.constant 0 : index
    %109 = vector.load %arg13[%c0_49, %c0_50, %c0_51] : memref<1x64x32xf32, #tpu.memory_space<vmem>>, vector<1x64x32xf32>
    %110 = vector.shape_cast %109 : vector<1x64x32xf32> to vector<64x32xf32>
    %cst_52 = arith.constant dense<0.000000e+00> : vector<16x32xf32>
    %111 = tpu.matmul %108, %110, %cst_52 {dimension_numbers = #tpu.dot_dimension_numbers<[1], [0], [0], [1], [0, 0, 1, 1], [], []>} : vector<16x64xf32>, vector<64x32xf32>, vector<16x32xf32> -> vector<16x32xf32>
    %c0_53 = arith.constant 0 : index
    %c0_54 = arith.constant 0 : index
    %c0_55 = arith.constant 0 : index
    %112 = vector.load %arg14[%c0_53, %c0_54, %c0_55] : memref<1x1x32xf32, #tpu.memory_space<vmem>>, vector<1x1x32xf32>
    %113 = vector.shape_cast %112 : vector<1x1x32xf32> to vector<1x32xf32>
    %114 = vector.broadcast %113 : vector<1x32xf32> to vector<16x32xf32>
    %115 = arith.addf %111, %114 : vector<16x32xf32>
    %116 = arith.addf %115, %88 : vector<16x32xf32>
    %c0_56 = arith.constant 0 : index
    %c0_57 = arith.constant 0 : index
    %c0_58 = arith.constant 0 : index
    %117 = vector.load %arg15[%c0_56, %c0_57, %c0_58] : memref<1x1x32xf32, #tpu.memory_space<vmem>>, vector<1x1x32xf32>
    %118 = vector.shape_cast %117 : vector<1x1x32xf32> to vector<1x32xf32>
    %c0_59 = arith.constant 0 : index
    %c0_60 = arith.constant 0 : index
    %c0_61 = arith.constant 0 : index
    %119 = vector.load %arg16[%c0_59, %c0_60, %c0_61] : memref<1x1x32xf32, #tpu.memory_space<vmem>>, vector<1x1x32xf32>
    %120 = vector.shape_cast %119 : vector<1x1x32xf32> to vector<1x32xf32>
    %cst_62 = arith.constant dense<0.000000e+00> : vector<16xf32>
    %121 = vector.multi_reduction <add>, %116, %cst_62 [1] : vector<16x32xf32> to vector<16xf32>
    %122 = vector.shape_cast %121 : vector<16xf32> to vector<16x1xf32>
    %cst_63 = arith.constant 3.200000e+01 : f32
    %123 = vector.broadcast %cst_63 : f32 to vector<16x1xf32>
    %124 = arith.divf %122, %123 : vector<16x1xf32>
    %125 = vector.broadcast %124 : vector<16x1xf32> to vector<16x32xf32>
    %126 = arith.subf %116, %125 : vector<16x32xf32>
    %127 = arith.mulf %126, %126 : vector<16x32xf32>
    %cst_64 = arith.constant dense<0.000000e+00> : vector<16xf32>
    %128 = vector.multi_reduction <add>, %127, %cst_64 [1] : vector<16x32xf32> to vector<16xf32>
    %129 = vector.shape_cast %128 : vector<16xf32> to vector<16x1xf32>
    %cst_65 = arith.constant 3.200000e+01 : f32
    %130 = vector.broadcast %cst_65 : f32 to vector<16x1xf32>
    %131 = arith.divf %129, %130 : vector<16x1xf32>
    %132 = vector.broadcast %124 : vector<16x1xf32> to vector<16x32xf32>
    %133 = arith.subf %116, %132 : vector<16x32xf32>
    %cst_66 = arith.constant 9.99999996E-13 : f32
    %134 = vector.broadcast %cst_66 : f32 to vector<16x1xf32>
    %135 = arith.addf %131, %134 : vector<16x1xf32>
    %136 = math.rsqrt %135 : vector<16x1xf32>
    %137 = vector.broadcast %136 : vector<16x1xf32> to vector<16x32xf32>
    %138 = arith.mulf %133, %137 : vector<16x32xf32>
    %139 = vector.broadcast %118 : vector<1x32xf32> to vector<16x32xf32>
    %140 = arith.mulf %138, %139 : vector<16x32xf32>
    %141 = vector.broadcast %120 : vector<1x32xf32> to vector<16x32xf32>
    %142 = arith.addf %140, %141 : vector<16x32xf32>
    %c0_67 = arith.constant 0 : index
    %c0_68 = arith.constant 0 : index
    %143 = vector.load %arg24[%c0_67, %c0_68] : memref<16x32xf32, #tpu.memory_space<vmem>>, vector<16x32xf32>
    tpu.vector_store %arg24[%c0_67, %c0_68], %142 {strides = array<i32>} : memref<16x32xf32, #tpu.memory_space<vmem>>, vector<16x32xf32>,
    %c1_i32 = arith.constant 1 : i32
    %144 = arith.cmpi eq, %arg0, %c1_i32 : i32
    %145 = arith.extui %144 : i1 to i32
    %c0_i32_69 = arith.constant 0 : i32
    %146 = arith.cmpi ne, %145, %c0_i32_69 : i32
    scf.if %146 {
      %c0_70 = arith.constant 0 : index
      %c0_71 = arith.constant 0 : index
      %147 = vector.load %arg17[%c0_70, %c0_71] : memref<32x128xf32, #tpu.memory_space<vmem>>, vector<32x128xf32>
      %cst_72 = arith.constant dense<0.000000e+00> : vector<16x128xf32>
      %148 = tpu.matmul %142, %147, %cst_72 {dimension_numbers = #tpu.dot_dimension_numbers<[1], [0], [0], [1], [0, 0, 1, 1], [], []>} : vector<16x32xf32>, vector<32x128xf32>, vector<16x128xf32> -> vector<16x128xf32>
      %c0_73 = arith.constant 0 : index
      %c0_74 = arith.constant 0 : index
      %149 = vector.load %arg18[%c0_73, %c0_74] : memref<1x128xf32, #tpu.memory_space<vmem>>, vector<1x128xf32>
      %150 = vector.broadcast %149 : vector<1x128xf32> to vector<16x128xf32>
      %151 = arith.addf %148, %150 : vector<16x128xf32>
      %152 = vector.shape_cast %151 : vector<16x128xf32> to vector<2x8x128xf32>
      %cst_75 = arith.constant 0.000000e+00 : f32
      %153 = vector.broadcast %cst_75 : f32 to vector<2x16xf32>
      %cst_76 = arith.constant 0.000000e+00 : f32
      %154 = vector.broadcast %cst_76 : f32 to vector<2x16xf32>
      %cst_77 = arith.constant 0.000000e+00 : f32
      %155 = vector.broadcast %cst_77 : f32 to vector<2x16xf32>
      %cst_78 = arith.constant 0.000000e+00 : f32
      %156 = vector.broadcast %cst_78 : f32 to vector<2x16xf32>
      %cst_79 = arith.constant 0.000000e+00 : f32
      %157 = vector.broadcast %cst_79 : f32 to vector<2x16xf32>
      %cst_80 = arith.constant 0.000000e+00 : f32
      %158 = vector.broadcast %cst_80 : f32 to vector<2x16xf32>
      %159 = vector.extract_strided_slice %152 {offsets = [0, 0, 0], sizes = [2, 1, 64], strides = [1, 1, 1]} : vector<2x8x128xf32> to vector<2x1x64xf32>
      %160 = vector.shape_cast %159 : vector<2x1x64xf32> to vector<2x64xf32>
      %c0_81 = arith.constant 0 : index
      %c0_82 = arith.constant 0 : index
      %161 = vector.load %arg19[%c0_81, %c0_82] : memref<16x64xf32, #tpu.memory_space<vmem>>, vector<16x64xf32>
      %cst_83 = arith.constant dense<0.000000e+00> : vector<2x64xf32>
      %162 = tpu.matmul %153, %161, %cst_83 {dimension_numbers = #tpu.dot_dimension_numbers<[1], [0], [0], [1], [0, 0, 1, 1], [], []>} : vector<2x16xf32>, vector<16x64xf32>, vector<2x64xf32> -> vector<2x64xf32>
      %163 = arith.addf %160, %162 : vector<2x64xf32>
      %164 = vector.extract_strided_slice %152 {offsets = [0, 7, 64], sizes = [2, 1, 64], strides = [1, 1, 1]} : vector<2x8x128xf32> to vector<2x1x64xf32>
      %165 = vector.shape_cast %164 : vector<2x1x64xf32> to vector<2x64xf32>
      %c0_84 = arith.constant 0 : index
      %c0_85 = arith.constant 0 : index
      %166 = vector.load %arg20[%c0_84, %c0_85] : memref<16x64xf32, #tpu.memory_space<vmem>>, vector<16x64xf32>
      %cst_86 = arith.constant dense<0.000000e+00> : vector<2x64xf32>
      %167 = tpu.matmul %155, %166, %cst_86 {dimension_numbers = #tpu.dot_dimension_numbers<[1], [0], [0], [1], [0, 0, 1, 1], [], []>} : vector<2x16xf32>, vector<16x64xf32>, vector<2x64xf32> -> vector<2x64xf32>
      %168 = arith.addf %165, %167 : vector<2x64xf32>
      %169 = vector.extract_strided_slice %163 {offsets = [0, 0], sizes = [2, 48], strides = [1, 1]} : vector<2x64xf32> to vector<2x48xf32>
      %cst_87 = arith.constant 0.000000e+00 : f32
      %170 = vector.broadcast %cst_87 : f32 to vector<2x48xf32>
      %171 = arith.subf %170, %169 : vector<2x48xf32>
      %172 = math.exp %171 : vector<2x48xf32>
      %cst_88 = arith.constant 1.000000e+00 : f32
      %173 = vector.broadcast %cst_88 : f32 to vector<2x48xf32>
      %174 = arith.addf %173, %172 : vector<2x48xf32>
      %cst_89 = arith.constant 1.000000e+00 : f32
      %175 = vector.broadcast %cst_89 : f32 to vector<2x48xf32>
      %176 = arith.divf %175, %174 : vector<2x48xf32>
      %177 = vector.extract_strided_slice %163 {offsets = [0, 48], sizes = [2, 16], strides = [1, 1]} : vector<2x64xf32> to vector<2x16xf32>
      %178 = math.tanh %177 : vector<2x16xf32>
      %179 = vector.extract_strided_slice %176 {offsets = [0, 0], sizes = [2, 16], strides = [1, 1]} : vector<2x48xf32> to vector<2x16xf32>
      %180 = vector.extract_strided_slice %176 {offsets = [0, 16], sizes = [2, 16], strides = [1, 1]} : vector<2x48xf32> to vector<2x16xf32>
      %181 = vector.extract_strided_slice %176 {offsets = [0, 32], sizes = [2, 16], strides = [1, 1]} : vector<2x48xf32> to vector<2x16xf32>
      %182 = arith.mulf %180, %154 : vector<2x16xf32>
      %183 = arith.mulf %179, %178 : vector<2x16xf32>
      %184 = arith.addf %182, %183 : vector<2x16xf32>
      %185 = math.tanh %184 : vector<2x16xf32>
      %186 = arith.mulf %181, %185 : vector<2x16xf32>
      %187 = vector.extract_strided_slice %168 {offsets = [0, 0], sizes = [2, 48], strides = [1, 1]} : vector<2x64xf32> to vector<2x48xf32>
      %cst_90 = arith.constant 0.000000e+00 : f32
      %188 = vector.broadcast %cst_90 : f32 to vector<2x48xf32>
      %189 = arith.subf %188, %187 : vector<2x48xf32>
      %190 = math.exp %189 : vector<2x48xf32>
      %cst_91 = arith.constant 1.000000e+00 : f32
      %191 = vector.broadcast %cst_91 : f32 to vector<2x48xf32>
      %192 = arith.addf %191, %190 : vector<2x48xf32>
      %cst_92 = arith.constant 1.000000e+00 : f32
      %193 = vector.broadcast %cst_92 : f32 to vector<2x48xf32>
      %194 = arith.divf %193, %192 : vector<2x48xf32>
      %195 = vector.extract_strided_slice %168 {offsets = [0, 48], sizes = [2, 16], strides = [1, 1]} : vector<2x64xf32> to vector<2x16xf32>
      %196 = math.tanh %195 : vector<2x16xf32>
      %197 = vector.extract_strided_slice %194 {offsets = [0, 0], sizes = [2, 16], strides = [1, 1]} : vector<2x48xf32> to vector<2x16xf32>
      %198 = vector.extract_strided_slice %194 {offsets = [0, 16], sizes = [2, 16], strides = [1, 1]} : vector<2x48xf32> to vector<2x16xf32>
      %199 = vector.extract_strided_slice %194 {offsets = [0, 32], sizes = [2, 16], strides = [1, 1]} : vector<2x48xf32> to vector<2x16xf32>
      %200 = arith.mulf %198, %156 : vector<2x16xf32>
      %201 = arith.mulf %197, %196 : vector<2x16xf32>
      %202 = arith.addf %200, %201 : vector<2x16xf32>
      %203 = math.tanh %202 : vector<2x16xf32>
      %204 = arith.mulf %199, %203 : vector<2x16xf32>
      %205 = arith.addf %157, %186 : vector<2x16xf32>
      %206 = arith.addf %158, %204 : vector<2x16xf32>
      %207 = vector.extract_strided_slice %152 {offsets = [0, 1, 0], sizes = [2, 1, 64], strides = [1, 1, 1]} : vector<2x8x128xf32> to vector<2x1x64xf32>
      %208 = vector.shape_cast %207 : vector<2x1x64xf32> to vector<2x64xf32>
      %c0_93 = arith.constant 0 : index
      %c0_94 = arith.constant 0 : index
      %209 = vector.load %arg19[%c0_93, %c0_94] : memref<16x64xf32, #tpu.memory_space<vmem>>, vector<16x64xf32>
      %cst_95 = arith.constant dense<0.000000e+00> : vector<2x64xf32>
      %210 = tpu.matmul %186, %209, %cst_95 {dimension_numbers = #tpu.dot_dimension_numbers<[1], [0], [0], [1], [0, 0, 1, 1], [], []>} : vector<2x16xf32>, vector<16x64xf32>, vector<2x64xf32> -> vector<2x64xf32>
      %211 = arith.addf %208, %210 : vector<2x64xf32>
      %212 = vector.extract_strided_slice %152 {offsets = [0, 6, 64], sizes = [2, 1, 64], strides = [1, 1, 1]} : vector<2x8x128xf32> to vector<2x1x64xf32>
      %213 = vector.shape_cast %212 : vector<2x1x64xf32> to vector<2x64xf32>
      %c0_96 = arith.constant 0 : index
      %c0_97 = arith.constant 0 : index
      %214 = vector.load %arg20[%c0_96, %c0_97] : memref<16x64xf32, #tpu.memory_space<vmem>>, vector<16x64xf32>
      %cst_98 = arith.constant dense<0.000000e+00> : vector<2x64xf32>
      %215 = tpu.matmul %204, %214, %cst_98 {dimension_numbers = #tpu.dot_dimension_numbers<[1], [0], [0], [1], [0, 0, 1, 1], [], []>} : vector<2x16xf32>, vector<16x64xf32>, vector<2x64xf32> -> vector<2x64xf32>
      %216 = arith.addf %213, %215 : vector<2x64xf32>
      %217 = vector.extract_strided_slice %211 {offsets = [0, 0], sizes = [2, 48], strides = [1, 1]} : vector<2x64xf32> to vector<2x48xf32>
      %cst_99 = arith.constant 0.000000e+00 : f32
      %218 = vector.broadcast %cst_99 : f32 to vector<2x48xf32>
      %219 = arith.subf %218, %217 : vector<2x48xf32>
      %220 = math.exp %219 : vector<2x48xf32>
      %cst_100 = arith.constant 1.000000e+00 : f32
      %221 = vector.broadcast %cst_100 : f32 to vector<2x48xf32>
      %222 = arith.addf %221, %220 : vector<2x48xf32>
      %cst_101 = arith.constant 1.000000e+00 : f32
      %223 = vector.broadcast %cst_101 : f32 to vector<2x48xf32>
      %224 = arith.divf %223, %222 : vector<2x48xf32>
      %225 = vector.extract_strided_slice %211 {offsets = [0, 48], sizes = [2, 16], strides = [1, 1]} : vector<2x64xf32> to vector<2x16xf32>
      %226 = math.tanh %225 : vector<2x16xf32>
      %227 = vector.extract_strided_slice %224 {offsets = [0, 0], sizes = [2, 16], strides = [1, 1]} : vector<2x48xf32> to vector<2x16xf32>
      %228 = vector.extract_strided_slice %224 {offsets = [0, 16], sizes = [2, 16], strides = [1, 1]} : vector<2x48xf32> to vector<2x16xf32>
      %229 = vector.extract_strided_slice %224 {offsets = [0, 32], sizes = [2, 16], strides = [1, 1]} : vector<2x48xf32> to vector<2x16xf32>
      %230 = arith.mulf %228, %184 : vector<2x16xf32>
      %231 = arith.mulf %227, %226 : vector<2x16xf32>
      %232 = arith.addf %230, %231 : vector<2x16xf32>
      %233 = math.tanh %232 : vector<2x16xf32>
      %234 = arith.mulf %229, %233 : vector<2x16xf32>
      %235 = vector.extract_strided_slice %216 {offsets = [0, 0], sizes = [2, 48], strides = [1, 1]} : vector<2x64xf32> to vector<2x48xf32>
      %cst_102 = arith.constant 0.000000e+00 : f32
      %236 = vector.broadcast %cst_102 : f32 to vector<2x48xf32>
      %237 = arith.subf %236, %235 : vector<2x48xf32>
      %238 = math.exp %237 : vector<2x48xf32>
      %cst_103 = arith.constant 1.000000e+00 : f32
      %239 = vector.broadcast %cst_103 : f32 to vector<2x48xf32>
      %240 = arith.addf %239, %238 : vector<2x48xf32>
      %cst_104 = arith.constant 1.000000e+00 : f32
      %241 = vector.broadcast %cst_104 : f32 to vector<2x48xf32>
      %242 = arith.divf %241, %240 : vector<2x48xf32>
      %243 = vector.extract_strided_slice %216 {offsets = [0, 48], sizes = [2, 16], strides = [1, 1]} : vector<2x64xf32> to vector<2x16xf32>
      %244 = math.tanh %243 : vector<2x16xf32>
      %245 = vector.extract_strided_slice %242 {offsets = [0, 0], sizes = [2, 16], strides = [1, 1]} : vector<2x48xf32> to vector<2x16xf32>
      %246 = vector.extract_strided_slice %242 {offsets = [0, 16], sizes = [2, 16], strides = [1, 1]} : vector<2x48xf32> to vector<2x16xf32>
      %247 = vector.extract_strided_slice %242 {offsets = [0, 32], sizes = [2, 16], strides = [1, 1]} : vector<2x48xf32> to vector<2x16xf32>
      %248 = arith.mulf %246, %202 : vector<2x16xf32>
      %249 = arith.mulf %245, %244 : vector<2x16xf32>
      %250 = arith.addf %248, %249 : vector<2x16xf32>
      %251 = math.tanh %250 : vector<2x16xf32>
      %252 = arith.mulf %247, %251 : vector<2x16xf32>
      %253 = arith.addf %205, %234 : vector<2x16xf32>
      %254 = arith.addf %206, %252 : vector<2x16xf32>
      %255 = vector.extract_strided_slice %152 {offsets = [0, 2, 0], sizes = [2, 1, 64], strides = [1, 1, 1]} : vector<2x8x128xf32> to vector<2x1x64xf32>
      %256 = vector.shape_cast %255 : vector<2x1x64xf32> to vector<2x64xf32>
      %c0_105 = arith.constant 0 : index
      %c0_106 = arith.constant 0 : index
      %257 = vector.load %arg19[%c0_105, %c0_106] : memref<16x64xf32, #tpu.memory_space<vmem>>, vector<16x64xf32>
      %cst_107 = arith.constant dense<0.000000e+00> : vector<2x64xf32>
      %258 = tpu.matmul %234, %257, %cst_107 {dimension_numbers = #tpu.dot_dimension_numbers<[1], [0], [0], [1], [0, 0, 1, 1], [], []>} : vector<2x16xf32>, vector<16x64xf32>, vector<2x64xf32> -> vector<2x64xf32>
      %259 = arith.addf %256, %258 : vector<2x64xf32>
      %260 = vector.extract_strided_slice %152 {offsets = [0, 5, 64], sizes = [2, 1, 64], strides = [1, 1, 1]} : vector<2x8x128xf32> to vector<2x1x64xf32>
      %261 = vector.shape_cast %260 : vector<2x1x64xf32> to vector<2x64xf32>
      %c0_108 = arith.constant 0 : index
      %c0_109 = arith.constant 0 : index
      %262 = vector.load %arg20[%c0_108, %c0_109] : memref<16x64xf32, #tpu.memory_space<vmem>>, vector<16x64xf32>
      %cst_110 = arith.constant dense<0.000000e+00> : vector<2x64xf32>
      %263 = tpu.matmul %252, %262, %cst_110 {dimension_numbers = #tpu.dot_dimension_numbers<[1], [0], [0], [1], [0, 0, 1, 1], [], []>} : vector<2x16xf32>, vector<16x64xf32>, vector<2x64xf32> -> vector<2x64xf32>
      %264 = arith.addf %261, %263 : vector<2x64xf32>
      %265 = vector.extract_strided_slice %259 {offsets = [0, 0], sizes = [2, 48], strides = [1, 1]} : vector<2x64xf32> to vector<2x48xf32>
      %cst_111 = arith.constant 0.000000e+00 : f32
      %266 = vector.broadcast %cst_111 : f32 to vector<2x48xf32>
      %267 = arith.subf %266, %265 : vector<2x48xf32>
      %268 = math.exp %267 : vector<2x48xf32>
      %cst_112 = arith.constant 1.000000e+00 : f32
      %269 = vector.broadcast %cst_112 : f32 to vector<2x48xf32>
      %270 = arith.addf %269, %268 : vector<2x48xf32>
      %cst_113 = arith.constant 1.000000e+00 : f32
      %271 = vector.broadcast %cst_113 : f32 to vector<2x48xf32>
      %272 = arith.divf %271, %270 : vector<2x48xf32>
      %273 = vector.extract_strided_slice %259 {offsets = [0, 48], sizes = [2, 16], strides = [1, 1]} : vector<2x64xf32> to vector<2x16xf32>
      %274 = math.tanh %273 : vector<2x16xf32>
      %275 = vector.extract_strided_slice %272 {offsets = [0, 0], sizes = [2, 16], strides = [1, 1]} : vector<2x48xf32> to vector<2x16xf32>
      %276 = vector.extract_strided_slice %272 {offsets = [0, 16], sizes = [2, 16], strides = [1, 1]} : vector<2x48xf32> to vector<2x16xf32>
      %277 = vector.extract_strided_slice %272 {offsets = [0, 32], sizes = [2, 16], strides = [1, 1]} : vector<2x48xf32> to vector<2x16xf32>
      %278 = arith.mulf %276, %232 : vector<2x16xf32>
      %279 = arith.mulf %275, %274 : vector<2x16xf32>
      %280 = arith.addf %278, %279 : vector<2x16xf32>
      %281 = math.tanh %280 : vector<2x16xf32>
      %282 = arith.mulf %277, %281 : vector<2x16xf32>
      %283 = vector.extract_strided_slice %264 {offsets = [0, 0], sizes = [2, 48], strides = [1, 1]} : vector<2x64xf32> to vector<2x48xf32>
      %cst_114 = arith.constant 0.000000e+00 : f32
      %284 = vector.broadcast %cst_114 : f32 to vector<2x48xf32>
      %285 = arith.subf %284, %283 : vector<2x48xf32>
      %286 = math.exp %285 : vector<2x48xf32>
      %cst_115 = arith.constant 1.000000e+00 : f32
      %287 = vector.broadcast %cst_115 : f32 to vector<2x48xf32>
      %288 = arith.addf %287, %286 : vector<2x48xf32>
      %cst_116 = arith.constant 1.000000e+00 : f32
      %289 = vector.broadcast %cst_116 : f32 to vector<2x48xf32>
      %290 = arith.divf %289, %288 : vector<2x48xf32>
      %291 = vector.extract_strided_slice %264 {offsets = [0, 48], sizes = [2, 16], strides = [1, 1]} : vector<2x64xf32> to vector<2x16xf32>
      %292 = math.tanh %291 : vector<2x16xf32>
      %293 = vector.extract_strided_slice %290 {offsets = [0, 0], sizes = [2, 16], strides = [1, 1]} : vector<2x48xf32> to vector<2x16xf32>
      %294 = vector.extract_strided_slice %290 {offsets = [0, 16], sizes = [2, 16], strides = [1, 1]} : vector<2x48xf32> to vector<2x16xf32>
      %295 = vector.extract_strided_slice %290 {offsets = [0, 32], sizes = [2, 16], strides = [1, 1]} : vector<2x48xf32> to vector<2x16xf32>
      %296 = arith.mulf %294, %250 : vector<2x16xf32>
      %297 = arith.mulf %293, %292 : vector<2x16xf32>
      %298 = arith.addf %296, %297 : vector<2x16xf32>
      %299 = math.tanh %298 : vector<2x16xf32>
      %300 = arith.mulf %295, %299 : vector<2x16xf32>
      %301 = arith.addf %253, %282 : vector<2x16xf32>
      %302 = arith.addf %254, %300 : vector<2x16xf32>
      %303 = vector.extract_strided_slice %152 {offsets = [0, 3, 0], sizes = [2, 1, 64], strides = [1, 1, 1]} : vector<2x8x128xf32> to vector<2x1x64xf32>
      %304 = vector.shape_cast %303 : vector<2x1x64xf32> to vector<2x64xf32>
      %c0_117 = arith.constant 0 : index
      %c0_118 = arith.constant 0 : index
      %305 = vector.load %arg19[%c0_117, %c0_118] : memref<16x64xf32, #tpu.memory_space<vmem>>, vector<16x64xf32>
      %cst_119 = arith.constant dense<0.000000e+00> : vector<2x64xf32>
      %306 = tpu.matmul %282, %305, %cst_119 {dimension_numbers = #tpu.dot_dimension_numbers<[1], [0], [0], [1], [0, 0, 1, 1], [], []>} : vector<2x16xf32>, vector<16x64xf32>, vector<2x64xf32> -> vector<2x64xf32>
      %307 = arith.addf %304, %306 : vector<2x64xf32>
      %308 = vector.extract_strided_slice %152 {offsets = [0, 4, 64], sizes = [2, 1, 64], strides = [1, 1, 1]} : vector<2x8x128xf32> to vector<2x1x64xf32>
      %309 = vector.shape_cast %308 : vector<2x1x64xf32> to vector<2x64xf32>
      %c0_120 = arith.constant 0 : index
      %c0_121 = arith.constant 0 : index
      %310 = vector.load %arg20[%c0_120, %c0_121] : memref<16x64xf32, #tpu.memory_space<vmem>>, vector<16x64xf32>
      %cst_122 = arith.constant dense<0.000000e+00> : vector<2x64xf32>
      %311 = tpu.matmul %300, %310, %cst_122 {dimension_numbers = #tpu.dot_dimension_numbers<[1], [0], [0], [1], [0, 0, 1, 1], [], []>} : vector<2x16xf32>, vector<16x64xf32>, vector<2x64xf32> -> vector<2x64xf32>
      %312 = arith.addf %309, %311 : vector<2x64xf32>
      %313 = vector.extract_strided_slice %307 {offsets = [0, 0], sizes = [2, 48], strides = [1, 1]} : vector<2x64xf32> to vector<2x48xf32>
      %cst_123 = arith.constant 0.000000e+00 : f32
      %314 = vector.broadcast %cst_123 : f32 to vector<2x48xf32>
      %315 = arith.subf %314, %313 : vector<2x48xf32>
      %316 = math.exp %315 : vector<2x48xf32>
      %cst_124 = arith.constant 1.000000e+00 : f32
      %317 = vector.broadcast %cst_124 : f32 to vector<2x48xf32>
      %318 = arith.addf %317, %316 : vector<2x48xf32>
      %cst_125 = arith.constant 1.000000e+00 : f32
      %319 = vector.broadcast %cst_125 : f32 to vector<2x48xf32>
      %320 = arith.divf %319, %318 : vector<2x48xf32>
      %321 = vector.extract_strided_slice %307 {offsets = [0, 48], sizes = [2, 16], strides = [1, 1]} : vector<2x64xf32> to vector<2x16xf32>
      %322 = math.tanh %321 : vector<2x16xf32>
      %323 = vector.extract_strided_slice %320 {offsets = [0, 0], sizes = [2, 16], strides = [1, 1]} : vector<2x48xf32> to vector<2x16xf32>
      %324 = vector.extract_strided_slice %320 {offsets = [0, 16], sizes = [2, 16], strides = [1, 1]} : vector<2x48xf32> to vector<2x16xf32>
      %325 = vector.extract_strided_slice %320 {offsets = [0, 32], sizes = [2, 16], strides = [1, 1]} : vector<2x48xf32> to vector<2x16xf32>
      %326 = arith.mulf %324, %280 : vector<2x16xf32>
      %327 = arith.mulf %323, %322 : vector<2x16xf32>
      %328 = arith.addf %326, %327 : vector<2x16xf32>
      %329 = math.tanh %328 : vector<2x16xf32>
      %330 = arith.mulf %325, %329 : vector<2x16xf32>
      %331 = vector.extract_strided_slice %312 {offsets = [0, 0], sizes = [2, 48], strides = [1, 1]} : vector<2x64xf32> to vector<2x48xf32>
      %cst_126 = arith.constant 0.000000e+00 : f32
      %332 = vector.broadcast %cst_126 : f32 to vector<2x48xf32>
      %333 = arith.subf %332, %331 : vector<2x48xf32>
      %334 = math.exp %333 : vector<2x48xf32>
      %cst_127 = arith.constant 1.000000e+00 : f32
      %335 = vector.broadcast %cst_127 : f32 to vector<2x48xf32>
      %336 = arith.addf %335, %334 : vector<2x48xf32>
      %cst_128 = arith.constant 1.000000e+00 : f32
      %337 = vector.broadcast %cst_128 : f32 to vector<2x48xf32>
      %338 = arith.divf %337, %336 : vector<2x48xf32>
      %339 = vector.extract_strided_slice %312 {offsets = [0, 48], sizes = [2, 16], strides = [1, 1]} : vector<2x64xf32> to vector<2x16xf32>
      %340 = math.tanh %339 : vector<2x16xf32>
      %341 = vector.extract_strided_slice %338 {offsets = [0, 0], sizes = [2, 16], strides = [1, 1]} : vector<2x48xf32> to vector<2x16xf32>
      %342 = vector.extract_strided_slice %338 {offsets = [0, 16], sizes = [2, 16], strides = [1, 1]} : vector<2x48xf32> to vector<2x16xf32>
      %343 = vector.extract_strided_slice %338 {offsets = [0, 32], sizes = [2, 16], strides = [1, 1]} : vector<2x48xf32> to vector<2x16xf32>
      %344 = arith.mulf %342, %298 : vector<2x16xf32>
      %345 = arith.mulf %341, %340 : vector<2x16xf32>
      %346 = arith.addf %344, %345 : vector<2x16xf32>
      %347 = math.tanh %346 : vector<2x16xf32>
      %348 = arith.mulf %343, %347 : vector<2x16xf32>
      %349 = arith.addf %301, %330 : vector<2x16xf32>
      %350 = arith.addf %302, %348 : vector<2x16xf32>
      %351 = vector.extract_strided_slice %152 {offsets = [0, 4, 0], sizes = [2, 1, 64], strides = [1, 1, 1]} : vector<2x8x128xf32> to vector<2x1x64xf32>
      %352 = vector.shape_cast %351 : vector<2x1x64xf32> to vector<2x64xf32>
      %c0_129 = arith.constant 0 : index
      %c0_130 = arith.constant 0 : index
      %353 = vector.load %arg19[%c0_129, %c0_130] : memref<16x64xf32, #tpu.memory_space<vmem>>, vector<16x64xf32>
      %cst_131 = arith.constant dense<0.000000e+00> : vector<2x64xf32>
      %354 = tpu.matmul %330, %353, %cst_131 {dimension_numbers = #tpu.dot_dimension_numbers<[1], [0], [0], [1], [0, 0, 1, 1], [], []>} : vector<2x16xf32>, vector<16x64xf32>, vector<2x64xf32> -> vector<2x64xf32>
      %355 = arith.addf %352, %354 : vector<2x64xf32>
      %356 = vector.extract_strided_slice %152 {offsets = [0, 3, 64], sizes = [2, 1, 64], strides = [1, 1, 1]} : vector<2x8x128xf32> to vector<2x1x64xf32>
      %357 = vector.shape_cast %356 : vector<2x1x64xf32> to vector<2x64xf32>
      %c0_132 = arith.constant 0 : index
      %c0_133 = arith.constant 0 : index
      %358 = vector.load %arg20[%c0_132, %c0_133] : memref<16x64xf32, #tpu.memory_space<vmem>>, vector<16x64xf32>
      %cst_134 = arith.constant dense<0.000000e+00> : vector<2x64xf32>
      %359 = tpu.matmul %348, %358, %cst_134 {dimension_numbers = #tpu.dot_dimension_numbers<[1], [0], [0], [1], [0, 0, 1, 1], [], []>} : vector<2x16xf32>, vector<16x64xf32>, vector<2x64xf32> -> vector<2x64xf32>
      %360 = arith.addf %357, %359 : vector<2x64xf32>
      %361 = vector.extract_strided_slice %355 {offsets = [0, 0], sizes = [2, 48], strides = [1, 1]} : vector<2x64xf32> to vector<2x48xf32>
      %cst_135 = arith.constant 0.000000e+00 : f32
      %362 = vector.broadcast %cst_135 : f32 to vector<2x48xf32>
      %363 = arith.subf %362, %361 : vector<2x48xf32>
      %364 = math.exp %363 : vector<2x48xf32>
      %cst_136 = arith.constant 1.000000e+00 : f32
      %365 = vector.broadcast %cst_136 : f32 to vector<2x48xf32>
      %366 = arith.addf %365, %364 : vector<2x48xf32>
      %cst_137 = arith.constant 1.000000e+00 : f32
      %367 = vector.broadcast %cst_137 : f32 to vector<2x48xf32>
      %368 = arith.divf %367, %366 : vector<2x48xf32>
      %369 = vector.extract_strided_slice %355 {offsets = [0, 48], sizes = [2, 16], strides = [1, 1]} : vector<2x64xf32> to vector<2x16xf32>
      %370 = math.tanh %369 : vector<2x16xf32>
      %371 = vector.extract_strided_slice %368 {offsets = [0, 0], sizes = [2, 16], strides = [1, 1]} : vector<2x48xf32> to vector<2x16xf32>
      %372 = vector.extract_strided_slice %368 {offsets = [0, 16], sizes = [2, 16], strides = [1, 1]} : vector<2x48xf32> to vector<2x16xf32>
      %373 = vector.extract_strided_slice %368 {offsets = [0, 32], sizes = [2, 16], strides = [1, 1]} : vector<2x48xf32> to vector<2x16xf32>
      %374 = arith.mulf %372, %328 : vector<2x16xf32>
      %375 = arith.mulf %371, %370 : vector<2x16xf32>
      %376 = arith.addf %374, %375 : vector<2x16xf32>
      %377 = math.tanh %376 : vector<2x16xf32>
      %378 = arith.mulf %373, %377 : vector<2x16xf32>
      %379 = vector.extract_strided_slice %360 {offsets = [0, 0], sizes = [2, 48], strides = [1, 1]} : vector<2x64xf32> to vector<2x48xf32>
      %cst_138 = arith.constant 0.000000e+00 : f32
      %380 = vector.broadcast %cst_138 : f32 to vector<2x48xf32>
      %381 = arith.subf %380, %379 : vector<2x48xf32>
      %382 = math.exp %381 : vector<2x48xf32>
      %cst_139 = arith.constant 1.000000e+00 : f32
      %383 = vector.broadcast %cst_139 : f32 to vector<2x48xf32>
      %384 = arith.addf %383, %382 : vector<2x48xf32>
      %cst_140 = arith.constant 1.000000e+00 : f32
      %385 = vector.broadcast %cst_140 : f32 to vector<2x48xf32>
      %386 = arith.divf %385, %384 : vector<2x48xf32>
      %387 = vector.extract_strided_slice %360 {offsets = [0, 48], sizes = [2, 16], strides = [1, 1]} : vector<2x64xf32> to vector<2x16xf32>
      %388 = math.tanh %387 : vector<2x16xf32>
      %389 = vector.extract_strided_slice %386 {offsets = [0, 0], sizes = [2, 16], strides = [1, 1]} : vector<2x48xf32> to vector<2x16xf32>
      %390 = vector.extract_strided_slice %386 {offsets = [0, 16], sizes = [2, 16], strides = [1, 1]} : vector<2x48xf32> to vector<2x16xf32>
      %391 = vector.extract_strided_slice %386 {offsets = [0, 32], sizes = [2, 16], strides = [1, 1]} : vector<2x48xf32> to vector<2x16xf32>
      %392 = arith.mulf %390, %346 : vector<2x16xf32>
      %393 = arith.mulf %389, %388 : vector<2x16xf32>
      %394 = arith.addf %392, %393 : vector<2x16xf32>
      %395 = math.tanh %394 : vector<2x16xf32>
      %396 = arith.mulf %391, %395 : vector<2x16xf32>
      %397 = arith.addf %349, %378 : vector<2x16xf32>
      %398 = arith.addf %350, %396 : vector<2x16xf32>
      %399 = vector.extract_strided_slice %152 {offsets = [0, 5, 0], sizes = [2, 1, 64], strides = [1, 1, 1]} : vector<2x8x128xf32> to vector<2x1x64xf32>
      %400 = vector.shape_cast %399 : vector<2x1x64xf32> to vector<2x64xf32>
      %c0_141 = arith.constant 0 : index
      %c0_142 = arith.constant 0 : index
      %401 = vector.load %arg19[%c0_141, %c0_142] : memref<16x64xf32, #tpu.memory_space<vmem>>, vector<16x64xf32>
      %cst_143 = arith.constant dense<0.000000e+00> : vector<2x64xf32>
      %402 = tpu.matmul %378, %401, %cst_143 {dimension_numbers = #tpu.dot_dimension_numbers<[1], [0], [0], [1], [0, 0, 1, 1], [], []>} : vector<2x16xf32>, vector<16x64xf32>, vector<2x64xf32> -> vector<2x64xf32>
      %403 = arith.addf %400, %402 : vector<2x64xf32>
      %404 = vector.extract_strided_slice %152 {offsets = [0, 2, 64], sizes = [2, 1, 64], strides = [1, 1, 1]} : vector<2x8x128xf32> to vector<2x1x64xf32>
      %405 = vector.shape_cast %404 : vector<2x1x64xf32> to vector<2x64xf32>
      %c0_144 = arith.constant 0 : index
      %c0_145 = arith.constant 0 : index
      %406 = vector.load %arg20[%c0_144, %c0_145] : memref<16x64xf32, #tpu.memory_space<vmem>>, vector<16x64xf32>
      %cst_146 = arith.constant dense<0.000000e+00> : vector<2x64xf32>
      %407 = tpu.matmul %396, %406, %cst_146 {dimension_numbers = #tpu.dot_dimension_numbers<[1], [0], [0], [1], [0, 0, 1, 1], [], []>} : vector<2x16xf32>, vector<16x64xf32>, vector<2x64xf32> -> vector<2x64xf32>
      %408 = arith.addf %405, %407 : vector<2x64xf32>
      %409 = vector.extract_strided_slice %403 {offsets = [0, 0], sizes = [2, 48], strides = [1, 1]} : vector<2x64xf32> to vector<2x48xf32>
      %cst_147 = arith.constant 0.000000e+00 : f32
      %410 = vector.broadcast %cst_147 : f32 to vector<2x48xf32>
      %411 = arith.subf %410, %409 : vector<2x48xf32>
      %412 = math.exp %411 : vector<2x48xf32>
      %cst_148 = arith.constant 1.000000e+00 : f32
      %413 = vector.broadcast %cst_148 : f32 to vector<2x48xf32>
      %414 = arith.addf %413, %412 : vector<2x48xf32>
      %cst_149 = arith.constant 1.000000e+00 : f32
      %415 = vector.broadcast %cst_149 : f32 to vector<2x48xf32>
      %416 = arith.divf %415, %414 : vector<2x48xf32>
      %417 = vector.extract_strided_slice %403 {offsets = [0, 48], sizes = [2, 16], strides = [1, 1]} : vector<2x64xf32> to vector<2x16xf32>
      %418 = math.tanh %417 : vector<2x16xf32>
      %419 = vector.extract_strided_slice %416 {offsets = [0, 0], sizes = [2, 16], strides = [1, 1]} : vector<2x48xf32> to vector<2x16xf32>
      %420 = vector.extract_strided_slice %416 {offsets = [0, 16], sizes = [2, 16], strides = [1, 1]} : vector<2x48xf32> to vector<2x16xf32>
      %421 = vector.extract_strided_slice %416 {offsets = [0, 32], sizes = [2, 16], strides = [1, 1]} : vector<2x48xf32> to vector<2x16xf32>
      %422 = arith.mulf %420, %376 : vector<2x16xf32>
      %423 = arith.mulf %419, %418 : vector<2x16xf32>
      %424 = arith.addf %422, %423 : vector<2x16xf32>
      %425 = math.tanh %424 : vector<2x16xf32>
      %426 = arith.mulf %421, %425 : vector<2x16xf32>
      %427 = vector.extract_strided_slice %408 {offsets = [0, 0], sizes = [2, 48], strides = [1, 1]} : vector<2x64xf32> to vector<2x48xf32>
      %cst_150 = arith.constant 0.000000e+00 : f32
      %428 = vector.broadcast %cst_150 : f32 to vector<2x48xf32>
      %429 = arith.subf %428, %427 : vector<2x48xf32>
      %430 = math.exp %429 : vector<2x48xf32>
      %cst_151 = arith.constant 1.000000e+00 : f32
      %431 = vector.broadcast %cst_151 : f32 to vector<2x48xf32>
      %432 = arith.addf %431, %430 : vector<2x48xf32>
      %cst_152 = arith.constant 1.000000e+00 : f32
      %433 = vector.broadcast %cst_152 : f32 to vector<2x48xf32>
      %434 = arith.divf %433, %432 : vector<2x48xf32>
      %435 = vector.extract_strided_slice %408 {offsets = [0, 48], sizes = [2, 16], strides = [1, 1]} : vector<2x64xf32> to vector<2x16xf32>
      %436 = math.tanh %435 : vector<2x16xf32>
      %437 = vector.extract_strided_slice %434 {offsets = [0, 0], sizes = [2, 16], strides = [1, 1]} : vector<2x48xf32> to vector<2x16xf32>
      %438 = vector.extract_strided_slice %434 {offsets = [0, 16], sizes = [2, 16], strides = [1, 1]} : vector<2x48xf32> to vector<2x16xf32>
      %439 = vector.extract_strided_slice %434 {offsets = [0, 32], sizes = [2, 16], strides = [1, 1]} : vector<2x48xf32> to vector<2x16xf32>
      %440 = arith.mulf %438, %394 : vector<2x16xf32>
      %441 = arith.mulf %437, %436 : vector<2x16xf32>
      %442 = arith.addf %440, %441 : vector<2x16xf32>
      %443 = math.tanh %442 : vector<2x16xf32>
      %444 = arith.mulf %439, %443 : vector<2x16xf32>
      %445 = arith.addf %397, %426 : vector<2x16xf32>
      %446 = arith.addf %398, %444 : vector<2x16xf32>
      %447 = vector.extract_strided_slice %152 {offsets = [0, 6, 0], sizes = [2, 1, 64], strides = [1, 1, 1]} : vector<2x8x128xf32> to vector<2x1x64xf32>
      %448 = vector.shape_cast %447 : vector<2x1x64xf32> to vector<2x64xf32>
      %c0_153 = arith.constant 0 : index
      %c0_154 = arith.constant 0 : index
      %449 = vector.load %arg19[%c0_153, %c0_154] : memref<16x64xf32, #tpu.memory_space<vmem>>, vector<16x64xf32>
      %cst_155 = arith.constant dense<0.000000e+00> : vector<2x64xf32>
      %450 = tpu.matmul %426, %449, %cst_155 {dimension_numbers = #tpu.dot_dimension_numbers<[1], [0], [0], [1], [0, 0, 1, 1], [], []>} : vector<2x16xf32>, vector<16x64xf32>, vector<2x64xf32> -> vector<2x64xf32>
      %451 = arith.addf %448, %450 : vector<2x64xf32>
      %452 = vector.extract_strided_slice %152 {offsets = [0, 1, 64], sizes = [2, 1, 64], strides = [1, 1, 1]} : vector<2x8x128xf32> to vector<2x1x64xf32>
      %453 = vector.shape_cast %452 : vector<2x1x64xf32> to vector<2x64xf32>
      %c0_156 = arith.constant 0 : index
      %c0_157 = arith.constant 0 : index
      %454 = vector.load %arg20[%c0_156, %c0_157] : memref<16x64xf32, #tpu.memory_space<vmem>>, vector<16x64xf32>
      %cst_158 = arith.constant dense<0.000000e+00> : vector<2x64xf32>
      %455 = tpu.matmul %444, %454, %cst_158 {dimension_numbers = #tpu.dot_dimension_numbers<[1], [0], [0], [1], [0, 0, 1, 1], [], []>} : vector<2x16xf32>, vector<16x64xf32>, vector<2x64xf32> -> vector<2x64xf32>
      %456 = arith.addf %453, %455 : vector<2x64xf32>
      %457 = vector.extract_strided_slice %451 {offsets = [0, 0], sizes = [2, 48], strides = [1, 1]} : vector<2x64xf32> to vector<2x48xf32>
      %cst_159 = arith.constant 0.000000e+00 : f32
      %458 = vector.broadcast %cst_159 : f32 to vector<2x48xf32>
      %459 = arith.subf %458, %457 : vector<2x48xf32>
      %460 = math.exp %459 : vector<2x48xf32>
      %cst_160 = arith.constant 1.000000e+00 : f32
      %461 = vector.broadcast %cst_160 : f32 to vector<2x48xf32>
      %462 = arith.addf %461, %460 : vector<2x48xf32>
      %cst_161 = arith.constant 1.000000e+00 : f32
      %463 = vector.broadcast %cst_161 : f32 to vector<2x48xf32>
      %464 = arith.divf %463, %462 : vector<2x48xf32>
      %465 = vector.extract_strided_slice %451 {offsets = [0, 48], sizes = [2, 16], strides = [1, 1]} : vector<2x64xf32> to vector<2x16xf32>
      %466 = math.tanh %465 : vector<2x16xf32>
      %467 = vector.extract_strided_slice %464 {offsets = [0, 0], sizes = [2, 16], strides = [1, 1]} : vector<2x48xf32> to vector<2x16xf32>
      %468 = vector.extract_strided_slice %464 {offsets = [0, 16], sizes = [2, 16], strides = [1, 1]} : vector<2x48xf32> to vector<2x16xf32>
      %469 = vector.extract_strided_slice %464 {offsets = [0, 32], sizes = [2, 16], strides = [1, 1]} : vector<2x48xf32> to vector<2x16xf32>
      %470 = arith.mulf %468, %424 : vector<2x16xf32>
      %471 = arith.mulf %467, %466 : vector<2x16xf32>
      %472 = arith.addf %470, %471 : vector<2x16xf32>
      %473 = math.tanh %472 : vector<2x16xf32>
      %474 = arith.mulf %469, %473 : vector<2x16xf32>
      %475 = vector.extract_strided_slice %456 {offsets = [0, 0], sizes = [2, 48], strides = [1, 1]} : vector<2x64xf32> to vector<2x48xf32>
      %cst_162 = arith.constant 0.000000e+00 : f32
      %476 = vector.broadcast %cst_162 : f32 to vector<2x48xf32>
      %477 = arith.subf %476, %475 : vector<2x48xf32>
      %478 = math.exp %477 : vector<2x48xf32>
      %cst_163 = arith.constant 1.000000e+00 : f32
      %479 = vector.broadcast %cst_163 : f32 to vector<2x48xf32>
      %480 = arith.addf %479, %478 : vector<2x48xf32>
      %cst_164 = arith.constant 1.000000e+00 : f32
      %481 = vector.broadcast %cst_164 : f32 to vector<2x48xf32>
      %482 = arith.divf %481, %480 : vector<2x48xf32>
      %483 = vector.extract_strided_slice %456 {offsets = [0, 48], sizes = [2, 16], strides = [1, 1]} : vector<2x64xf32> to vector<2x16xf32>
      %484 = math.tanh %483 : vector<2x16xf32>
      %485 = vector.extract_strided_slice %482 {offsets = [0, 0], sizes = [2, 16], strides = [1, 1]} : vector<2x48xf32> to vector<2x16xf32>
      %486 = vector.extract_strided_slice %482 {offsets = [0, 16], sizes = [2, 16], strides = [1, 1]} : vector<2x48xf32> to vector<2x16xf32>
      %487 = vector.extract_strided_slice %482 {offsets = [0, 32], sizes = [2, 16], strides = [1, 1]} : vector<2x48xf32> to vector<2x16xf32>
      %488 = arith.mulf %486, %442 : vector<2x16xf32>
      %489 = arith.mulf %485, %484 : vector<2x16xf32>
      %490 = arith.addf %488, %489 : vector<2x16xf32>
      %491 = math.tanh %490 : vector<2x16xf32>
      %492 = arith.mulf %487, %491 : vector<2x16xf32>
      %493 = arith.addf %445, %474 : vector<2x16xf32>
      %494 = arith.addf %446, %492 : vector<2x16xf32>
      %495 = vector.extract_strided_slice %152 {offsets = [0, 7, 0], sizes = [2, 1, 64], strides = [1, 1, 1]} : vector<2x8x128xf32> to vector<2x1x64xf32>
      %496 = vector.shape_cast %495 : vector<2x1x64xf32> to vector<2x64xf32>
      %c0_165 = arith.constant 0 : index
      %c0_166 = arith.constant 0 : index
      %497 = vector.load %arg19[%c0_165, %c0_166] : memref<16x64xf32, #tpu.memory_space<vmem>>, vector<16x64xf32>
      %cst_167 = arith.constant dense<0.000000e+00> : vector<2x64xf32>
      %498 = tpu.matmul %474, %497, %cst_167 {dimension_numbers = #tpu.dot_dimension_numbers<[1], [0], [0], [1], [0, 0, 1, 1], [], []>} : vector<2x16xf32>, vector<16x64xf32>, vector<2x64xf32> -> vector<2x64xf32>
      %499 = arith.addf %496, %498 : vector<2x64xf32>
      %500 = vector.extract_strided_slice %152 {offsets = [0, 0, 64], sizes = [2, 1, 64], strides = [1, 1, 1]} : vector<2x8x128xf32> to vector<2x1x64xf32>
      %501 = vector.shape_cast %500 : vector<2x1x64xf32> to vector<2x64xf32>
      %c0_168 = arith.constant 0 : index
      %c0_169 = arith.constant 0 : index
      %502 = vector.load %arg20[%c0_168, %c0_169] : memref<16x64xf32, #tpu.memory_space<vmem>>, vector<16x64xf32>
      %cst_170 = arith.constant dense<0.000000e+00> : vector<2x64xf32>
      %503 = tpu.matmul %492, %502, %cst_170 {dimension_numbers = #tpu.dot_dimension_numbers<[1], [0], [0], [1], [0, 0, 1, 1], [], []>} : vector<2x16xf32>, vector<16x64xf32>, vector<2x64xf32> -> vector<2x64xf32>
      %504 = arith.addf %501, %503 : vector<2x64xf32>
      %505 = vector.extract_strided_slice %499 {offsets = [0, 0], sizes = [2, 48], strides = [1, 1]} : vector<2x64xf32> to vector<2x48xf32>
      %cst_171 = arith.constant 0.000000e+00 : f32
      %506 = vector.broadcast %cst_171 : f32 to vector<2x48xf32>
      %507 = arith.subf %506, %505 : vector<2x48xf32>
      %508 = math.exp %507 : vector<2x48xf32>
      %cst_172 = arith.constant 1.000000e+00 : f32
      %509 = vector.broadcast %cst_172 : f32 to vector<2x48xf32>
      %510 = arith.addf %509, %508 : vector<2x48xf32>
      %cst_173 = arith.constant 1.000000e+00 : f32
      %511 = vector.broadcast %cst_173 : f32 to vector<2x48xf32>
      %512 = arith.divf %511, %510 : vector<2x48xf32>
      %513 = vector.extract_strided_slice %499 {offsets = [0, 48], sizes = [2, 16], strides = [1, 1]} : vector<2x64xf32> to vector<2x16xf32>
      %514 = math.tanh %513 : vector<2x16xf32>
      %515 = vector.extract_strided_slice %512 {offsets = [0, 0], sizes = [2, 16], strides = [1, 1]} : vector<2x48xf32> to vector<2x16xf32>
      %516 = vector.extract_strided_slice %512 {offsets = [0, 16], sizes = [2, 16], strides = [1, 1]} : vector<2x48xf32> to vector<2x16xf32>
      %517 = vector.extract_strided_slice %512 {offsets = [0, 32], sizes = [2, 16], strides = [1, 1]} : vector<2x48xf32> to vector<2x16xf32>
      %518 = arith.mulf %516, %472 : vector<2x16xf32>
      %519 = arith.mulf %515, %514 : vector<2x16xf32>
      %520 = arith.addf %518, %519 : vector<2x16xf32>
      %521 = math.tanh %520 : vector<2x16xf32>
      %522 = arith.mulf %517, %521 : vector<2x16xf32>
      %523 = vector.extract_strided_slice %504 {offsets = [0, 0], sizes = [2, 48], strides = [1, 1]} : vector<2x64xf32> to vector<2x48xf32>
      %cst_174 = arith.constant 0.000000e+00 : f32
      %524 = vector.broadcast %cst_174 : f32 to vector<2x48xf32>
      %525 = arith.subf %524, %523 : vector<2x48xf32>
      %526 = math.exp %525 : vector<2x48xf32>
      %cst_175 = arith.constant 1.000000e+00 : f32
      %527 = vector.broadcast %cst_175 : f32 to vector<2x48xf32>
      %528 = arith.addf %527, %526 : vector<2x48xf32>
      %cst_176 = arith.constant 1.000000e+00 : f32
      %529 = vector.broadcast %cst_176 : f32 to vector<2x48xf32>
      %530 = arith.divf %529, %528 : vector<2x48xf32>
      %531 = vector.extract_strided_slice %504 {offsets = [0, 48], sizes = [2, 16], strides = [1, 1]} : vector<2x64xf32> to vector<2x16xf32>
      %532 = math.tanh %531 : vector<2x16xf32>
      %533 = vector.extract_strided_slice %530 {offsets = [0, 0], sizes = [2, 16], strides = [1, 1]} : vector<2x48xf32> to vector<2x16xf32>
      %534 = vector.extract_strided_slice %530 {offsets = [0, 16], sizes = [2, 16], strides = [1, 1]} : vector<2x48xf32> to vector<2x16xf32>
      %535 = vector.extract_strided_slice %530 {offsets = [0, 32], sizes = [2, 16], strides = [1, 1]} : vector<2x48xf32> to vector<2x16xf32>
      %536 = arith.mulf %534, %490 : vector<2x16xf32>
      %537 = arith.mulf %533, %532 : vector<2x16xf32>
      %538 = arith.addf %536, %537 : vector<2x16xf32>
      %539 = math.tanh %538 : vector<2x16xf32>
      %540 = arith.mulf %535, %539 : vector<2x16xf32>
      %541 = arith.addf %493, %522 : vector<2x16xf32>
      %542 = arith.addf %494, %540 : vector<2x16xf32>
      %543 = tpu.concatenate %541, %542 in 1 : vector<2x16xf32>, vector<2x16xf32> -> vector<2x32xf32>
      %cst_177 = arith.constant 1.250000e-01 : f32
      %544 = vector.broadcast %cst_177 : f32 to vector<2x32xf32>
      %545 = arith.mulf %543, %544 : vector<2x32xf32>
      %c0_178 = arith.constant 0 : index
      %c0_179 = arith.constant 0 : index
      %546 = vector.load %arg21[%c0_178, %c0_179] : memref<32x128xf32, #tpu.memory_space<vmem>>, vector<32x128xf32>
      %cst_180 = arith.constant dense<0.000000e+00> : vector<2x128xf32>
      %547 = tpu.matmul %545, %546, %cst_180 {dimension_numbers = #tpu.dot_dimension_numbers<[1], [0], [0], [1], [0, 0, 1, 1], [], []>} : vector<2x32xf32>, vector<32x128xf32>, vector<2x128xf32> -> vector<2x128xf32>
      %c0_181 = arith.constant 0 : index
      %c0_182 = arith.constant 0 : index
      %548 = vector.load %arg22[%c0_181, %c0_182] : memref<1x128xf32, #tpu.memory_space<vmem>>, vector<1x128xf32>
      %549 = vector.broadcast %548 : vector<1x128xf32> to vector<2x128xf32>
      %550 = arith.addf %547, %549 : vector<2x128xf32>
      %c0_183 = arith.constant 0 : index
      %c0_184 = arith.constant 0 : index
      %551 = vector.load %arg23[%c0_183, %c0_184] : memref<2x128xf32, #tpu.memory_space<vmem>>, vector<2x128xf32>
      tpu.vector_store %arg23[%c0_183, %c0_184], %550 {strides = array<i32>} : memref<2x128xf32, #tpu.memory_space<vmem>>, vector<2x128xf32>,
    } else {
    }
    return
  }
  func.func @transform_0(%arg0: i32) -> (i32, i32) {
    %c0_i32 = arith.constant 0 : i32
    %c0_i32_0 = arith.constant 0 : i32
    %c0_i32_1 = arith.constant 0 : i32
    return %c0_i32, %c0_i32_0 : i32, i32
  }
  func.func @transform_1(%arg0: i32) -> (i32, i32) {
    %c0_i32 = arith.constant 0 : i32
    %c0_i32_0 = arith.constant 0 : i32
    %c0_i32_1 = arith.constant 0 : i32
    return %c0_i32, %c0_i32_0 : i32, i32
  }
  func.func @transform_2(%arg0: i32) -> (i32, i32) {
    %c0_i32 = arith.constant 0 : i32
    %c0_i32_0 = arith.constant 0 : i32
    %c0_i32_1 = arith.constant 0 : i32
    return %c0_i32, %c0_i32_0 : i32, i32
  }
  func.func @transform_3(%arg0: i32) -> (i32, i32) {
    %c0_i32 = arith.constant 0 : i32
    %c0_i32_0 = arith.constant 0 : i32
    %c0_i32_1 = arith.constant 0 : i32
    return %c0_i32, %c0_i32_0 : i32, i32
  }
  func.func @transform_4(%arg0: i32) -> (i32, i32, i32) {
    %c0_i32 = arith.constant 0 : i32
    %c0_i32_0 = arith.constant 0 : i32
    %c0_i32_1 = arith.constant 0 : i32
    return %arg0, %c0_i32, %c0_i32_0 : i32, i32, i32
  }
  func.func @transform_5(%arg0: i32) -> (i32, i32, i32) {
    %c0_i32 = arith.constant 0 : i32
    %c0_i32_0 = arith.constant 0 : i32
    %c0_i32_1 = arith.constant 0 : i32
    return %arg0, %c0_i32, %c0_i32_0 : i32, i32, i32
  }
  func.func @transform_6(%arg0: i32) -> (i32, i32, i32) {
    %c0_i32 = arith.constant 0 : i32
    %c0_i32_0 = arith.constant 0 : i32
    %c0_i32_1 = arith.constant 0 : i32
    return %arg0, %c0_i32, %c0_i32_0 : i32, i32, i32
  }
  func.func @transform_7(%arg0: i32) -> (i32, i32, i32) {
    %c0_i32 = arith.constant 0 : i32
    %c0_i32_0 = arith.constant 0 : i32
    %c0_i32_1 = arith.constant 0 : i32
    return %arg0, %c0_i32, %c0_i32_0 : i32, i32, i32
  }
  func.func @transform_8(%arg0: i32) -> (i32, i32, i32) {
    %c0_i32 = arith.constant 0 : i32
    %c0_i32_0 = arith.constant 0 : i32
    %c0_i32_1 = arith.constant 0 : i32
    return %arg0, %c0_i32, %c0_i32_0 : i32, i32, i32
  }
  func.func @transform_9(%arg0: i32) -> (i32, i32, i32) {
    %c0_i32 = arith.constant 0 : i32
    %c0_i32_0 = arith.constant 0 : i32
    %c0_i32_1 = arith.constant 0 : i32
    return %arg0, %c0_i32, %c0_i32_0 : i32, i32, i32
  }
  func.func @transform_10(%arg0: i32) -> (i32, i32, i32) {
    %c0_i32 = arith.constant 0 : i32
    %c0_i32_0 = arith.constant 0 : i32
    %c0_i32_1 = arith.constant 0 : i32
    return %arg0, %c0_i32, %c0_i32_0 : i32, i32, i32
  }
  func.func @transform_11(%arg0: i32) -> (i32, i32, i32) {
    %c0_i32 = arith.constant 0 : i32
    %c0_i32_0 = arith.constant 0 : i32
    %c0_i32_1 = arith.constant 0 : i32
    return %arg0, %c0_i32, %c0_i32_0 : i32, i32, i32
  }
  func.func @transform_12(%arg0: i32) -> (i32, i32, i32) {
    %c0_i32 = arith.constant 0 : i32
    %c0_i32_0 = arith.constant 0 : i32
    %c0_i32_1 = arith.constant 0 : i32
    return %arg0, %c0_i32, %c0_i32_0 : i32, i32, i32
  }
  func.func @transform_13(%arg0: i32) -> (i32, i32, i32) {
    %c0_i32 = arith.constant 0 : i32
    %c0_i32_0 = arith.constant 0 : i32
    %c0_i32_1 = arith.constant 0 : i32
    return %arg0, %c0_i32, %c0_i32_0 : i32, i32, i32
  }
  func.func @transform_14(%arg0: i32) -> (i32, i32, i32) {
    %c0_i32 = arith.constant 0 : i32
    %c0_i32_0 = arith.constant 0 : i32
    %c0_i32_1 = arith.constant 0 : i32
    return %arg0, %c0_i32, %c0_i32_0 : i32, i32, i32
  }
  func.func @transform_15(%arg0: i32) -> (i32, i32, i32) {
    %c0_i32 = arith.constant 0 : i32
    %c0_i32_0 = arith.constant 0 : i32
    %c0_i32_1 = arith.constant 0 : i32
    return %arg0, %c0_i32, %c0_i32_0 : i32, i32, i32
  }
  func.func @transform_16(%arg0: i32) -> (i32, i32) {
    %c0_i32 = arith.constant 0 : i32
    %c0_i32_0 = arith.constant 0 : i32
    %c0_i32_1 = arith.constant 0 : i32
    return %c0_i32, %c0_i32_0 : i32, i32
  }
  func.func @transform_17(%arg0: i32) -> (i32, i32) {
    %c0_i32 = arith.constant 0 : i32
    %c0_i32_0 = arith.constant 0 : i32
    %c0_i32_1 = arith.constant 0 : i32
    return %c0_i32, %c0_i32_0 : i32, i32
  }
  func.func @transform_18(%arg0: i32) -> (i32, i32) {
    %c0_i32 = arith.constant 0 : i32
    %c0_i32_0 = arith.constant 0 : i32
    %c0_i32_1 = arith.constant 0 : i32
    return %c0_i32, %c0_i32_0 : i32, i32
  }
  func.func @transform_19(%arg0: i32) -> (i32, i32) {
    %c0_i32 = arith.constant 0 : i32
    %c0_i32_0 = arith.constant 0 : i32
    %c0_i32_1 = arith.constant 0 : i32
    return %c0_i32, %c0_i32_0 : i32, i32
  }
  func.func @transform_20(%arg0: i32) -> (i32, i32) {
    %c0_i32 = arith.constant 0 : i32
    %c0_i32_0 = arith.constant 0 : i32
    %c0_i32_1 = arith.constant 0 : i32
    return %c0_i32, %c0_i32_0 : i32, i32
  }
  func.func @transform_21(%arg0: i32) -> (i32, i32) {
    %c0_i32 = arith.constant 0 : i32
    %c0_i32_0 = arith.constant 0 : i32
    %c0_i32_1 = arith.constant 0 : i32
    return %c0_i32, %c0_i32_0 : i32, i32
  }
  func.func @transform_22(%arg0: i32) -> (i32, i32) {
    %c0_i32 = arith.constant 0 : i32
    %c0_i32_0 = arith.constant 0 : i32
    %c0_i32_1 = arith.constant 0 : i32
    return %c0_i32, %c0_i32_0 : i32, i32
  }
}

</mosaic_0001>

<llo_original>
// kernel: forward.1
$region0: #{forward.1}
  #allocation0 [shape = 'u32[]', space=smem, size = 0x4, offset = 0x4, fixed_abs, tag = 'smem constant byte address 0x4 - core index']
  #allocation1 [shape = 'u32[144,128]{1,0:T(1,128)}', space=vmem, size = 0x12000, scoped, tag = 'internal scratch']
  #allocation2 [shape = 'f32[16,32]{1,0:T(8,128)}', space=vmem, size = 0x2000, scoped, tag = 'scratch operand']
  %s0 = inlined_call_operand.vmem [shape: f32[16,32], index: 0, kind: input, shape index: {}]
  %s1 = inlined_call_operand.vmem [shape: f32[1,32], index: 1, kind: input, shape index: {}]
  %s2 = inlined_call_operand.vmem [shape: f32[1,32], index: 2, kind: input, shape index: {}]
  %s3 = inlined_call_operand.vmem [shape: f32[2,8], index: 3, kind: input, shape index: {}]
  %s4 = inlined_call_operand.vmem [shape: f32[2,32,96], index: 4, kind: input, shape index: {}]
  %s5 = inlined_call_operand.vmem [shape: f32[2,1,96], index: 5, kind: input, shape index: {}]
  %s6 = inlined_call_operand.vmem [shape: f32[2,32,32], index: 6, kind: input, shape index: {}]
  %s7 = inlined_call_operand.vmem [shape: f32[2,1,32], index: 7, kind: input, shape index: {}]
  %s8 = inlined_call_operand.vmem [shape: f32[2,1,32], index: 8, kind: input, shape index: {}]
  %s9 = inlined_call_operand.vmem [shape: f32[2,1,32], index: 9, kind: input, shape index: {}]
  %s10 = inlined_call_operand.vmem [shape: f32[2,32,64], index: 10, kind: input, shape index: {}]
  %s11 = inlined_call_operand.vmem [shape: f32[2,1,64], index: 11, kind: input, shape index: {}]
  %s12 = inlined_call_operand.vmem [shape: f32[2,64,32], index: 12, kind: input, shape index: {}]
  %s13 = inlined_call_operand.vmem [shape: f32[2,1,32], index: 13, kind: input, shape index: {}]
  %s14 = inlined_call_operand.vmem [shape: f32[2,1,32], index: 14, kind: input, shape index: {}]
  %s15 = inlined_call_operand.vmem [shape: f32[2,1,32], index: 15, kind: input, shape index: {}]
  %s16 = inlined_call_operand.vmem [shape: f32[32,128], index: 16, kind: input, shape index: {}]
  %s17 = inlined_call_operand.vmem [shape: f32[1,128], index: 17, kind: input, shape index: {}]
  %s18 = inlined_call_operand.vmem [shape: f32[16,64], index: 18, kind: input, shape index: {}]
  %s19 = inlined_call_operand.vmem [shape: f32[16,64], index: 19, kind: input, shape index: {}]
  %s20 = inlined_call_operand.vmem [shape: f32[32,128], index: 20, kind: input, shape index: {}]
  %s21 = inlined_call_operand.vmem [shape: f32[1,128], index: 21, kind: input, shape index: {}]
  %s22 = inlined_call_operand.hbm [shape: f32[2,128], index: 22, kind: output, shape index: {}]
  %s23 = sld [smem:[#allocation0]]
  $region129: #{forward.1} parent=0
    _
  %s25 = ssub.s32 1, %s23
  %s26 = scalar_select 0, %s25, %s23
  $region1: #{forward.1} parent=0
    #allocation3 [shape = 'u8[1024]{0}', space=vmem, size = 0x400, scoped, tag = 'output window, operand 0, single buffered']
    #allocation4 [shape = 's32[2]{0}', space=sflag, size = 0x8, scoped, tag = 'scoped memory for forward.1']
    %27 = vsyncpa [#allocation4], 0
    loop: start=0, step=1, limit=4
    $region2: #{forward.1} parent=1 // loop_pre_header
      _
    $region3: #{forward.1} parent=1 // loop_header
      %s29 = sphi 0, %s33
      %p30 = scmp.ge.s32.totalorder %s29, 4
      %s37 = sphi 0, %s37
      %s39 = sphi 0, %s37
      %s40 = sphi 0, %s39
      %s54 = sphi 0, %s40
      %s58 = sphi 0, %s58
      %s60 = sphi 0, %s58
      %s61 = sphi 0, %s60
      %s75 = sphi 0, %s61
      %s79 = sphi 0, %s79
      %s81 = sphi 0, %s79
      %s82 = sphi 0, %s81
      %s96 = sphi 0, %s82
      %s100 = sphi 0, %s100
      %s102 = sphi 0, %s100
      %s103 = sphi 0, %s102
      %s117 = sphi 0, %s103
      %s123 = sphi 0, %s125
      %s126 = sphi 0, %s123
      %s127 = sphi 0, %s126
      %s143 = sphi 0, %s127
      %s149 = sphi 0, %s151
      %s152 = sphi 0, %s149
      %s153 = sphi 0, %s152
      %s169 = sphi 0, %s153
      %s175 = sphi 0, %s177
      %s178 = sphi 0, %s175
      %s179 = sphi 0, %s178
      %s195 = sphi 0, %s179
      %s201 = sphi 0, %s203
      %s204 = sphi 0, %s201
      %s205 = sphi 0, %s204
      %s221 = sphi 0, %s205
      %s227 = sphi 0, %s229
      %s230 = sphi 0, %s227
      %s231 = sphi 0, %s230
      %s247 = sphi 0, %s231
      %s253 = sphi 0, %s255
      %s256 = sphi 0, %s253
      %s257 = sphi 0, %s256
      %s273 = sphi 0, %s257
      %s279 = sphi 0, %s281
      %s282 = sphi 0, %s279
      %s283 = sphi 0, %s282
      %s299 = sphi 0, %s283
      %s305 = sphi 0, %s307
      %s308 = sphi 0, %s305
      %s309 = sphi 0, %s308
      %s325 = sphi 0, %s309
      %s331 = sphi 0, %s333
      %s334 = sphi 0, %s331
      %s335 = sphi 0, %s334
      %s351 = sphi 0, %s335
      %s357 = sphi 0, %s359
      %s360 = sphi 0, %s357
      %s361 = sphi 0, %s360
      %s377 = sphi 0, %s361
      %s383 = sphi 0, %s385
      %s386 = sphi 0, %s383
      %s387 = sphi 0, %s386
      %s403 = sphi 0, %s387
      %s409 = sphi 0, %s411
      %s412 = sphi 0, %s409
      %s413 = sphi 0, %s412
      %s429 = sphi 0, %s413
      %s433 = sphi 0, %s433
      %s435 = sphi 0, %s433
      %s436 = sphi 0, %s435
      %s450 = sphi 0, %s436
      %s454 = sphi 0, %s454
      %s456 = sphi 0, %s454
      %s457 = sphi 0, %s456
      %s471 = sphi 0, %s457
      %s475 = sphi 0, %s475
      %s477 = sphi 0, %s475
      %s478 = sphi 0, %s477
      %s492 = sphi 0, %s478
      %s496 = sphi 0, %s496
      %s498 = sphi 0, %s496
      %s499 = sphi 0, %s498
      %s513 = sphi 0, %s499
      %s517 = sphi 0, %s517
      %s519 = sphi 0, %s517
      %s520 = sphi 0, %s519
      %s534 = sphi 0, %s520
      %s538 = sphi 0, %s538
      %s540 = sphi 0, %s538
      %s541 = sphi 0, %s540
      %s555 = sphi 0, %s541
      %s559 = sphi 0, %s559
      %s561 = sphi 0, %s559
      %s562 = sphi 0, %s561
      %s576 = sphi 0, %s562
    $region4: #{forward.1} parent=1 // loop_header_branch
      %32 = sbr.rel (%p30) target = $region8
    $region5: #{forward.1} parent=1 // loop_body
      %s34 = ssub.s32 %s29, 1
      %s35 = ssub.s32 %s29, 2
      %s36 = sadd.s32 %s29, 1
      %s38 = sadd.s32 %s37, 1
      %p41 = scmp.eq.s32.totalorder %s29, 1
      %p42 = scmp.ne.s32.totalorder %s37, %s39
      %p43 = scmp.eq.s32.totalorder %s29, 0
      %p44 = por %p42, %p43
      %p45 = scmp.ne.s32.totalorder %s37, %s39
      %p46 = scmp.eq.s32.totalorder %s34, 1
      %p47 = por %p45, %p46
      %p48 = scmp.ne.s32.totalorder %s39, %s40
      %p49 = scmp.eq.s32.totalorder %s34, 0
      %p50 = por %p48, %p49
      %p51 = scmp.ne.s32.totalorder %s39, %s40
      %p52 = scmp.eq.s32.totalorder %s35, 1
      %p53 = por %p51, %p52
      %p55 = scmp.ne.s32.totalorder %s40, %s54
      %p56 = scmp.eq.s32.totalorder %s35, 0
      %p57 = por %p55, %p56
      %s59 = sadd.s32 %s58, 1
      %p62 = scmp.eq.s32.totalorder %s29, 1
      %p63 = scmp.ne.s32.totalorder %s58, %s60
      %p64 = scmp.eq.s32.totalorder %s29, 0
      %p65 = por %p63, %p64
      %p66 = scmp.ne.s32.totalorder %s58, %s60
      %p67 = scmp.eq.s32.totalorder %s34, 1
      %p68 = por %p66, %p67
      %p69 = scmp.ne.s32.totalorder %s60, %s61
      %p70 = scmp.eq.s32.totalorder %s34, 0
      %p71 = por %p69, %p70
      %p72 = scmp.ne.s32.totalorder %s60, %s61
      %p73 = scmp.eq.s32.totalorder %s35, 1
      %p74 = por %p72, %p73
      %p76 = scmp.ne.s32.totalorder %s61, %s75
      %p77 = scmp.eq.s32.totalorder %s35, 0
      %p78 = por %p76, %p77
      %s80 = sadd.s32 %s79, 1
      %p83 = scmp.eq.s32.totalorder %s29, 1
      %p84 = scmp.ne.s32.totalorder %s79, %s81
      %p85 = scmp.eq.s32.totalorder %s29, 0
      %p86 = por %p84, %p85
      %p87 = scmp.ne.s32.totalorder %s79, %s81
      %p88 = scmp.eq.s32.totalorder %s34, 1
      %p89 = por %p87, %p88
      %p90 = scmp.ne.s32.totalorder %s81, %s82
      %p91 = scmp.eq.s32.totalorder %s34, 0
      %p92 = por %p90, %p91
      %p93 = scmp.ne.s32.totalorder %s81, %s82
      %p94 = scmp.eq.s32.totalorder %s35, 1
      %p95 = por %p93, %p94
      %p97 = scmp.ne.s32.totalorder %s82, %s96
      %p98 = scmp.eq.s32.totalorder %s35, 0
      %p99 = por %p97, %p98
      %s101 = sadd.s32 %s100, 1
      %p104 = scmp.eq.s32.totalorder %s29, 1
      %p105 = scmp.ne.s32.totalorder %s100, %s102
      %p106 = scmp.eq.s32.totalorder %s29, 0
      %p107 = por %p105, %p106
      %p108 = scmp.ne.s32.totalorder %s100, %s102
      %p109 = scmp.eq.s32.totalorder %s34, 1
      %p110 = por %p108, %p109
      %p111 = scmp.ne.s32.totalorder %s102, %s103
      %p112 = scmp.eq.s32.totalorder %s34, 0
      %p113 = por %p111, %p112
      %p114 = scmp.ne.s32.totalorder %s102, %s103
      %p115 = scmp.eq.s32.totalorder %s35, 1
      %p116 = por %p114, %p115
      %p118 = scmp.ne.s32.totalorder %s103, %s117
      %p119 = scmp.eq.s32.totalorder %s35, 0
      %p120 = por %p118, %p119
      %s121 = ssub.s32 %s29, %s36
      %p122 = scmp.eq.s32.totalorder %s121, 0
      %s124 = sadd.s32 %s123, 1
      %s125 = scalar_select %p122, %s123, %s124
      %p128 = pneg %p122
      %p129 = scmp.eq.s32.totalorder %s29, 1
      %p130 = por %p128, %p129
      %p131 = scmp.ne.s32.totalorder %s123, %s126
      %p132 = scmp.eq.s32.totalorder %s29, 0
      %p133 = por %p131, %p132
      %p134 = scmp.ne.s32.totalorder %s123, %s126
      %p135 = scmp.eq.s32.totalorder %s34, 1
      %p136 = por %p134, %p135
      %p137 = scmp.ne.s32.totalorder %s126, %s127
      %p138 = scmp.eq.s32.totalorder %s34, 0
      %p139 = por %p137, %p138
      %p140 = scmp.ne.s32.totalorder %s126, %s127
      %p141 = scmp.eq.s32.totalorder %s35, 1
      %p142 = por %p140, %p141
      %p144 = scmp.ne.s32.totalorder %s127, %s143
      %p145 = scmp.eq.s32.totalorder %s35, 0
      %p146 = por %p144, %p145
      %s147 = ssub.s32 %s29, %s36
      %p148 = scmp.eq.s32.totalorder %s147, 0
      %s150 = sadd.s32 %s149, 1
      %s151 = scalar_select %p148, %s149, %s150
      %p154 = pneg %p148
      %p155 = scmp.eq.s32.totalorder %s29, 1
      %p156 = por %p154, %p155
      %p157 = scmp.ne.s32.totalorder %s149, %s152
      %p158 = scmp.eq.s32.totalorder %s29, 0
      %p159 = por %p157, %p158
      %p160 = scmp.ne.s32.totalorder %s149, %s152
      %p161 = scmp.eq.s32.totalorder %s34, 1
      %p162 = por %p160, %p161
      %p163 = scmp.ne.s32.totalorder %s152, %s153
      %p164 = scmp.eq.s32.totalorder %s34, 0
      %p165 = por %p163, %p164
      %p166 = scmp.ne.s32.totalorder %s152, %s153
      %p167 = scmp.eq.s32.totalorder %s35, 1
      %p168 = por %p166, %p167
      %p170 = scmp.ne.s32.totalorder %s153, %s169
      %p171 = scmp.eq.s32.totalorder %s35, 0
      %p172 = por %p170, %p171
      %s173 = ssub.s32 %s29, %s36
      %p174 = scmp.eq.s32.totalorder %s173, 0
      %s176 = sadd.s32 %s175, 1
      %s177 = scalar_select %p174, %s175, %s176
      %p180 = pneg %p174
      %p181 = scmp.eq.s32.totalorder %s29, 1
      %p182 = por %p180, %p181
      %p183 = scmp.ne.s32.totalorder %s175, %s178
      %p184 = scmp.eq.s32.totalorder %s29, 0
      %p185 = por %p183, %p184
      %p186 = scmp.ne.s32.totalorder %s175, %s178
      %p187 = scmp.eq.s32.totalorder %s34, 1
      %p188 = por %p186, %p187
      %p189 = scmp.ne.s32.totalorder %s178, %s179
      %p190 = scmp.eq.s32.totalorder %s34, 0
      %p191 = por %p189, %p190
      %p192 = scmp.ne.s32.totalorder %s178, %s179
      %p193 = scmp.eq.s32.totalorder %s35, 1
      %p194 = por %p192, %p193
      %p196 = scmp.ne.s32.totalorder %s179, %s195
      %p197 = scmp.eq.s32.totalorder %s35, 0
      %p198 = por %p196, %p197
      %s199 = ssub.s32 %s29, %s36
      %p200 = scmp.eq.s32.totalorder %s199, 0
      %s202 = sadd.s32 %s201, 1
      %s203 = scalar_select %p200, %s201, %s202
      %p206 = pneg %p200
      %p207 = scmp.eq.s32.totalorder %s29, 1
      %p208 = por %p206, %p207
      %p209 = scmp.ne.s32.totalorder %s201, %s204
      %p210 = scmp.eq.s32.totalorder %s29, 0
      %p211 = por %p209, %p210
      %p212 = scmp.ne.s32.totalorder %s201, %s204
      %p213 = scmp.eq.s32.totalorder %s34, 1
      %p214 = por %p212, %p213
      %p215 = scmp.ne.s32.totalorder %s204, %s205
      %p216 = scmp.eq.s32.totalorder %s34, 0
      %p217 = por %p215, %p216
      %p218 = scmp.ne.s32.totalorder %s204, %s205
      %p219 = scmp.eq.s32.totalorder %s35, 1
      %p220 = por %p218, %p219
      %p222 = scmp.ne.s32.totalorder %s205, %s221
      %p223 = scmp.eq.s32.totalorder %s35, 0
      %p224 = por %p222, %p223
      %s225 = ssub.s32 %s29, %s36
      %p226 = scmp.eq.s32.totalorder %s225, 0
      %s228 = sadd.s32 %s227, 1
      %s229 = scalar_select %p226, %s227, %s228
      %p232 = pneg %p226
      %p233 = scmp.eq.s32.totalorder %s29, 1
      %p234 = por %p232, %p233
      %p235 = scmp.ne.s32.totalorder %s227, %s230
      %p236 = scmp.eq.s32.totalorder %s29, 0
      %p237 = por %p235, %p236
      %p238 = scmp.ne.s32.totalorder %s227, %s230
      %p239 = scmp.eq.s32.totalorder %s34, 1
      %p240 = por %p238, %p239
      %p241 = scmp.ne.s32.totalorder %s230, %s231
      %p242 = scmp.eq.s32.totalorder %s34, 0
      %p243 = por %p241, %p242
      %p244 = scmp.ne.s32.totalorder %s230, %s231
      %p245 = scmp.eq.s32.totalorder %s35, 1
      %p246 = por %p244, %p245
      %p248 = scmp.ne.s32.totalorder %s231, %s247
      %p249 = scmp.eq.s32.totalorder %s35, 0
      %p250 = por %p248, %p249
      %s251 = ssub.s32 %s29, %s36
      %p252 = scmp.eq.s32.totalorder %s251, 0
      %s254 = sadd.s32 %s253, 1
      %s255 = scalar_select %p252, %s253, %s254
      %p258 = pneg %p252
      %p259 = scmp.eq.s32.totalorder %s29, 1
      %p260 = por %p258, %p259
      %p261 = scmp.ne.s32.totalorder %s253, %s256
      %p262 = scmp.eq.s32.totalorder %s29, 0
      %p263 = por %p261, %p262
      %p264 = scmp.ne.s32.totalorder %s253, %s256
      %p265 = scmp.eq.s32.totalorder %s34, 1
      %p266 = por %p264, %p265
      %p267 = scmp.ne.s32.totalorder %s256, %s257
      %p268 = scmp.eq.s32.totalorder %s34, 0
      %p269 = por %p267, %p268
      %p270 = scmp.ne.s32.totalorder %s256, %s257
      %p271 = scmp.eq.s32.totalorder %s35, 1
      %p272 = por %p270, %p271
      %p274 = scmp.ne.s32.totalorder %s257, %s273
      %p275 = scmp.eq.s32.totalorder %s35, 0
      %p276 = por %p274, %p275
      %s277 = ssub.s32 %s29, %s36
      %p278 = scmp.eq.s32.totalorder %s277, 0
      %s280 = sadd.s32 %s279, 1
      %s281 = scalar_select %p278, %s279, %s280
      %p284 = pneg %p278
      %p285 = scmp.eq.s32.totalorder %s29, 1
      %p286 = por %p284, %p285
      %p287 = scmp.ne.s32.totalorder %s279, %s282
      %p288 = scmp.eq.s32.totalorder %s29, 0
      %p289 = por %p287, %p288
      %p290 = scmp.ne.s32.totalorder %s279, %s282
      %p291 = scmp.eq.s32.totalorder %s34, 1
      %p292 = por %p290, %p291
      %p293 = scmp.ne.s32.totalorder %s282, %s283
      %p294 = scmp.eq.s32.totalorder %s34, 0
      %p295 = por %p293, %p294
      %p296 = scmp.ne.s32.totalorder %s282, %s283
      %p297 = scmp.eq.s32.totalorder %s35, 1
      %p298 = por %p296, %p297
      %p300 = scmp.ne.s32.totalorder %s283, %s299
      %p301 = scmp.eq.s32.totalorder %s35, 0
      %p302 = por %p300, %p301
      %s303 = ssub.s32 %s29, %s36
      %p304 = scmp.eq.s32.totalorder %s303, 0
      %s306 = sadd.s32 %s305, 1
      %s307 = scalar_select %p304, %s305, %s306
      %p310 = pneg %p304
      %p311 = scmp.eq.s32.totalorder %s29, 1
      %p312 = por %p310, %p311
      %p313 = scmp.ne.s32.totalorder %s305, %s308
      %p314 = scmp.eq.s32.totalorder %s29, 0
      %p315 = por %p313, %p314
      %p316 = scmp.ne.s32.totalorder %s305, %s308
      %p317 = scmp.eq.s32.totalorder %s34, 1
      %p318 = por %p316, %p317
      %p319 = scmp.ne.s32.totalorder %s308, %s309
      %p320 = scmp.eq.s32.totalorder %s34, 0
      %p321 = por %p319, %p320
      %p322 = scmp.ne.s32.totalorder %s308, %s309
      %p323 = scmp.eq.s32.totalorder %s35, 1
      %p324 = por %p322, %p323
      %p326 = scmp.ne.s32.totalorder %s309, %s325
      %p327 = scmp.eq.s32.totalorder %s35, 0
      %p328 = por %p326, %p327
      %s329 = ssub.s32 %s29, %s36
      %p330 = scmp.eq.s32.totalorder %s329, 0
      %s332 = sadd.s32 %s331, 1
      %s333 = scalar_select %p330, %s331, %s332
      %p336 = pneg %p330
      %p337 = scmp.eq.s32.totalorder %s29, 1
      %p338 = por %p336, %p337
      %p339 = scmp.ne.s32.totalorder %s331, %s334
      %p340 = scmp.eq.s32.totalorder %s29, 0
      %p341 = por %p339, %p340
      %p342 = scmp.ne.s32.totalorder %s331, %s334
      %p343 = scmp.eq.s32.totalorder %s34, 1
      %p344 = por %p342, %p343
      %p345 = scmp.ne.s32.totalorder %s334, %s335
      %p346 = scmp.eq.s32.totalorder %s34, 0
      %p347 = por %p345, %p346
      %p348 = scmp.ne.s32.totalorder %s334, %s335
      %p349 = scmp.eq.s32.totalorder %s35, 1
      %p350 = por %p348, %p349
      %p352 = scmp.ne.s32.totalorder %s335, %s351
      %p353 = scmp.eq.s32.totalorder %s35, 0
      %p354 = por %p352, %p353
      %s355 = ssub.s32 %s29, %s36
      %p356 = scmp.eq.s32.totalorder %s355, 0
      %s358 = sadd.s32 %s357, 1
      %s359 = scalar_select %p356, %s357, %s358
      %p362 = pneg %p356
      %p363 = scmp.eq.s32.totalorder %s29, 1
      %p364 = por %p362, %p363
      %p365 = scmp.ne.s32.totalorder %s357, %s360
      %p366 = scmp.eq.s32.totalorder %s29, 0
      %p367 = por %p365, %p366
      %p368 = scmp.ne.s32.totalorder %s357, %s360
      %p369 = scmp.eq.s32.totalorder %s34, 1
      %p370 = por %p368, %p369
      %p371 = scmp.ne.s32.totalorder %s360, %s361
      %p372 = scmp.eq.s32.totalorder %s34, 0
      %p373 = por %p371, %p372
      %p374 = scmp.ne.s32.totalorder %s360, %s361
      %p375 = scmp.eq.s32.totalorder %s35, 1
      %p376 = por %p374, %p375
      %p378 = scmp.ne.s32.totalorder %s361, %s377
      %p379 = scmp.eq.s32.totalorder %s35, 0
      %p380 = por %p378, %p379
      %s381 = ssub.s32 %s29, %s36
      %p382 = scmp.eq.s32.totalorder %s381, 0
      %s384 = sadd.s32 %s383, 1
      %s385 = scalar_select %p382, %s383, %s384
      %p388 = pneg %p382
      %p389 = scmp.eq.s32.totalorder %s29, 1
      %p390 = por %p388, %p389
      %p391 = scmp.ne.s32.totalorder %s383, %s386
      %p392 = scmp.eq.s32.totalorder %s29, 0
      %p393 = por %p391, %p392
      %p394 = scmp.ne.s32.totalorder %s383, %s386
      %p395 = scmp.eq.s32.totalorder %s34, 1
      %p396 = por %p394, %p395
      %p397 = scmp.ne.s32.totalorder %s386, %s387
      %p398 = scmp.eq.s32.totalorder %s34, 0
      %p399 = por %p397, %p398
      %p400 = scmp.ne.s32.totalorder %s386, %s387
      %p401 = scmp.eq.s32.totalorder %s35, 1
      %p402 = por %p400, %p401
      %p404 = scmp.ne.s32.totalorder %s387, %s403
      %p405 = scmp.eq.s32.totalorder %s35, 0
      %p406 = por %p404, %p405
      %s407 = ssub.s32 %s29, %s36
      %p408 = scmp.eq.s32.totalorder %s407, 0
      %s410 = sadd.s32 %s409, 1
      %s411 = scalar_select %p408, %s409, %s410
      %p414 = pneg %p408
      %p415 = scmp.eq.s32.totalorder %s29, 1
      %p416 = por %p414, %p415
      %p417 = scmp.ne.s32.totalorder %s409, %s412
      %p418 = scmp.eq.s32.totalorder %s29, 0
      %p419 = por %p417, %p418
      %p420 = scmp.ne.s32.totalorder %s409, %s412
      %p421 = scmp.eq.s32.totalorder %s34, 1
      %p422 = por %p420, %p421
      %p423 = scmp.ne.s32.totalorder %s412, %s413
      %p424 = scmp.eq.s32.totalorder %s34, 0
      %p425 = por %p423, %p424
      %p426 = scmp.ne.s32.totalorder %s412, %s413
      %p427 = scmp.eq.s32.totalorder %s35, 1
      %p428 = por %p426, %p427
      %p430 = scmp.ne.s32.totalorder %s413, %s429
      %p431 = scmp.eq.s32.totalorder %s35, 0
      %p432 = por %p430, %p431
      %s434 = sadd.s32 %s433, 1
      %p437 = scmp.eq.s32.totalorder %s29, 1
      %p438 = scmp.ne.s32.totalorder %s433, %s435
      %p439 = scmp.eq.s32.totalorder %s29, 0
      %p440 = por %p438, %p439
      %p441 = scmp.ne.s32.totalorder %s433, %s435
      %p442 = scmp.eq.s32.totalorder %s34, 1
      %p443 = por %p441, %p442
      %p444 = scmp.ne.s32.totalorder %s435, %s436
      %p445 = scmp.eq.s32.totalorder %s34, 0
      %p446 = por %p444, %p445
      %p447 = scmp.ne.s32.totalorder %s435, %s436
      %p448 = scmp.eq.s32.totalorder %s35, 1
      %p449 = por %p447, %p448
      %p451 = scmp.ne.s32.totalorder %s436, %s450
      %p452 = scmp.eq.s32.totalorder %s35, 0
      %p453 = por %p451, %p452
      %s455 = sadd.s32 %s454, 1
      %p458 = scmp.eq.s32.totalorder %s29, 1
      %p459 = scmp.ne.s32.totalorder %s454, %s456
      %p460 = scmp.eq.s32.totalorder %s29, 0
      %p461 = por %p459, %p460
      %p462 = scmp.ne.s32.totalorder %s454, %s456
      %p463 = scmp.eq.s32.totalorder %s34, 1
      %p464 = por %p462, %p463
      %p465 = scmp.ne.s32.totalorder %s456, %s457
      %p466 = scmp.eq.s32.totalorder %s34, 0
      %p467 = por %p465, %p466
      %p468 = scmp.ne.s32.totalorder %s456, %s457
      %p469 = scmp.eq.s32.totalorder %s35, 1
      %p470 = por %p468, %p469
      %p472 = scmp.ne.s32.totalorder %s457, %s471
      %p473 = scmp.eq.s32.totalorder %s35, 0
      %p474 = por %p472, %p473
      %s476 = sadd.s32 %s475, 1
      %p479 = scmp.eq.s32.totalorder %s29, 1
      %p480 = scmp.ne.s32.totalorder %s475, %s477
      %p481 = scmp.eq.s32.totalorder %s29, 0
      %p482 = por %p480, %p481
      %p483 = scmp.ne.s32.totalorder %s475, %s477
      %p484 = scmp.eq.s32.totalorder %s34, 1
      %p485 = por %p483, %p484
      %p486 = scmp.ne.s32.totalorder %s477, %s478
      %p487 = scmp.eq.s32.totalorder %s34, 0
      %p488 = por %p486, %p487
      %p489 = scmp.ne.s32.totalorder %s477, %s478
      %p490 = scmp.eq.s32.totalorder %s35, 1
      %p491 = por %p489, %p490
      %p493 = scmp.ne.s32.totalorder %s478, %s492
      %p494 = scmp.eq.s32.totalorder %s35, 0
      %p495 = por %p493, %p494
      %s497 = sadd.s32 %s496, 1
      %p500 = scmp.eq.s32.totalorder %s29, 1
      %p501 = scmp.ne.s32.totalorder %s496, %s498
      %p502 = scmp.eq.s32.totalorder %s29, 0
      %p503 = por %p501, %p502
      %p504 = scmp.ne.s32.totalorder %s496, %s498
      %p505 = scmp.eq.s32.totalorder %s34, 1
      %p506 = por %p504, %p505
      %p507 = scmp.ne.s32.totalorder %s498, %s499
      %p508 = scmp.eq.s32.totalorder %s34, 0
      %p509 = por %p507, %p508
      %p510 = scmp.ne.s32.totalorder %s498, %s499
      %p511 = scmp.eq.s32.totalorder %s35, 1
      %p512 = por %p510, %p511
      %p514 = scmp.ne.s32.totalorder %s499, %s513
      %p515 = scmp.eq.s32.totalorder %s35, 0
      %p516 = por %p514, %p515
      %s518 = sadd.s32 %s517, 1
      %p521 = scmp.eq.s32.totalorder %s29, 1
      %p522 = scmp.ne.s32.totalorder %s517, %s519
      %p523 = scmp.eq.s32.totalorder %s29, 0
      %p524 = por %p522, %p523
      %p525 = scmp.ne.s32.totalorder %s517, %s519
      %p526 = scmp.eq.s32.totalorder %s34, 1
      %p527 = por %p525, %p526
      %p528 = scmp.ne.s32.totalorder %s519, %s520
      %p529 = scmp.eq.s32.totalorder %s34, 0
      %p530 = por %p528, %p529
      %p531 = scmp.ne.s32.totalorder %s519, %s520
      %p532 = scmp.eq.s32.totalorder %s35, 1
      %p533 = por %p531, %p532
      %p535 = scmp.ne.s32.totalorder %s520, %s534
      %p536 = scmp.eq.s32.totalorder %s35, 0
      %p537 = por %p535, %p536
      %s539 = sadd.s32 %s538, 1
      %p542 = scmp.eq.s32.totalorder %s29, 1
      %p543 = scmp.ne.s32.totalorder %s538, %s540
      %p544 = scmp.eq.s32.totalorder %s29, 0
      %p545 = por %p543, %p544
      %p546 = scmp.ne.s32.totalorder %s538, %s540
      %p547 = scmp.eq.s32.totalorder %s34, 1
      %p548 = por %p546, %p547
      %p549 = scmp.ne.s32.totalorder %s540, %s541
      %p550 = scmp.eq.s32.totalorder %s34, 0
      %p551 = por %p549, %p550
      %p552 = scmp.ne.s32.totalorder %s540, %s541
      %p553 = scmp.eq.s32.totalorder %s35, 1
      %p554 = por %p552, %p553
      %p556 = scmp.ne.s32.totalorder %s541, %s555
      %p557 = scmp.eq.s32.totalorder %s35, 0
      %p558 = por %p556, %p557
      %s560 = sadd.s32 %s559, 1
      %p563 = scmp.eq.s32.totalorder %s29, 1
      %p564 = scmp.ne.s32.totalorder %s559, %s561
      %p565 = scmp.eq.s32.totalorder %s29, 0
      %p566 = por %p564, %p565
      %p567 = scmp.ne.s32.totalorder %s559, %s561
      %p568 = scmp.eq.s32.totalorder %s34, 1
      %p569 = por %p567, %p568
      %p570 = scmp.ne.s32.totalorder %s561, %s562
      %p571 = scmp.eq.s32.totalorder %s34, 0
      %p572 = por %p570, %p571
      %p573 = scmp.ne.s32.totalorder %s561, %s562
      %p574 = scmp.eq.s32.totalorder %s35, 1
      %p575 = por %p573, %p574
      %p577 = scmp.ne.s32.totalorder %s562, %s576
      %p578 = scmp.eq.s32.totalorder %s35, 0
      %p579 = por %p577, %p578
      %p580 = scmp.le.s32.totalorder 1, %s29
      %p581 = scmp.lt.s32.totalorder %s29, 3
      %p582 = pnand %p580, %p581
      %p583 = pneg %p582
      // Predicated region
      $region9: #{forward.1} parent=5 // pred_check
        _
      $region10: #{forward.1} parent=5 // pred_check_branch
        %585 = sbr.rel (%p582) target = $region12
      $region11: #{forward.1} parent=5 // pred_region
        %s586 = ssub.s32 %s29, 1
        // Predicated region
        $region13: #{forward.1} parent=11 // pred_check
          %p587 = pneg %p50
        $region14: #{forward.1} parent=11 // pred_check_branch
          %589 = sbr.rel (%p587) target = $region16
        $region15: #{forward.1} parent=11 // pred_region
          _
        $region16: #{forward.1} parent=11 // pred_fallthru
          _
        // Predicated region
        $region17: #{forward.1} parent=11 // pred_check
          %p590 = pneg %p71
        $region18: #{forward.1} parent=11 // pred_check_branch
          %592 = sbr.rel (%p590) target = $region20
        $region19: #{forward.1} parent=11 // pred_region
          _
        $region20: #{forward.1} parent=11 // pred_fallthru
          _
        // Predicated region
        $region21: #{forward.1} parent=11 // pred_check
          %p593 = pneg %p92
        $region22: #{forward.1} parent=11 // pred_check_branch
          %595 = sbr.rel (%p593) target = $region24
        $region23: #{forward.1} parent=11 // pred_region
          _
        $region24: #{forward.1} parent=11 // pred_fallthru
          _
        // Predicated region
        $region25: #{forward.1} parent=11 // pred_check
          %p596 = pneg %p113
        $region26: #{forward.1} parent=11 // pred_check_branch
          %598 = sbr.rel (%p596) target = $region28
        $region27: #{forward.1} parent=11 // pred_region
          _
        $region28: #{forward.1} parent=11 // pred_fallthru
          _
        // Predicated region
        $region29: #{forward.1} parent=11 // pred_check
          %p599 = pneg %p446
        $region30: #{forward.1} parent=11 // pred_check_branch
          %601 = sbr.rel (%p599) target = $region32
        $region31: #{forward.1} parent=11 // pred_region
          _
        $region32: #{forward.1} parent=11 // pred_fallthru
          _
        // Predicated region
        $region33: #{forward.1} parent=11 // pred_check
          %p602 = pneg %p467
        $region34: #{forward.1} parent=11 // pred_check_branch
          %604 = sbr.rel (%p602) target = $region36
        $region35: #{forward.1} parent=11 // pred_region
          _
        $region36: #{forward.1} parent=11 // pred_fallthru
          _
        // Predicated region
        $region37: #{forward.1} parent=11 // pred_check
          %p605 = pneg %p488
        $region38: #{forward.1} parent=11 // pred_check_branch
          %607 = sbr.rel (%p605) target = $region40
        $region39: #{forward.1} parent=11 // pred_region
          _
        $region40: #{forward.1} parent=11 // pred_fallthru
          _
        // Predicated region
        $region41: #{forward.1} parent=11 // pred_check
          %p608 = pneg %p509
        $region42: #{forward.1} parent=11 // pred_check_branch
          %610 = sbr.rel (%p608) target = $region44
        $region43: #{forward.1} parent=11 // pred_region
          _
        $region44: #{forward.1} parent=11 // pred_fallthru
          _
        // Predicated region
        $region45: #{forward.1} parent=11 // pred_check
          %p611 = pneg %p530
        $region46: #{forward.1} parent=11 // pred_check_branch
          %613 = sbr.rel (%p611) target = $region48
        $region47: #{forward.1} parent=11 // pred_region
          _
        $region48: #{forward.1} parent=11 // pred_fallthru
          _
        // Predicated region
        $region49: #{forward.1} parent=11 // pred_check
          %p614 = pneg %p551
        $region50: #{forward.1} parent=11 // pred_check_branch
          %616 = sbr.rel (%p614) target = $region52
        $region51: #{forward.1} parent=11 // pred_region
          _
        $region52: #{forward.1} parent=11 // pred_fallthru
          _
      $region12: #{forward.1} parent=5 // pred_fallthru
        _
      %p617 = scmp.lt.s32.totalorder %s29, 2
      // Predicated region
      $region53: #{forward.1} parent=5 // pred_check
        %p618 = pneg %p617
      $region54: #{forward.1} parent=5 // pred_check_branch
        %620 = sbr.rel (%p618) target = $region56
      $region55: #{forward.1} parent=5 // pred_region
        // Predicated region
        $region57: #{forward.1} parent=55 // pred_check
          %p621 = pneg %p133
        $region58: #{forward.1} parent=55 // pred_check_branch
          %623 = sbr.rel (%p621) target = $region60
        $region59: #{forward.1} parent=55 // pred_region
          %p624 = scmp.lt.s32.totalorder %s29, 1
          %s625 = scalar_select %p624, %s29, 1
          %s626 = smul.addr %s625, 4
          %s627 = smul.addr %s626, 8
          %s628 = scalar_lea.vmem %s4, %s627
        $region60: #{forward.1} parent=55 // pred_fallthru
          _
        // Predicated region
        $region61: #{forward.1} parent=55 // pred_check
          %p629 = pneg %p159
        $region62: #{forward.1} parent=55 // pred_check_branch
          %631 = sbr.rel (%p629) target = $region64
        $region63: #{forward.1} parent=55 // pred_region
          %p632 = scmp.lt.s32.totalorder %s29, 1
          %s633 = scalar_select %p632, %s29, 1
          %s634 = scalar_lea.vmem %s5, %s633
        $region64: #{forward.1} parent=55 // pred_fallthru
          _
        // Predicated region
        $region65: #{forward.1} parent=55 // pred_check
          %p635 = pneg %p185
        $region66: #{forward.1} parent=55 // pred_check_branch
          %637 = sbr.rel (%p635) target = $region68
        $region67: #{forward.1} parent=55 // pred_region
          %p638 = scmp.lt.s32.totalorder %s29, 1
          %s639 = scalar_select %p638, %s29, 1
          %s640 = smul.addr %s639, 4
          %s641 = smul.addr %s640, 8
          %s642 = scalar_lea.vmem %s6, %s641
        $region68: #{forward.1} parent=55 // pred_fallthru
          _
        // Predicated region
        $region69: #{forward.1} parent=55 // pred_check
          %p643 = pneg %p211
        $region70: #{forward.1} parent=55 // pred_check_branch
          %645 = sbr.rel (%p643) target = $region72
        $region71: #{forward.1} parent=55 // pred_region
          %p646 = scmp.lt.s32.totalorder %s29, 1
          %s647 = scalar_select %p646, %s29, 1
          %s648 = scalar_lea.vmem %s7, %s647
        $region72: #{forward.1} parent=55 // pred_fallthru
          _
        // Predicated region
        $region73: #{forward.1} parent=55 // pred_check
          %p649 = pneg %p237
        $region74: #{forward.1} parent=55 // pred_check_branch
          %651 = sbr.rel (%p649) target = $region76
        $region75: #{forward.1} parent=55 // pred_region
          %p652 = scmp.lt.s32.totalorder %s29, 1
          %s653 = scalar_select %p652, %s29, 1
          %s654 = scalar_lea.vmem %s8, %s653
        $region76: #{forward.1} parent=55 // pred_fallthru
          _
        // Predicated region
        $region77: #{forward.1} parent=55 // pred_check
          %p655 = pneg %p263
        $region78: #{forward.1} parent=55 // pred_check_branch
          %657 = sbr.rel (%p655) target = $region80
        $region79: #{forward.1} parent=55 // pred_region
          %p658 = scmp.lt.s32.totalorder %s29, 1
          %s659 = scalar_select %p658, %s29, 1
          %s660 = scalar_lea.vmem %s9, %s659
        $region80: #{forward.1} parent=55 // pred_fallthru
          _
        // Predicated region
        $region81: #{forward.1} parent=55 // pred_check
          %p661 = pneg %p289
        $region82: #{forward.1} parent=55 // pred_check_branch
          %663 = sbr.rel (%p661) target = $region84
        $region83: #{forward.1} parent=55 // pred_region
          %p664 = scmp.lt.s32.totalorder %s29, 1
          %s665 = scalar_select %p664, %s29, 1
          %s666 = smul.addr %s665, 4
          %s667 = smul.addr %s666, 8
          %s668 = scalar_lea.vmem %s10, %s667
        $region84: #{forward.1} parent=55 // pred_fallthru
          _
        // Predicated region
        $region85: #{forward.1} parent=55 // pred_check
          %p669 = pneg %p315
        $region86: #{forward.1} parent=55 // pred_check_branch
          %671 = sbr.rel (%p669) target = $region88
        $region87: #{forward.1} parent=55 // pred_region
          %p672 = scmp.lt.s32.totalorder %s29, 1
          %s673 = scalar_select %p672, %s29, 1
          %s674 = scalar_lea.vmem %s11, %s673
        $region88: #{forward.1} parent=55 // pred_fallthru
          _
        // Predicated region
        $region89: #{forward.1} parent=55 // pred_check
          %p675 = pneg %p341
        $region90: #{forward.1} parent=55 // pred_check_branch
          %677 = sbr.rel (%p675) target = $region92
        $region91: #{forward.1} parent=55 // pred_region
          %p678 = scmp.lt.s32.totalorder %s29, 1
          %s679 = scalar_select %p678, %s29, 1
          %s680 = smul.addr %s679, 8
          %s681 = smul.addr %s680, 8
          %s682 = scalar_lea.vmem %s12, %s681
        $region92: #{forward.1} parent=55 // pred_fallthru
          _
        // Predicated region
        $region93: #{forward.1} parent=55 // pred_check
          %p683 = pneg %p367
        $region94: #{forward.1} parent=55 // pred_check_branch
          %685 = sbr.rel (%p683) target = $region96
        $region95: #{forward.1} parent=55 // pred_region
          %p686 = scmp.lt.s32.totalorder %s29, 1
          %s687 = scalar_select %p686, %s29, 1
          %s688 = scalar_lea.vmem %s13, %s687
        $region96: #{forward.1} parent=55 // pred_fallthru
          _
        // Predicated region
        $region97: #{forward.1} parent=55 // pred_check
          %p689 = pneg %p393
        $region98: #{forward.1} parent=55 // pred_check_branch
          %691 = sbr.rel (%p689) target = $region100
        $region99: #{forward.1} parent=55 // pred_region
          %p692 = scmp.lt.s32.totalorder %s29, 1
          %s693 = scalar_select %p692, %s29, 1
          %s694 = scalar_lea.vmem %s14, %s693
        $region100: #{forward.1} parent=55 // pred_fallthru
          _
        // Predicated region
        $region101: #{forward.1} parent=55 // pred_check
          %p695 = pneg %p419
        $region102: #{forward.1} parent=55 // pred_check_branch
          %697 = sbr.rel (%p695) target = $region104
        $region103: #{forward.1} parent=55 // pred_region
          %p698 = scmp.lt.s32.totalorder %s29, 1
          %s699 = scalar_select %p698, %s29, 1
          %s700 = scalar_lea.vmem %s15, %s699
        $region104: #{forward.1} parent=55 // pred_fallthru
          _
      $region56: #{forward.1} parent=5 // pred_fallthru
        _
      %p701 = scmp.le.s32.totalorder 1, %s29
      %p702 = scmp.lt.s32.totalorder %s29, 3
      %p703 = pnand %p701, %p702
      %p704 = pneg %p703
      // Predicated region
      $region105: #{forward.1} parent=5 // pred_check
        _
      $region106: #{forward.1} parent=5 // pred_check_branch
        %706 = sbr.rel (%p703) target = $region108
      $region107: #{forward.1} parent=5 // pred_region
        %s707 = ssub.s32 %s29, 1
        %p708 = pneg %p50
        %p709 = pneg %p47
        %p710 = pneg %p71
        %p711 = pneg %p68
        %p712 = pneg %p92
        %p713 = pneg %p89
        %p714 = pneg %p113
        %p715 = pneg %p110
        %p716 = scmp.lt.s32.totalorder %s34, 1
        %s717 = scalar_select %p716, %s34, 1
        %s718 = smul.addr %s717, 4
        %s719 = smul.addr %s718, 8
        %s720 = scalar_lea.vmem %s4, %s719
        %p721 = pneg %p139
        %p722 = pneg %p136
        %p723 = scmp.lt.s32.totalorder %s34, 1
        %s724 = scalar_select %p723, %s34, 1
        %s725 = scalar_lea.vmem %s5, %s724
        %p726 = pneg %p165
        %p727 = pneg %p162
        %p728 = scmp.lt.s32.totalorder %s34, 1
        %s729 = scalar_select %p728, %s34, 1
        %s730 = smul.addr %s729, 4
        %s731 = smul.addr %s730, 8
        %s732 = scalar_lea.vmem %s6, %s731
        %p733 = pneg %p191
        %p734 = pneg %p188
        %p735 = scmp.lt.s32.totalorder %s34, 1
        %s736 = scalar_select %p735, %s34, 1
        %s737 = scalar_lea.vmem %s7, %s736
        %p738 = pneg %p217
        %p739 = pneg %p214
        %p740 = scmp.lt.s32.totalorder %s34, 1
        %s741 = scalar_select %p740, %s34, 1
        %s742 = scalar_lea.vmem %s8, %s741
        %p743 = pneg %p243
        %p744 = pneg %p240
        %p745 = scmp.lt.s32.totalorder %s34, 1
        %s746 = scalar_select %p745, %s34, 1
        %s747 = scalar_lea.vmem %s9, %s746
        %p748 = pneg %p269
        %p749 = pneg %p266
        %p750 = scmp.lt.s32.totalorder %s34, 1
        %s751 = scalar_select %p750, %s34, 1
        %s752 = smul.addr %s751, 4
        %s753 = smul.addr %s752, 8
        %s754 = scalar_lea.vmem %s10, %s753
        %p755 = pneg %p295
        %p756 = pneg %p292
        %p757 = scmp.lt.s32.totalorder %s34, 1
        %s758 = scalar_select %p757, %s34, 1
        %s759 = scalar_lea.vmem %s11, %s758
        %p760 = pneg %p321
        %p761 = pneg %p318
        %p762 = scmp.lt.s32.totalorder %s34, 1
        %s763 = scalar_select %p762, %s34, 1
        %s764 = smul.addr %s763, 8
        %s765 = smul.addr %s764, 8
        %s766 = scalar_lea.vmem %s12, %s765
        %p767 = pneg %p347
        %p768 = pneg %p344
        %p769 = scmp.lt.s32.totalorder %s34, 1
        %s770 = scalar_select %p769, %s34, 1
        %s771 = scalar_lea.vmem %s13, %s770
        %p772 = pneg %p373
        %p773 = pneg %p370
        %p774 = scmp.lt.s32.totalorder %s34, 1
        %s775 = scalar_select %p774, %s34, 1
        %s776 = scalar_lea.vmem %s14, %s775
        %p777 = pneg %p399
        %p778 = pneg %p396
        %p779 = scmp.lt.s32.totalorder %s34, 1
        %s780 = scalar_select %p779, %s34, 1
        %s781 = scalar_lea.vmem %s15, %s780
        %p782 = pneg %p425
        %p783 = pneg %p422
        %p784 = pneg %p446
        %p785 = pneg %p443
        %p786 = pneg %p467
        %p787 = pneg %p464
        %p788 = pneg %p488
        %p789 = pneg %p485
        %p790 = pneg %p509
        %p791 = pneg %p506
        %p792 = pneg %p530
        %p793 = pneg %p527
        %p794 = pneg %p551
        %p795 = pneg %p548
        %p796 = pneg %p572
        %p797 = pneg %p569
        %p798 = scmp.lt.s32.totalorder %s34, 1
        %s799 = scalar_select %p798, %s34, 1
        %s800 = smul.addr %s799, 4
        %s801 = smul.addr %s800, 8
        %s802 = scalar_lea.vmem %s4, %s801
        %p803 = scmp.lt.s32.totalorder %s34, 1
        %s804 = scalar_select %p803, %s34, 1
        %s805 = scalar_lea.vmem %s5, %s804
        %p806 = scmp.lt.s32.totalorder %s34, 1
        %s807 = scalar_select %p806, %s34, 1
        %s808 = smul.addr %s807, 4
        %s809 = smul.addr %s808, 8
        %s810 = scalar_lea.vmem %s6, %s809
        %p811 = scmp.lt.s32.totalorder %s34, 1
        %s812 = scalar_select %p811, %s34, 1
        %s813 = scalar_lea.vmem %s7, %s812
        %p814 = scmp.lt.s32.totalorder %s34, 1
        %s815 = scalar_select %p814, %s34, 1
        %s816 = scalar_lea.vmem %s8, %s815
        %p817 = scmp.lt.s32.totalorder %s34, 1
        %s818 = scalar_select %p817, %s34, 1
        %s819 = scalar_lea.vmem %s9, %s818
        %p820 = scmp.lt.s32.totalorder %s34, 1
        %s821 = scalar_select %p820, %s34, 1
        %s822 = smul.addr %s821, 4
        %s823 = smul.addr %s822, 8
        %s824 = scalar_lea.vmem %s10, %s823
        %p825 = scmp.lt.s32.totalorder %s34, 1
        %s826 = scalar_select %p825, %s34, 1
        %s827 = scalar_lea.vmem %s11, %s826
        %p828 = scmp.lt.s32.totalorder %s34, 1
        %s829 = scalar_select %p828, %s34, 1
        %s830 = smul.addr %s829, 8
        %s831 = smul.addr %s830, 8
        %s832 = scalar_lea.vmem %s12, %s831
        %p833 = scmp.lt.s32.totalorder %s34, 1
        %s834 = scalar_select %p833, %s34, 1
        %s835 = scalar_lea.vmem %s13, %s834
        %p836 = scmp.lt.s32.totalorder %s34, 1
        %s837 = scalar_select %p836, %s34, 1
        %s838 = scalar_lea.vmem %s14, %s837
        %p839 = scmp.lt.s32.totalorder %s34, 1
        %s840 = scalar_select %p839, %s34, 1
        %s841 = scalar_lea.vmem %s15, %s840
        %p842 = scmp.eq.s32.totalorder %s34, 0
        // Predicated region
        $region109: #{forward.1} parent=107 // pred_check
          %p843 = pneg %p842
        $region110: #{forward.1} parent=107 // pred_check_branch
          %845 = sbr.rel (%p843) target = $region112
        $region111: #{forward.1} parent=107 // pred_region
          %v846 = vld [vmem:[%s0] sm:$0xff]
          %v847 = vld [vmem:[%s0 + $0x8] sm:$0xff]
          %v848 = vld [vmem:[%s1] sm:$0x1]
          %v849 = vld [vmem:[%s2] sm:$0x1]
          %vm850 = vcmask 261120
          %v851 = vsel %vm850, %v846, 0.0
          %852 = vadd.xlane.f32.xlu0 %v851
          %v853 = vpop.xlane.xlu0 %852
          %v854 = vsel %vm850, %v847, 0.0
          %855 = vadd.xlane.f32.xlu0 %v854
          %v856 = vpop.xlane.xlu0 %855
          %v857 = vrcp.pop 32.0
          %v858 = vmul.f32 %v853, %v857
          %v859 = vmul.f32 %v856, %v857
          %v860 = vsub.f32 %v846, %v858
          %v861 = vsub.f32 %v847, %v859
          %v862 = vmul.f32 %v860, %v860
          %v863 = vmul.f32 %v861, %v861
          %v864 = vsel %vm850, %v862, 0.0
          %865 = vadd.xlane.f32.xlu0 %v864
          %v866 = vpop.xlane.xlu0 %865
          %v867 = vsel %vm850, %v863, 0.0
          %868 = vadd.xlane.f32.xlu0 %v867
          %v869 = vpop.xlane.xlu0 %868
          %v870 = vmul.f32 %v866, %v857
          %v871 = vmul.f32 %v869, %v857
          %v872 = vadd.f32 %v870, 1e-12
          %v873 = vadd.f32 %v871, 1e-12
          %v874 = vrsqrt.pop %v872
          %v875 = vrsqrt.pop %v873
          %v876 = vmul.f32 %v860, %v874
          %v877 = vmul.f32 %v861, %v875
          %v879 = vlaneseq
          %v880 = vshrl.u32 %v879, 7
          %v881 = vsub.s32 0, %v880
          %v882 = vrot.slane %v848, %v881
          %v884 = vmul.f32 %v876, %v882
          %v885 = vmul.f32 %v877, %v882
          %v887 = vlaneseq
          %v888 = vshrl.u32 %v887, 7
          %v889 = vsub.s32 0, %v888
          %v890 = vrot.slane %v849, %v889
          %v892 = vadd.f32 %v884, %v890
          %v893 = vadd.f32 %v885, %v890
          %894 = vst.msk [vmem:[#allocation2] sm:$0xff] %vm850, %v892
          %895 = vst.msk [vmem:[#allocation2 + $0x8] sm:$0xff] %vm850, %v893
        $region112: #{forward.1} parent=107 // pred_fallthru
          _
        %v896 = vld [vmem:[#allocation2] sm:$0xff]
        %v897 = vld [vmem:[#allocation2 + $0x8] sm:$0xff]
        %v898 = vld [vmem:[%s802] sm:$0xff]
        %v899 = vld [vmem:[%s802 + $0x8] sm:$0xff]
        %v900 = vld [vmem:[%s802 + $0x10] sm:$0xff]
        %v901 = vld [vmem:[%s802 + $0x18] sm:$0xff]
        %v902 = vld [vmem:[%s805] sm:$0x1]
        %v904 = vlaneseq
        %v905 = vshrl.u32 %v904, 7
        %v906 = vsub.s32 0, %v905
        %v907 = vrot.slane %v902, %v906
        %vm909 = vcmask 261120
        %v911 = vsel %vm909, %v896, 0
        %v914 = vsel %vm909, %v897, 0
        %916 = vmatprep.subr.mxu0 0.0
        %917 = vmatpush1.msra.mxu0 0.0
        %918 = vmatprep.subr.mxu0 0.0
        %919 = vmatpush1.msra.mxu0 0.0
        %920 = vmatprep.subr.mxu0 0.0
        %921 = vmatpush1.msra.mxu0 0.0
        %922 = vmatprep.subr.mxu0 0.0
        %923 = vmatpush1.msra.mxu0 0.0
        %924 = vmatprep.subr.mxu0 0.0
        %925 = vmatpush1.msra.mxu0 0.0
        %926 = vmatprep.subr.mxu0 0.0
        %927 = vmatpush1.msra.mxu0 0.0
        %928 = vmatprep.subr.mxu0 0.0
        %929 = vmatpush1.msra.mxu0 0.0
        %930 = vmatprep.subr.mxu0 0.0
        %931 = vmatpush1.msra.mxu0 0.0
        %932 = vmatprep.subr.mxu0 0.0
        %933 = vmatpush1.msra.mxu0 0.0
        %934 = vmatprep.subr.mxu0 0.0
        %935 = vmatpush1.msra.mxu0 0.0
        %936 = vmatprep.subr.mxu0 0.0
        %937 = vmatpush1.msra.mxu0 0.0
        %938 = vmatprep.subr.mxu0 0.0
        %939 = vmatpush1.msra.mxu0 0.0
        %940 = vmatprep.subr.mxu0 0.0
        %941 = vmatpush1.msra.mxu0 %v901
        %942 = vmatprep.subr.mxu0 0.0
        %943 = vmatpush1.msra.mxu0 %v900
        %944 = vmatprep.subr.mxu0 0.0
        %945 = vmatpush1.msra.mxu0 %v899
        %946 = vmatprep.subr.mxu0 0.0
        %947 = vmatpush1.msra.mxu0 %v898
        %948 = vmatprep.subr.mxu0 0.0
        %949 = vmatpush2.msra.mxu0 0.0
        %950 = vmatprep.subr.mxu0 0.0
        %951 = vmatpush2.msra.mxu0 0.0
        %952 = vmatprep.subr.mxu0 0.0
        %953 = vmatpush2.msra.mxu0 0.0
        %954 = vmatprep.subr.mxu0 0.0
        %955 = vmatpush2.msra.mxu0 0.0
        %956 = vmatprep.subr.mxu0 0.0
        %957 = vmatpush2.msra.mxu0 0.0
        %958 = vmatprep.subr.mxu0 0.0
        %959 = vmatpush2.msra.mxu0 0.0
        %960 = vmatprep.subr.mxu0 0.0
        %961 = vmatpush2.msra.mxu0 0.0
        %962 = vmatprep.subr.mxu0 0.0
        %963 = vmatpush2.msra.mxu0 0.0
        %964 = vmatprep.subr.mxu0 0.0
        %965 = vmatpush2.msra.mxu0 0.0
        %966 = vmatprep.subr.mxu0 0.0
        %967 = vmatpush2.msra.mxu0 0.0
        %968 = vmatprep.subr.mxu0 0.0
        %969 = vmatpush2.msra.mxu0 0.0
        %970 = vmatprep.subr.mxu0 0.0
        %971 = vmatpush2.msra.mxu0 0.0
        %972 = vmatprep.subr.mxu0 0.0
        %973 = vmatpush2.msra.mxu0 0.0
        %974 = vmatprep.subr.mxu0 0.0
        %975 = vmatpush2.msra.mxu0 0.0
        %976 = vmatprep.subr.mxu0 0.0
        %977 = vmatpush2.msra.mxu0 0.0
        %978 = vmatprep.subr.mxu0 0.0
        %979 = vmatpush2.msra.mxu0 0.0
        %980 = vmatprep.mubr.f32.mxu0 0.0
        %981 = vmatmul.mubr.f32.gmra.mxu0 %v911
        %v982 = vpop.f32.mrf.mxu0
        %v983 = vadd.f32 %v907, %v982
        %v984 = vpop.f32.mrf.mxu0
        %985 = vmatprep.mubr.f32.mxu0 0.0
        %986 = vmatmul.mubr.f32.gmra.mxu0 %v914
        %v987 = vpop.f32.mrf.mxu0
        %v988 = vadd.f32 %v907, %v987
        %v989 = vpop.f32.mrf.mxu0
        %990 = vdwg.mxu0
        %v991 = vld [vmem:[%s3] sm:$0x3]
        %993 = vrot.lane.b32.xlu0 %v983, 96
        %v994 = vpop.permute.xlu0 %993
        %vm995 = vcmask 130048
        %v996 = vsel %vm995, %v983, 0
        %v998 = vsel %vm995, %v994, 0
        %1000 = vmatprep.subr.mxu0 0.0
        %1001 = vmatpush1.xpose.msra.mxu0 0.0
        %1002 = vmatprep.subr.mxu0 0.0
        %1003 = vmatpush1.xpose.msra.mxu0 0.0
        %1004 = vmatprep.subr.mxu0 0.0
        %1005 = vmatpush1.xpose.msra.mxu0 0.0
        %1006 = vmatprep.subr.mxu0 0.0
        %1007 = vmatpush1.xpose.msra.mxu0 0.0
        %1008 = vmatprep.subr.mxu0 0.0
        %1009 = vmatpush1.xpose.msra.mxu0 0.0
        %1010 = vmatprep.subr.mxu0 0.0
        %1011 = vmatpush1.xpose.msra.mxu0 0.0
        %1012 = vmatprep.subr.mxu0 0.0
        %1013 = vmatpush1.xpose.msra.mxu0 0.0
        %1014 = vmatprep.subr.mxu0 0.0
        %1015 = vmatpush1.xpose.msra.mxu0 0.0
        %1016 = vmatprep.subr.mxu0 0.0
        %1017 = vmatpush1.xpose.msra.mxu0 0.0
        %1018 = vmatprep.subr.mxu0 0.0
        %1019 = vmatpush1.xpose.msra.mxu0 0.0
        %1020 = vmatprep.subr.mxu0 0.0
        %1021 = vmatpush1.xpose.msra.mxu0 0.0
        %1022 = vmatprep.subr.mxu0 0.0
        %1023 = vmatpush1.xpose.msra.mxu0 0.0
        %1024 = vmatprep.subr.mxu0 0.0
        %1025 = vmatpush1.xpose.msra.mxu0 0.0
        %1026 = vmatprep.subr.mxu0 0.0
        %1027 = vmatpush1.xpose.msra.mxu0 0.0
        %1028 = vmatprep.subr.mxu0 0.0
        %1029 = vmatpush1.xpose.msra.mxu0 0.0
        %1030 = vmatprep.subr.mxu0 0.0
        %1031 = vmatpush1.xpose.msra.mxu0 %v998
        %1032 = vmatprep.subr.mxu0 0.0
        %1033 = vmatpush2.xpose.msra.mxu0 0.0
        %1034 = vmatprep.subr.mxu0 0.0
        %1035 = vmatpush2.xpose.msra.mxu0 0.0
        %1036 = vmatprep.subr.mxu0 0.0
        %1037 = vmatpush2.xpose.msra.mxu0 0.0
        %1038 = vmatprep.subr.mxu0 0.0
        %1039 = vmatpush2.xpose.msra.mxu0 0.0
        %1040 = vmatprep.subr.mxu0 0.0
        %1041 = vmatpush2.xpose.msra.mxu0 0.0
        %1042 = vmatprep.subr.mxu0 0.0
        %1043 = vmatpush2.xpose.msra.mxu0 0.0
        %1044 = vmatprep.subr.mxu0 0.0
        %1045 = vmatpush2.xpose.msra.mxu0 0.0
        %1046 = vmatprep.subr.mxu0 0.0
        %1047 = vmatpush2.xpose.msra.mxu0 0.0
        %1048 = vmatprep.subr.mxu0 0.0
        %1049 = vmatpush2.xpose.msra.mxu0 0.0
        %1050 = vmatprep.subr.mxu0 0.0
        %1051 = vmatpush2.xpose.msra.mxu0 0.0
        %1052 = vmatprep.subr.mxu0 0.0
        %1053 = vmatpush2.xpose.msra.mxu0 0.0
        %1054 = vmatprep.subr.mxu0 0.0
        %1055 = vmatpush2.xpose.msra.mxu0 0.0
        %1056 = vmatprep.subr.mxu0 0.0
        %1057 = vmatpush2.xpose.msra.mxu0 0.0
        %1058 = vmatprep.subr.mxu0 0.0
        %1059 = vmatpush2.xpose.msra.mxu0 0.0
        %1060 = vmatprep.subr.mxu0 0.0
        %1061 = vmatpush2.xpose.msra.mxu0 0.0
        %1062 = vmatprep.subr.mxu0 0.0
        %1063 = vmatpush2.xpose.msra.mxu0 0.0
        %1064 = vmatprep.mubr.f32.mxu0 0.0
        %1065 = vmatmul.mubr.f32.gmra.mxu0 %v996
        %v1066 = vpop.f32.mrf.mxu0
        %v1067 = vadd.f32 0.0, %v1066
        %v1068 = vpop.f32.mrf.mxu0
        %1069 = vdwg.mxu0
        %1071 = vrot.lane.b32.xlu0 %v988, 96
        %v1072 = vpop.permute.xlu0 %1071
        %v1073 = vsel %vm995, %v988, 0
        %v1075 = vsel %vm995, %v1072, 0
        %1077 = vmatprep.subr.mxu0 0.0
        %1078 = vmatpush1.xpose.msra.mxu0 0.0
        %1079 = vmatprep.subr.mxu0 0.0
        %1080 = vmatpush1.xpose.msra.mxu0 0.0
        %1081 = vmatprep.subr.mxu0 0.0
        %1082 = vmatpush1.xpose.msra.mxu0 0.0
        %1083 = vmatprep.subr.mxu0 0.0
        %1084 = vmatpush1.xpose.msra.mxu0 0.0
        %1085 = vmatprep.subr.mxu0 0.0
        %1086 = vmatpush1.xpose.msra.mxu0 0.0
        %1087 = vmatprep.subr.mxu0 0.0
        %1088 = vmatpush1.xpose.msra.mxu0 0.0
        %1089 = vmatprep.subr.mxu0 0.0
        %1090 = vmatpush1.xpose.msra.mxu0 0.0
        %1091 = vmatprep.subr.mxu0 0.0
        %1092 = vmatpush1.xpose.msra.mxu0 0.0
        %1093 = vmatprep.subr.mxu0 0.0
        %1094 = vmatpush1.xpose.msra.mxu0 0.0
        %1095 = vmatprep.subr.mxu0 0.0
        %1096 = vmatpush1.xpose.msra.mxu0 0.0
        %1097 = vmatprep.subr.mxu0 0.0
        %1098 = vmatpush1.xpose.msra.mxu0 0.0
        %1099 = vmatprep.subr.mxu0 0.0
        %1100 = vmatpush1.xpose.msra.mxu0 0.0
        %1101 = vmatprep.subr.mxu0 0.0
        %1102 = vmatpush1.xpose.msra.mxu0 0.0
        %1103 = vmatprep.subr.mxu0 0.0
        %1104 = vmatpush1.xpose.msra.mxu0 0.0
        %1105 = vmatprep.subr.mxu0 0.0
        %1106 = vmatpush1.xpose.msra.mxu0 0.0
        %1107 = vmatprep.subr.mxu0 0.0
        %1108 = vmatpush1.xpose.msra.mxu0 %v1075
        %1109 = vmatprep.subr.mxu0 0.0
        %1110 = vmatpush2.xpose.msra.mxu0 0.0
        %1111 = vmatprep.subr.mxu0 0.0
        %1112 = vmatpush2.xpose.msra.mxu0 0.0
        %1113 = vmatprep.subr.mxu0 0.0
        %1114 = vmatpush2.xpose.msra.mxu0 0.0
        %1115 = vmatprep.subr.mxu0 0.0
        %1116 = vmatpush2.xpose.msra.mxu0 0.0
        %1117 = vmatprep.subr.mxu0 0.0
        %1118 = vmatpush2.xpose.msra.mxu0 0.0
        %1119 = vmatprep.subr.mxu0 0.0
        %1120 = vmatpush2.xpose.msra.mxu0 0.0
        %1121 = vmatprep.subr.mxu0 0.0
        %1122 = vmatpush2.xpose.msra.mxu0 0.0
        %1123 = vmatprep.subr.mxu0 0.0
        %1124 = vmatpush2.xpose.msra.mxu0 0.0
        %1125 = vmatprep.subr.mxu0 0.0
        %1126 = vmatpush2.xpose.msra.mxu0 0.0
        %1127 = vmatprep.subr.mxu0 0.0
        %1128 = vmatpush2.xpose.msra.mxu0 0.0
        %1129 = vmatprep.subr.mxu0 0.0
        %1130 = vmatpush2.xpose.msra.mxu0 0.0
        %1131 = vmatprep.subr.mxu0 0.0
        %1132 = vmatpush2.xpose.msra.mxu0 0.0
        %1133 = vmatprep.subr.mxu0 0.0
        %1134 = vmatpush2.xpose.msra.mxu0 0.0
        %1135 = vmatprep.subr.mxu0 0.0
        %1136 = vmatpush2.xpose.msra.mxu0 0.0
        %1137 = vmatprep.subr.mxu0 0.0
        %1138 = vmatpush2.xpose.msra.mxu0 0.0
        %1139 = vmatprep.subr.mxu0 0.0
        %1140 = vmatpush2.xpose.msra.mxu0 0.0
        %1141 = vmatprep.mubr.f32.mxu0 0.0
        %1142 = vmatmul.mubr.f32.gmra.mxu0 %v1073
        %v1143 = vpop.f32.mrf.mxu0
        %v1144 = vadd.f32 0.0, %v1143
        %v1145 = vpop.f32.mrf.mxu0
        %1146 = vdwg.mxu0
        %v1147 = vmul.f32 %v1067, 0.25
        %v1148 = vmul.f32 %v1144, 0.25
        %v1151 = vunpack.c.l.s4 1966171168
        %v1152 = vunpack.c.0.s8 %v1151
        %v1153 = vlaneseq
        %v1154 = vshrl.u32 %v1153, 7
        %v1155 = vsub.s32 %v1152, %v1154
        %v1156 = vrot.slane %v991, %v1155
        %v1157 = vcombine.high %v1156, %v1156
        %v1159 = vunpack.c.l.s4 1966171168
        %v1160 = vunpack.c.0.s8 %v1159
        %v1161 = vlaneseq
        %v1162 = vshrl.u32 %v1161, 7
        %v1163 = vsub.s32 %v1160, %v1162
        %v1164 = vrot.slane %v1156, %v1163
        %v1166 = vunpack.c.l.s4 1966171168
        %v1167 = vunpack.c.0.s8 %v1166
        %v1168 = vlaneseq
        %v1169 = vshrl.u32 %v1168, 7
        %v1170 = vsub.s32 %v1167, %v1169
        %v1171 = vrot.slane %v1157, %v1170
        %v1172 = vlaneseq
        %v1173 = vshrl.u32 %v1172, 7
        %v1174 = vsub.s32 0, %v1173
        %v1175 = vrot.slane %v1164, %v1174
        %v1176 = vlaneseq
        %v1177 = vshrl.u32 %v1176, 7
        %v1178 = vsub.s32 0, %v1177
        %v1179 = vrot.slane %v1171, %v1178
        %v1182 = vadd.f32 %v1147, %v1175
        %v1183 = vadd.f32 %v1148, %v1179
        %vm1184 = vcmask 64512
        %v1185 = vsel %vm1184, %v1182, -inf
        %1186 = vmax.xlane.f32.xlu0 %v1185
        %v1187 = vpop.xlane.xlu0 %1186
        %v1188 = vsel %vm1184, %v1183, -inf
        %1189 = vmax.xlane.f32.xlu0 %v1188
        %v1190 = vpop.xlane.xlu0 %1189
        %v1191 = vsub.f32 %v1182, %v1187
        %v1192 = vsub.f32 %v1183, %v1190
        %v1193 = vmul.f32 %v1191, 1.442695
        %v1194 = vpow.pop %v1193
        %v1195 = vmul.f32 %v1192, 1.442695
        %v1196 = vpow.pop %v1195
        %v1197 = vsel %vm1184, %v1194, 0.0
        %1198 = vadd.xlane.f32.xlu0 %v1197
        %v1199 = vpop.xlane.xlu0 %1198
        %v1200 = vsel %vm1184, %v1196, 0.0
        %1201 = vadd.xlane.f32.xlu0 %v1200
        %v1202 = vpop.xlane.xlu0 %1201
        %v1203 = vrcp.pop %v1199
        %v1204 = vrcp.pop %v1202
        %v1205 = vmul.f32 %v1194, %v1203
        %v1206 = vmul.f32 %v1196, %v1204
        %1207 = vrot.lane.b32.xlu0 %v983, 64
        %v1208 = vpop.permute.xlu0 %1207
        %v1211 = vsel %vm1184, %v1205, 0
        %1213 = vmatprep.subr.mxu0 0.0
        %1214 = vmatpush1.msra.mxu0 0.0
        %1215 = vmatprep.subr.mxu0 0.0
        %1216 = vmatpush1.msra.mxu0 0.0
        %1217 = vmatprep.subr.mxu0 0.0
        %1218 = vmatpush1.msra.mxu0 0.0
        %1219 = vmatprep.subr.mxu0 0.0
        %1220 = vmatpush1.msra.mxu0 0.0
        %1221 = vmatprep.subr.mxu0 0.0
        %1222 = vmatpush1.msra.mxu0 0.0
        %1223 = vmatprep.subr.mxu0 0.0
        %1224 = vmatpush1.msra.mxu0 0.0
        %1225 = vmatprep.subr.mxu0 0.0
        %1226 = vmatpush1.msra.mxu0 0.0
        %1227 = vmatprep.subr.mxu0 0.0
        %1228 = vmatpush1.msra.mxu0 0.0
        %1229 = vmatprep.subr.mxu0 0.0
        %1230 = vmatpush1.msra.mxu0 0.0
        %1231 = vmatprep.subr.mxu0 0.0
        %1232 = vmatpush1.msra.mxu0 0.0
        %1233 = vmatprep.subr.mxu0 0.0
        %1234 = vmatpush1.msra.mxu0 0.0
        %1235 = vmatprep.subr.mxu0 0.0
        %1236 = vmatpush1.msra.mxu0 0.0
        %1237 = vmatprep.subr.mxu0 0.0
        %1238 = vmatpush1.msra.mxu0 0.0
        %1239 = vmatprep.subr.mxu0 0.0
        %1240 = vmatpush1.msra.mxu0 0.0
        %1241 = vmatprep.subr.mxu0 0.0
        %1242 = vmatpush1.msra.mxu0 0.0
        %1243 = vmatprep.subr.mxu0 0.0
        %1244 = vmatpush1.msra.mxu0 %v1208
        %1245 = vmatprep.subr.mxu0 0.0
        %1246 = vmatpush2.msra.mxu0 0.0
        %1247 = vmatprep.subr.mxu0 0.0
        %1248 = vmatpush2.msra.mxu0 0.0
        %1249 = vmatprep.subr.mxu0 0.0
        %1250 = vmatpush2.msra.mxu0 0.0
        %1251 = vmatprep.subr.mxu0 0.0
        %1252 = vmatpush2.msra.mxu0 0.0
        %1253 = vmatprep.subr.mxu0 0.0
        %1254 = vmatpush2.msra.mxu0 0.0
        %1255 = vmatprep.subr.mxu0 0.0
        %1256 = vmatpush2.msra.mxu0 0.0
        %1257 = vmatprep.subr.mxu0 0.0
        %1258 = vmatpush2.msra.mxu0 0.0
        %1259 = vmatprep.subr.mxu0 0.0
        %1260 = vmatpush2.msra.mxu0 0.0
        %1261 = vmatprep.subr.mxu0 0.0
        %1262 = vmatpush2.msra.mxu0 0.0
        %1263 = vmatprep.subr.mxu0 0.0
        %1264 = vmatpush2.msra.mxu0 0.0
        %1265 = vmatprep.subr.mxu0 0.0
        %1266 = vmatpush2.msra.mxu0 0.0
        %1267 = vmatprep.subr.mxu0 0.0
        %1268 = vmatpush2.msra.mxu0 0.0
        %1269 = vmatprep.subr.mxu0 0.0
        %1270 = vmatpush2.msra.mxu0 0.0
        %1271 = vmatprep.subr.mxu0 0.0
        %1272 = vmatpush2.msra.mxu0 0.0
        %1273 = vmatprep.subr.mxu0 0.0
        %1274 = vmatpush2.msra.mxu0 0.0
        %1275 = vmatprep.subr.mxu0 0.0
        %1276 = vmatpush2.msra.mxu0 0.0
        %1277 = vmatprep.mubr.f32.mxu0 0.0
        %1278 = vmatmul.mubr.f32.gmra.mxu0 %v1211
        %v1279 = vpop.f32.mrf.mxu0
        %v1280 = vadd.f32 0.0, %v1279
        %v1281 = vpop.f32.mrf.mxu0
        %1282 = vdwg.mxu0
        %1283 = vrot.lane.b32.xlu0 %v988, 64
        %v1284 = vpop.permute.xlu0 %1283
        %v1287 = vsel %vm1184, %v1206, 0
        %1289 = vmatprep.subr.mxu0 0.0
        %1290 = vmatpush1.msra.mxu0 0.0
        %1291 = vmatprep.subr.mxu0 0.0
        %1292 = vmatpush1.msra.mxu0 0.0
        %1293 = vmatprep.subr.mxu0 0.0
        %1294 = vmatpush1.msra.mxu0 0.0
        %1295 = vmatprep.subr.mxu0 0.0
        %1296 = vmatpush1.msra.mxu0 0.0
        %1297 = vmatprep.subr.mxu0 0.0
        %1298 = vmatpush1.msra.mxu0 0.0
        %1299 = vmatprep.subr.mxu0 0.0
        %1300 = vmatpush1.msra.mxu0 0.0
        %1301 = vmatprep.subr.mxu0 0.0
        %1302 = vmatpush1.msra.mxu0 0.0
        %1303 = vmatprep.subr.mxu0 0.0
        %1304 = vmatpush1.msra.mxu0 0.0
        %1305 = vmatprep.subr.mxu0 0.0
        %1306 = vmatpush1.msra.mxu0 0.0
        %1307 = vmatprep.subr.mxu0 0.0
        %1308 = vmatpush1.msra.mxu0 0.0
        %1309 = vmatprep.subr.mxu0 0.0
        %1310 = vmatpush1.msra.mxu0 0.0
        %1311 = vmatprep.subr.mxu0 0.0
        %1312 = vmatpush1.msra.mxu0 0.0
        %1313 = vmatprep.subr.mxu0 0.0
        %1314 = vmatpush1.msra.mxu0 0.0
        %1315 = vmatprep.subr.mxu0 0.0
        %1316 = vmatpush1.msra.mxu0 0.0
        %1317 = vmatprep.subr.mxu0 0.0
        %1318 = vmatpush1.msra.mxu0 0.0
        %1319 = vmatprep.subr.mxu0 0.0
        %1320 = vmatpush1.msra.mxu0 %v1284
        %1321 = vmatprep.subr.mxu0 0.0
        %1322 = vmatpush2.msra.mxu0 0.0
        %1323 = vmatprep.subr.mxu0 0.0
        %1324 = vmatpush2.msra.mxu0 0.0
        %1325 = vmatprep.subr.mxu0 0.0
        %1326 = vmatpush2.msra.mxu0 0.0
        %1327 = vmatprep.subr.mxu0 0.0
        %1328 = vmatpush2.msra.mxu0 0.0
        %1329 = vmatprep.subr.mxu0 0.0
        %1330 = vmatpush2.msra.mxu0 0.0
        %1331 = vmatprep.subr.mxu0 0.0
        %1332 = vmatpush2.msra.mxu0 0.0
        %1333 = vmatprep.subr.mxu0 0.0
        %1334 = vmatpush2.msra.mxu0 0.0
        %1335 = vmatprep.subr.mxu0 0.0
        %1336 = vmatpush2.msra.mxu0 0.0
        %1337 = vmatprep.subr.mxu0 0.0
        %1338 = vmatpush2.msra.mxu0 0.0
        %1339 = vmatprep.subr.mxu0 0.0
        %1340 = vmatpush2.msra.mxu0 0.0
        %1341 = vmatprep.subr.mxu0 0.0
        %1342 = vmatpush2.msra.mxu0 0.0
        %1343 = vmatprep.subr.mxu0 0.0
        %1344 = vmatpush2.msra.mxu0 0.0
        %1345 = vmatprep.subr.mxu0 0.0
        %1346 = vmatpush2.msra.mxu0 0.0
        %1347 = vmatprep.subr.mxu0 0.0
        %1348 = vmatpush2.msra.mxu0 0.0
        %1349 = vmatprep.subr.mxu0 0.0
        %1350 = vmatpush2.msra.mxu0 0.0
        %1351 = vmatprep.subr.mxu0 0.0
        %1352 = vmatpush2.msra.mxu0 0.0
        %1353 = vmatprep.mubr.f32.mxu0 0.0
        %1354 = vmatmul.mubr.f32.gmra.mxu0 %v1287
        %v1355 = vpop.f32.mrf.mxu0
        %v1356 = vadd.f32 0.0, %v1355
        %v1357 = vpop.f32.mrf.mxu0
        %1358 = vdwg.mxu0
        %1359 = vrot.lane.b32.xlu0 %v983, 112
        %v1360 = vpop.permute.xlu0 %1359
        %1361 = vrot.lane.b32.xlu0 %v983, 80
        %v1362 = vpop.permute.xlu0 %1361
        %v1363 = vsel %vm995, %v1360, 0
        %v1365 = vsel %vm995, %v1362, 0
        %1367 = vmatprep.subr.mxu0 0.0
        %1368 = vmatpush1.xpose.msra.mxu0 0.0
        %1369 = vmatprep.subr.mxu0 0.0
        %1370 = vmatpush1.xpose.msra.mxu0 0.0
        %1371 = vmatprep.subr.mxu0 0.0
        %1372 = vmatpush1.xpose.msra.mxu0 0.0
        %1373 = vmatprep.subr.mxu0 0.0
        %1374 = vmatpush1.xpose.msra.mxu0 0.0
        %1375 = vmatprep.subr.mxu0 0.0
        %1376 = vmatpush1.xpose.msra.mxu0 0.0
        %1377 = vmatprep.subr.mxu0 0.0
        %1378 = vmatpush1.xpose.msra.mxu0 0.0
        %1379 = vmatprep.subr.mxu0 0.0
        %1380 = vmatpush1.xpose.msra.mxu0 0.0
        %1381 = vmatprep.subr.mxu0 0.0
        %1382 = vmatpush1.xpose.msra.mxu0 0.0
        %1383 = vmatprep.subr.mxu0 0.0
        %1384 = vmatpush1.xpose.msra.mxu0 0.0
        %1385 = vmatprep.subr.mxu0 0.0
        %1386 = vmatpush1.xpose.msra.mxu0 0.0
        %1387 = vmatprep.subr.mxu0 0.0
        %1388 = vmatpush1.xpose.msra.mxu0 0.0
        %1389 = vmatprep.subr.mxu0 0.0
        %1390 = vmatpush1.xpose.msra.mxu0 0.0
        %1391 = vmatprep.subr.mxu0 0.0
        %1392 = vmatpush1.xpose.msra.mxu0 0.0
        %1393 = vmatprep.subr.mxu0 0.0
        %1394 = vmatpush1.xpose.msra.mxu0 0.0
        %1395 = vmatprep.subr.mxu0 0.0
        %1396 = vmatpush1.xpose.msra.mxu0 0.0
        %1397 = vmatprep.subr.mxu0 0.0
        %1398 = vmatpush1.xpose.msra.mxu0 %v1365
        %1399 = vmatprep.subr.mxu0 0.0
        %1400 = vmatpush2.xpose.msra.mxu0 0.0
        %1401 = vmatprep.subr.mxu0 0.0
        %1402 = vmatpush2.xpose.msra.mxu0 0.0
        %1403 = vmatprep.subr.mxu0 0.0
        %1404 = vmatpush2.xpose.msra.mxu0 0.0
        %1405 = vmatprep.subr.mxu0 0.0
        %1406 = vmatpush2.xpose.msra.mxu0 0.0
        %1407 = vmatprep.subr.mxu0 0.0
        %1408 = vmatpush2.xpose.msra.mxu0 0.0
        %1409 = vmatprep.subr.mxu0 0.0
        %1410 = vmatpush2.xpose.msra.mxu0 0.0
        %1411 = vmatprep.subr.mxu0 0.0
        %1412 = vmatpush2.xpose.msra.mxu0 0.0
        %1413 = vmatprep.subr.mxu0 0.0
        %1414 = vmatpush2.xpose.msra.mxu0 0.0
        %1415 = vmatprep.subr.mxu0 0.0
        %1416 = vmatpush2.xpose.msra.mxu0 0.0
        %1417 = vmatprep.subr.mxu0 0.0
        %1418 = vmatpush2.xpose.msra.mxu0 0.0
        %1419 = vmatprep.subr.mxu0 0.0
        %1420 = vmatpush2.xpose.msra.mxu0 0.0
        %1421 = vmatprep.subr.mxu0 0.0
        %1422 = vmatpush2.xpose.msra.mxu0 0.0
        %1423 = vmatprep.subr.mxu0 0.0
        %1424 = vmatpush2.xpose.msra.mxu0 0.0
        %1425 = vmatprep.subr.mxu0 0.0
        %1426 = vmatpush2.xpose.msra.mxu0 0.0
        %1427 = vmatprep.subr.mxu0 0.0
        %1428 = vmatpush2.xpose.msra.mxu0 0.0
        %1429 = vmatprep.subr.mxu0 0.0
        %1430 = vmatpush2.xpose.msra.mxu0 0.0
        %1431 = vmatprep.mubr.f32.mxu0 0.0
        %1432 = vmatmul.mubr.f32.gmra.mxu0 %v1363
        %v1433 = vpop.f32.mrf.mxu0
        %v1434 = vadd.f32 0.0, %v1433
        %v1435 = vpop.f32.mrf.mxu0
        %1436 = vdwg.mxu0
        %1437 = vrot.lane.b32.xlu0 %v988, 112
        %v1438 = vpop.permute.xlu0 %1437
        %1439 = vrot.lane.b32.xlu0 %v988, 80
        %v1440 = vpop.permute.xlu0 %1439
        %v1441 = vsel %vm995, %v1438, 0
        %v1443 = vsel %vm995, %v1440, 0
        %1445 = vmatprep.subr.mxu0 0.0
        %1446 = vmatpush1.xpose.msra.mxu0 0.0
        %1447 = vmatprep.subr.mxu0 0.0
        %1448 = vmatpush1.xpose.msra.mxu0 0.0
        %1449 = vmatprep.subr.mxu0 0.0
        %1450 = vmatpush1.xpose.msra.mxu0 0.0
        %1451 = vmatprep.subr.mxu0 0.0
        %1452 = vmatpush1.xpose.msra.mxu0 0.0
        %1453 = vmatprep.subr.mxu0 0.0
        %1454 = vmatpush1.xpose.msra.mxu0 0.0
        %1455 = vmatprep.subr.mxu0 0.0
        %1456 = vmatpush1.xpose.msra.mxu0 0.0
        %1457 = vmatprep.subr.mxu0 0.0
        %1458 = vmatpush1.xpose.msra.mxu0 0.0
        %1459 = vmatprep.subr.mxu0 0.0
        %1460 = vmatpush1.xpose.msra.mxu0 0.0
        %1461 = vmatprep.subr.mxu0 0.0
        %1462 = vmatpush1.xpose.msra.mxu0 0.0
        %1463 = vmatprep.subr.mxu0 0.0
        %1464 = vmatpush1.xpose.msra.mxu0 0.0
        %1465 = vmatprep.subr.mxu0 0.0
        %1466 = vmatpush1.xpose.msra.mxu0 0.0
        %1467 = vmatprep.subr.mxu0 0.0
        %1468 = vmatpush1.xpose.msra.mxu0 0.0
        %1469 = vmatprep.subr.mxu0 0.0
        %1470 = vmatpush1.xpose.msra.mxu0 0.0
        %1471 = vmatprep.subr.mxu0 0.0
        %1472 = vmatpush1.xpose.msra.mxu0 0.0
        %1473 = vmatprep.subr.mxu0 0.0
        %1474 = vmatpush1.xpose.msra.mxu0 0.0
        %1475 = vmatprep.subr.mxu0 0.0
        %1476 = vmatpush1.xpose.msra.mxu0 %v1443
        %1477 = vmatprep.subr.mxu0 0.0
        %1478 = vmatpush2.xpose.msra.mxu0 0.0
        %1479 = vmatprep.subr.mxu0 0.0
        %1480 = vmatpush2.xpose.msra.mxu0 0.0
        %1481 = vmatprep.subr.mxu0 0.0
        %1482 = vmatpush2.xpose.msra.mxu0 0.0
        %1483 = vmatprep.subr.mxu0 0.0
        %1484 = vmatpush2.xpose.msra.mxu0 0.0
        %1485 = vmatprep.subr.mxu0 0.0
        %1486 = vmatpush2.xpose.msra.mxu0 0.0
        %1487 = vmatprep.subr.mxu0 0.0
        %1488 = vmatpush2.xpose.msra.mxu0 0.0
        %1489 = vmatprep.subr.mxu0 0.0
        %1490 = vmatpush2.xpose.msra.mxu0 0.0
        %1491 = vmatprep.subr.mxu0 0.0
        %1492 = vmatpush2.xpose.msra.mxu0 0.0
        %1493 = vmatprep.subr.mxu0 0.0
        %1494 = vmatpush2.xpose.msra.mxu0 0.0
        %1495 = vmatprep.subr.mxu0 0.0
        %1496 = vmatpush2.xpose.msra.mxu0 0.0
        %1497 = vmatprep.subr.mxu0 0.0
        %1498 = vmatpush2.xpose.msra.mxu0 0.0
        %1499 = vmatprep.subr.mxu0 0.0
        %1500 = vmatpush2.xpose.msra.mxu0 0.0
        %1501 = vmatprep.subr.mxu0 0.0
        %1502 = vmatpush2.xpose.msra.mxu0 0.0
        %1503 = vmatprep.subr.mxu0 0.0
        %1504 = vmatpush2.xpose.msra.mxu0 0.0
        %1505 = vmatprep.subr.mxu0 0.0
        %1506 = vmatpush2.xpose.msra.mxu0 0.0
        %1507 = vmatprep.subr.mxu0 0.0
        %1508 = vmatpush2.xpose.msra.mxu0 0.0
        %1509 = vmatprep.mubr.f32.mxu0 0.0
        %1510 = vmatmul.mubr.f32.gmra.mxu0 %v1441
        %v1511 = vpop.f32.mrf.mxu0
        %v1512 = vadd.f32 0.0, %v1511
        %v1513 = vpop.f32.mrf.mxu0
        %1514 = vdwg.mxu0
        %v1515 = vmul.f32 %v1434, 0.25
        %v1516 = vmul.f32 %v1512, 0.25
        %v1517 = vadd.f32 %v1515, %v1175
        %v1518 = vadd.f32 %v1516, %v1179
        %v1519 = vsel %vm1184, %v1517, -inf
        %1520 = vmax.xlane.f32.xlu0 %v1519
        %v1521 = vpop.xlane.xlu0 %1520
        %v1522 = vsel %vm1184, %v1518, -inf
        %1523 = vmax.xlane.f32.xlu0 %v1522
        %v1524 = vpop.xlane.xlu0 %1523
        %v1525 = vsub.f32 %v1517, %v1521
        %v1526 = vsub.f32 %v1518, %v1524
        %v1527 = vmul.f32 %v1525, 1.442695
        %v1528 = vpow.pop %v1527
        %v1529 = vmul.f32 %v1526, 1.442695
        %v1530 = vpow.pop %v1529
        %v1531 = vsel %vm1184, %v1528, 0.0
        %1532 = vadd.xlane.f32.xlu0 %v1531
        %v1533 = vpop.xlane.xlu0 %1532
        %v1534 = vsel %vm1184, %v1530, 0.0
        %1535 = vadd.xlane.f32.xlu0 %v1534
        %v1536 = vpop.xlane.xlu0 %1535
        %v1537 = vrcp.pop %v1533
        %v1538 = vrcp.pop %v1536
        %v1539 = vmul.f32 %v1528, %v1537
        %v1540 = vmul.f32 %v1530, %v1538
        %1541 = vrot.lane.b32.xlu0 %v983, 48
        %v1542 = vpop.permute.xlu0 %1541
        %v1545 = vsel %vm1184, %v1539, 0
        %1547 = vmatprep.subr.mxu0 0.0
        %1548 = vmatpush1.msra.mxu0 0.0
        %1549 = vmatprep.subr.mxu0 0.0
        %1550 = vmatpush1.msra.mxu0 0.0
        %1551 = vmatprep.subr.mxu0 0.0
        %1552 = vmatpush1.msra.mxu0 0.0
        %1553 = vmatprep.subr.mxu0 0.0
        %1554 = vmatpush1.msra.mxu0 0.0
        %1555 = vmatprep.subr.mxu0 0.0
        %1556 = vmatpush1.msra.mxu0 0.0
        %1557 = vmatprep.subr.mxu0 0.0
        %1558 = vmatpush1.msra.mxu0 0.0
        %1559 = vmatprep.subr.mxu0 0.0
        %1560 = vmatpush1.msra.mxu0 0.0
        %1561 = vmatprep.subr.mxu0 0.0
        %1562 = vmatpush1.msra.mxu0 0.0
        %1563 = vmatprep.subr.mxu0 0.0
        %1564 = vmatpush1.msra.mxu0 0.0
        %1565 = vmatprep.subr.mxu0 0.0
        %1566 = vmatpush1.msra.mxu0 0.0
        %1567 = vmatprep.subr.mxu0 0.0
        %1568 = vmatpush1.msra.mxu0 0.0
        %1569 = vmatprep.subr.mxu0 0.0
        %1570 = vmatpush1.msra.mxu0 0.0
        %1571 = vmatprep.subr.mxu0 0.0
        %1572 = vmatpush1.msra.mxu0 0.0
        %1573 = vmatprep.subr.mxu0 0.0
        %1574 = vmatpush1.msra.mxu0 0.0
        %1575 = vmatprep.subr.mxu0 0.0
        %1576 = vmatpush1.msra.mxu0 0.0
        %1577 = vmatprep.subr.mxu0 0.0
        %1578 = vmatpush1.msra.mxu0 %v1542
        %1579 = vmatprep.subr.mxu0 0.0
        %1580 = vmatpush2.msra.mxu0 0.0
        %1581 = vmatprep.subr.mxu0 0.0
        %1582 = vmatpush2.msra.mxu0 0.0
        %1583 = vmatprep.subr.mxu0 0.0
        %1584 = vmatpush2.msra.mxu0 0.0
        %1585 = vmatprep.subr.mxu0 0.0
        %1586 = vmatpush2.msra.mxu0 0.0
        %1587 = vmatprep.subr.mxu0 0.0
        %1588 = vmatpush2.msra.mxu0 0.0
        %1589 = vmatprep.subr.mxu0 0.0
        %1590 = vmatpush2.msra.mxu0 0.0
        %1591 = vmatprep.subr.mxu0 0.0
        %1592 = vmatpush2.msra.mxu0 0.0
        %1593 = vmatprep.subr.mxu0 0.0
        %1594 = vmatpush2.msra.mxu0 0.0
        %1595 = vmatprep.subr.mxu0 0.0
        %1596 = vmatpush2.msra.mxu0 0.0
        %1597 = vmatprep.subr.mxu0 0.0
        %1598 = vmatpush2.msra.mxu0 0.0
        %1599 = vmatprep.subr.mxu0 0.0
        %1600 = vmatpush2.msra.mxu0 0.0
        %1601 = vmatprep.subr.mxu0 0.0
        %1602 = vmatpush2.msra.mxu0 0.0
        %1603 = vmatprep.subr.mxu0 0.0
        %1604 = vmatpush2.msra.mxu0 0.0
        %1605 = vmatprep.subr.mxu0 0.0
        %1606 = vmatpush2.msra.mxu0 0.0
        %1607 = vmatprep.subr.mxu0 0.0
        %1608 = vmatpush2.msra.mxu0 0.0
        %1609 = vmatprep.subr.mxu0 0.0
        %1610 = vmatpush2.msra.mxu0 0.0
        %1611 = vmatprep.mubr.f32.mxu0 0.0
        %1612 = vmatmul.mubr.f32.gmra.mxu0 %v1545
        %v1613 = vpop.f32.mrf.mxu0
        %v1614 = vadd.f32 0.0, %v1613
        %v1615 = vpop.f32.mrf.mxu0
        %1616 = vdwg.mxu0
        %1617 = vrot.lane.b32.xlu0 %v988, 48
        %v1618 = vpop.permute.xlu0 %1617
        %v1621 = vsel %vm1184, %v1540, 0
        %1623 = vmatprep.subr.mxu0 0.0
        %1624 = vmatpush1.msra.mxu0 0.0
        %1625 = vmatprep.subr.mxu0 0.0
        %1626 = vmatpush1.msra.mxu0 0.0
        %1627 = vmatprep.subr.mxu0 0.0
        %1628 = vmatpush1.msra.mxu0 0.0
        %1629 = vmatprep.subr.mxu0 0.0
        %1630 = vmatpush1.msra.mxu0 0.0
        %1631 = vmatprep.subr.mxu0 0.0
        %1632 = vmatpush1.msra.mxu0 0.0
        %1633 = vmatprep.subr.mxu0 0.0
        %1634 = vmatpush1.msra.mxu0 0.0
        %1635 = vmatprep.subr.mxu0 0.0
        %1636 = vmatpush1.msra.mxu0 0.0
        %1637 = vmatprep.subr.mxu0 0.0
        %1638 = vmatpush1.msra.mxu0 0.0
        %1639 = vmatprep.subr.mxu0 0.0
        %1640 = vmatpush1.msra.mxu0 0.0
        %1641 = vmatprep.subr.mxu0 0.0
        %1642 = vmatpush1.msra.mxu0 0.0
        %1643 = vmatprep.subr.mxu0 0.0
        %1644 = vmatpush1.msra.mxu0 0.0
        %1645 = vmatprep.subr.mxu0 0.0
        %1646 = vmatpush1.msra.mxu0 0.0
        %1647 = vmatprep.subr.mxu0 0.0
        %1648 = vmatpush1.msra.mxu0 0.0
        %1649 = vmatprep.subr.mxu0 0.0
        %1650 = vmatpush1.msra.mxu0 0.0
        %1651 = vmatprep.subr.mxu0 0.0
        %1652 = vmatpush1.msra.mxu0 0.0
        %1653 = vmatprep.subr.mxu0 0.0
        %1654 = vmatpush1.msra.mxu0 %v1618
        %1655 = vmatprep.subr.mxu0 0.0
        %1656 = vmatpush2.msra.mxu0 0.0
        %1657 = vmatprep.subr.mxu0 0.0
        %1658 = vmatpush2.msra.mxu0 0.0
        %1659 = vmatprep.subr.mxu0 0.0
        %1660 = vmatpush2.msra.mxu0 0.0
        %1661 = vmatprep.subr.mxu0 0.0
        %1662 = vmatpush2.msra.mxu0 0.0
        %1663 = vmatprep.subr.mxu0 0.0
        %1664 = vmatpush2.msra.mxu0 0.0
        %1665 = vmatprep.subr.mxu0 0.0
        %1666 = vmatpush2.msra.mxu0 0.0
        %1667 = vmatprep.subr.mxu0 0.0
        %1668 = vmatpush2.msra.mxu0 0.0
        %1669 = vmatprep.subr.mxu0 0.0
        %1670 = vmatpush2.msra.mxu0 0.0
        %1671 = vmatprep.subr.mxu0 0.0
        %1672 = vmatpush2.msra.mxu0 0.0
        %1673 = vmatprep.subr.mxu0 0.0
        %1674 = vmatpush2.msra.mxu0 0.0
        %1675 = vmatprep.subr.mxu0 0.0
        %1676 = vmatpush2.msra.mxu0 0.0
        %1677 = vmatprep.subr.mxu0 0.0
        %1678 = vmatpush2.msra.mxu0 0.0
        %1679 = vmatprep.subr.mxu0 0.0
        %1680 = vmatpush2.msra.mxu0 0.0
        %1681 = vmatprep.subr.mxu0 0.0
        %1682 = vmatpush2.msra.mxu0 0.0
        %1683 = vmatprep.subr.mxu0 0.0
        %1684 = vmatpush2.msra.mxu0 0.0
        %1685 = vmatprep.subr.mxu0 0.0
        %1686 = vmatpush2.msra.mxu0 0.0
        %1687 = vmatprep.mubr.f32.mxu0 0.0
        %1688 = vmatmul.mubr.f32.gmra.mxu0 %v1621
        %v1689 = vpop.f32.mrf.mxu0
        %v1690 = vadd.f32 0.0, %v1689
        %v1691 = vpop.f32.mrf.mxu0
        %1692 = vdwg.mxu0
        %1695 = vrot.lane.b32.xlu0 %v1614, 16
        %v1696 = vpop.permute.xlu0 %1695
        %1697 = vrot.lane.b32.xlu0 %v1690, 16
        %v1698 = vpop.permute.xlu0 %1697
        %v1701 = vsel %vm995, %v1280, %v1696
        %v1702 = vsel %vm995, %v1356, %v1698
        %v1703 = vld [vmem:[%s810] sm:$0xff]
        %v1704 = vld [vmem:[%s810 + $0x8] sm:$0xff]
        %v1705 = vld [vmem:[%s810 + $0x10] sm:$0xff]
        %v1706 = vld [vmem:[%s810 + $0x18] sm:$0xff]
        %v1707 = vld [vmem:[%s813] sm:$0x1]
        %v1709 = vlaneseq
        %v1710 = vshrl.u32 %v1709, 7
        %v1711 = vsub.s32 0, %v1710
        %v1712 = vrot.slane %v1707, %v1711
        %v1715 = vsel %vm909, %v1701, 0
        %v1718 = vsel %vm909, %v1702, 0
        %1720 = vmatprep.subr.mxu0 0.0
        %1721 = vmatpush1.msra.mxu0 0.0
        %1722 = vmatprep.subr.mxu0 0.0
        %1723 = vmatpush1.msra.mxu0 0.0
        %1724 = vmatprep.subr.mxu0 0.0
        %1725 = vmatpush1.msra.mxu0 0.0
        %1726 = vmatprep.subr.mxu0 0.0
        %1727 = vmatpush1.msra.mxu0 0.0
        %1728 = vmatprep.subr.mxu0 0.0
        %1729 = vmatpush1.msra.mxu0 0.0
        %1730 = vmatprep.subr.mxu0 0.0
        %1731 = vmatpush1.msra.mxu0 0.0
        %1732 = vmatprep.subr.mxu0 0.0
        %1733 = vmatpush1.msra.mxu0 0.0
        %1734 = vmatprep.subr.mxu0 0.0
        %1735 = vmatpush1.msra.mxu0 0.0
        %1736 = vmatprep.subr.mxu0 0.0
        %1737 = vmatpush1.msra.mxu0 0.0
        %1738 = vmatprep.subr.mxu0 0.0
        %1739 = vmatpush1.msra.mxu0 0.0
        %1740 = vmatprep.subr.mxu0 0.0
        %1741 = vmatpush1.msra.mxu0 0.0
        %1742 = vmatprep.subr.mxu0 0.0
        %1743 = vmatpush1.msra.mxu0 0.0
        %1744 = vmatprep.subr.mxu0 0.0
        %1745 = vmatpush1.msra.mxu0 %v1706
        %1746 = vmatprep.subr.mxu0 0.0
        %1747 = vmatpush1.msra.mxu0 %v1705
        %1748 = vmatprep.subr.mxu0 0.0
        %1749 = vmatpush1.msra.mxu0 %v1704
        %1750 = vmatprep.subr.mxu0 0.0
        %1751 = vmatpush1.msra.mxu0 %v1703
        %1752 = vmatprep.subr.mxu0 0.0
        %1753 = vmatpush2.msra.mxu0 0.0
        %1754 = vmatprep.subr.mxu0 0.0
        %1755 = vmatpush2.msra.mxu0 0.0
        %1756 = vmatprep.subr.mxu0 0.0
        %1757 = vmatpush2.msra.mxu0 0.0
        %1758 = vmatprep.subr.mxu0 0.0
        %1759 = vmatpush2.msra.mxu0 0.0
        %1760 = vmatprep.subr.mxu0 0.0
        %1761 = vmatpush2.msra.mxu0 0.0
        %1762 = vmatprep.subr.mxu0 0.0
        %1763 = vmatpush2.msra.mxu0 0.0
        %1764 = vmatprep.subr.mxu0 0.0
        %1765 = vmatpush2.msra.mxu0 0.0
        %1766 = vmatprep.subr.mxu0 0.0
        %1767 = vmatpush2.msra.mxu0 0.0
        %1768 = vmatprep.subr.mxu0 0.0
        %1769 = vmatpush2.msra.mxu0 0.0
        %1770 = vmatprep.subr.mxu0 0.0
        %1771 = vmatpush2.msra.mxu0 0.0
        %1772 = vmatprep.subr.mxu0 0.0
        %1773 = vmatpush2.msra.mxu0 0.0
        %1774 = vmatprep.subr.mxu0 0.0
        %1775 = vmatpush2.msra.mxu0 0.0
        %1776 = vmatprep.subr.mxu0 0.0
        %1777 = vmatpush2.msra.mxu0 0.0
        %1778 = vmatprep.subr.mxu0 0.0
        %1779 = vmatpush2.msra.mxu0 0.0
        %1780 = vmatprep.subr.mxu0 0.0
        %1781 = vmatpush2.msra.mxu0 0.0
        %1782 = vmatprep.subr.mxu0 0.0
        %1783 = vmatpush2.msra.mxu0 0.0
        %1784 = vmatprep.mubr.f32.mxu0 0.0
        %1785 = vmatmul.mubr.f32.gmra.mxu0 %v1715
        %v1786 = vpop.f32.mrf.mxu0
        %v1787 = vadd.f32 %v1712, %v1786
        %v1788 = vpop.f32.mrf.mxu0
        %1789 = vmatprep.mubr.f32.mxu0 0.0
        %1790 = vmatmul.mubr.f32.gmra.mxu0 %v1718
        %v1791 = vpop.f32.mrf.mxu0
        %v1792 = vadd.f32 %v1712, %v1791
        %v1793 = vpop.f32.mrf.mxu0
        %1794 = vdwg.mxu0
        %v1795 = vadd.f32 %v1787, %v896
        %v1796 = vadd.f32 %v1792, %v897
        %v1797 = vld [vmem:[%s816] sm:$0x1]
        %v1798 = vld [vmem:[%s819] sm:$0x1]
        %v1799 = vsel %vm909, %v1795, 0.0
        %1800 = vadd.xlane.f32.xlu0 %v1799
        %v1801 = vpop.xlane.xlu0 %1800
        %v1802 = vsel %vm909, %v1796, 0.0
        %1803 = vadd.xlane.f32.xlu0 %v1802
        %v1804 = vpop.xlane.xlu0 %1803
        %v1805 = vrcp.pop 32.0
        %v1806 = vmul.f32 %v1801, %v1805
        %v1807 = vmul.f32 %v1804, %v1805
        %v1808 = vsub.f32 %v1795, %v1806
        %v1809 = vsub.f32 %v1796, %v1807
        %v1810 = vmul.f32 %v1808, %v1808
        %v1811 = vmul.f32 %v1809, %v1809
        %v1812 = vsel %vm909, %v1810, 0.0
        %1813 = vadd.xlane.f32.xlu0 %v1812
        %v1814 = vpop.xlane.xlu0 %1813
        %v1815 = vsel %vm909, %v1811, 0.0
        %1816 = vadd.xlane.f32.xlu0 %v1815
        %v1817 = vpop.xlane.xlu0 %1816
        %v1818 = vmul.f32 %v1814, %v1805
        %v1819 = vmul.f32 %v1817, %v1805
        %v1820 = vadd.f32 %v1818, 1e-12
        %v1821 = vadd.f32 %v1819, 1e-12
        %v1822 = vrsqrt.pop %v1820
        %v1823 = vrsqrt.pop %v1821
        %v1824 = vmul.f32 %v1808, %v1822
        %v1825 = vmul.f32 %v1809, %v1823
        %v1827 = vlaneseq
        %v1828 = vshrl.u32 %v1827, 7
        %v1829 = vsub.s32 0, %v1828
        %v1830 = vrot.slane %v1797, %v1829
        %v1832 = vmul.f32 %v1824, %v1830
        %v1833 = vmul.f32 %v1825, %v1830
        %v1835 = vlaneseq
        %v1836 = vshrl.u32 %v1835, 7
        %v1837 = vsub.s32 0, %v1836
        %v1838 = vrot.slane %v1798, %v1837
        %v1840 = vadd.f32 %v1832, %v1838
        %v1841 = vadd.f32 %v1833, %v1838
        %v1842 = vld [vmem:[%s824] sm:$0xff]
        %v1843 = vld [vmem:[%s824 + $0x8] sm:$0xff]
        %v1844 = vld [vmem:[%s824 + $0x10] sm:$0xff]
        %v1845 = vld [vmem:[%s824 + $0x18] sm:$0xff]
        %v1846 = vld [vmem:[%s827] sm:$0x1]
        %v1848 = vlaneseq
        %v1849 = vshrl.u32 %v1848, 7
        %v1850 = vsub.s32 0, %v1849
        %v1851 = vrot.slane %v1846, %v1850
        %v1854 = vsel %vm909, %v1840, 0
        %v1857 = vsel %vm909, %v1841, 0
        %1859 = vmatprep.subr.mxu0 0.0
        %1860 = vmatpush1.msra.mxu0 0.0
        %1861 = vmatprep.subr.mxu0 0.0
        %1862 = vmatpush1.msra.mxu0 0.0
        %1863 = vmatprep.subr.mxu0 0.0
        %1864 = vmatpush1.msra.mxu0 0.0
        %1865 = vmatprep.subr.mxu0 0.0
        %1866 = vmatpush1.msra.mxu0 0.0
        %1867 = vmatprep.subr.mxu0 0.0
        %1868 = vmatpush1.msra.mxu0 0.0
        %1869 = vmatprep.subr.mxu0 0.0
        %1870 = vmatpush1.msra.mxu0 0.0
        %1871 = vmatprep.subr.mxu0 0.0
        %1872 = vmatpush1.msra.mxu0 0.0
        %1873 = vmatprep.subr.mxu0 0.0
        %1874 = vmatpush1.msra.mxu0 0.0
        %1875 = vmatprep.subr.mxu0 0.0
        %1876 = vmatpush1.msra.mxu0 0.0
        %1877 = vmatprep.subr.mxu0 0.0
        %1878 = vmatpush1.msra.mxu0 0.0
        %1879 = vmatprep.subr.mxu0 0.0
        %1880 = vmatpush1.msra.mxu0 0.0
        %1881 = vmatprep.subr.mxu0 0.0
        %1882 = vmatpush1.msra.mxu0 0.0
        %1883 = vmatprep.subr.mxu0 0.0
        %1884 = vmatpush1.msra.mxu0 %v1845
        %1885 = vmatprep.subr.mxu0 0.0
        %1886 = vmatpush1.msra.mxu0 %v1844
        %1887 = vmatprep.subr.mxu0 0.0
        %1888 = vmatpush1.msra.mxu0 %v1843
        %1889 = vmatprep.subr.mxu0 0.0
        %1890 = vmatpush1.msra.mxu0 %v1842
        %1891 = vmatprep.subr.mxu0 0.0
        %1892 = vmatpush2.msra.mxu0 0.0
        %1893 = vmatprep.subr.mxu0 0.0
        %1894 = vmatpush2.msra.mxu0 0.0
        %1895 = vmatprep.subr.mxu0 0.0
        %1896 = vmatpush2.msra.mxu0 0.0
        %1897 = vmatprep.subr.mxu0 0.0
        %1898 = vmatpush2.msra.mxu0 0.0
        %1899 = vmatprep.subr.mxu0 0.0
        %1900 = vmatpush2.msra.mxu0 0.0
        %1901 = vmatprep.subr.mxu0 0.0
        %1902 = vmatpush2.msra.mxu0 0.0
        %1903 = vmatprep.subr.mxu0 0.0
        %1904 = vmatpush2.msra.mxu0 0.0
        %1905 = vmatprep.subr.mxu0 0.0
        %1906 = vmatpush2.msra.mxu0 0.0
        %1907 = vmatprep.subr.mxu0 0.0
        %1908 = vmatpush2.msra.mxu0 0.0
        %1909 = vmatprep.subr.mxu0 0.0
        %1910 = vmatpush2.msra.mxu0 0.0
        %1911 = vmatprep.subr.mxu0 0.0
        %1912 = vmatpush2.msra.mxu0 0.0
        %1913 = vmatprep.subr.mxu0 0.0
        %1914 = vmatpush2.msra.mxu0 0.0
        %1915 = vmatprep.subr.mxu0 0.0
        %1916 = vmatpush2.msra.mxu0 0.0
        %1917 = vmatprep.subr.mxu0 0.0
        %1918 = vmatpush2.msra.mxu0 0.0
        %1919 = vmatprep.subr.mxu0 0.0
        %1920 = vmatpush2.msra.mxu0 0.0
        %1921 = vmatprep.subr.mxu0 0.0
        %1922 = vmatpush2.msra.mxu0 0.0
        %1923 = vmatprep.mubr.f32.mxu0 0.0
        %1924 = vmatmul.mubr.f32.gmra.mxu0 %v1854
        %v1925 = vpop.f32.mrf.mxu0
        %v1926 = vadd.f32 %v1851, %v1925
        %v1927 = vpop.f32.mrf.mxu0
        %1928 = vmatprep.mubr.f32.mxu0 0.0
        %1929 = vmatmul.mubr.f32.gmra.mxu0 %v1857
        %v1930 = vpop.f32.mrf.mxu0
        %v1931 = vadd.f32 %v1851, %v1930
        %v1932 = vpop.f32.mrf.mxu0
        %1933 = vdwg.mxu0
        %v1934 = vmul.f32 %v1926, 0.5
        %v1935 = vmul.f32 %v1931, 0.5
        %v1936 = vmul.f32 %v1926, 0.044715
        %v1937 = vmul.f32 %v1931, 0.044715
        %v1938 = vmul.f32 %v1936, %v1926
        %v1939 = vmul.f32 %v1937, %v1931
        %v1940 = vmul.f32 %v1938, %v1926
        %v1941 = vmul.f32 %v1939, %v1931
        %v1942 = vadd.f32 %v1926, %v1940
        %v1943 = vadd.f32 %v1931, %v1941
        %v1944 = vmul.f32 %v1942, 0.7978846
        %v1945 = vmul.f32 %v1943, 0.7978846
        %v1946 = vtanh.pop %v1944
        %v1947 = vtanh.pop %v1945
        %v1948 = vadd.f32 %v1946, 1.0
        %v1949 = vadd.f32 %v1947, 1.0
        %v1950 = vmul.f32 %v1934, %v1948
        %v1951 = vmul.f32 %v1935, %v1949
        %v1952 = vld [vmem:[%s832] sm:$0xff]
        %v1953 = vld [vmem:[%s832 + $0x8] sm:$0xff]
        %v1954 = vld [vmem:[%s832 + $0x10] sm:$0xff]
        %v1955 = vld [vmem:[%s832 + $0x18] sm:$0xff]
        %v1956 = vld [vmem:[%s832 + $0x20] sm:$0xff]
        %v1957 = vld [vmem:[%s832 + $0x28] sm:$0xff]
        %v1958 = vld [vmem:[%s832 + $0x30] sm:$0xff]
        %v1959 = vld [vmem:[%s832 + $0x38] sm:$0xff]
        %v1960 = vld [vmem:[%s835] sm:$0x1]
        %v1962 = vlaneseq
        %v1963 = vshrl.u32 %v1962, 7
        %v1964 = vsub.s32 0, %v1963
        %v1965 = vrot.slane %v1960, %v1964
        %vm1967 = vcmask 523264
        %v1969 = vsel %vm1967, %v1950, 0
        %v1972 = vsel %vm1967, %v1951, 0
        %1974 = vmatprep.subr.mxu0 0.0
        %1975 = vmatpush1.msra.mxu0 0.0
        %1976 = vmatprep.subr.mxu0 0.0
        %1977 = vmatpush1.msra.mxu0 0.0
        %1978 = vmatprep.subr.mxu0 0.0
        %1979 = vmatpush1.msra.mxu0 0.0
        %1980 = vmatprep.subr.mxu0 0.0
        %1981 = vmatpush1.msra.mxu0 0.0
        %1982 = vmatprep.subr.mxu0 0.0
        %1983 = vmatpush1.msra.mxu0 0.0
        %1984 = vmatprep.subr.mxu0 0.0
        %1985 = vmatpush1.msra.mxu0 0.0
        %1986 = vmatprep.subr.mxu0 0.0
        %1987 = vmatpush1.msra.mxu0 0.0
        %1988 = vmatprep.subr.mxu0 0.0
        %1989 = vmatpush1.msra.mxu0 0.0
        %1990 = vmatprep.subr.mxu0 0.0
        %1991 = vmatpush1.msra.mxu0 %v1959
        %1992 = vmatprep.subr.mxu0 0.0
        %1993 = vmatpush1.msra.mxu0 %v1958
        %1994 = vmatprep.subr.mxu0 0.0
        %1995 = vmatpush1.msra.mxu0 %v1957
        %1996 = vmatprep.subr.mxu0 0.0
        %1997 = vmatpush1.msra.mxu0 %v1956
        %1998 = vmatprep.subr.mxu0 0.0
        %1999 = vmatpush1.msra.mxu0 %v1955
        %2000 = vmatprep.subr.mxu0 0.0
        %2001 = vmatpush1.msra.mxu0 %v1954
        %2002 = vmatprep.subr.mxu0 0.0
        %2003 = vmatpush1.msra.mxu0 %v1953
        %2004 = vmatprep.subr.mxu0 0.0
        %2005 = vmatpush1.msra.mxu0 %v1952
        %2006 = vmatprep.subr.mxu0 0.0
        %2007 = vmatpush2.msra.mxu0 0.0
        %2008 = vmatprep.subr.mxu0 0.0
        %2009 = vmatpush2.msra.mxu0 0.0
        %2010 = vmatprep.subr.mxu0 0.0
        %2011 = vmatpush2.msra.mxu0 0.0
        %2012 = vmatprep.subr.mxu0 0.0
        %2013 = vmatpush2.msra.mxu0 0.0
        %2014 = vmatprep.subr.mxu0 0.0
        %2015 = vmatpush2.msra.mxu0 0.0
        %2016 = vmatprep.subr.mxu0 0.0
        %2017 = vmatpush2.msra.mxu0 0.0
        %2018 = vmatprep.subr.mxu0 0.0
        %2019 = vmatpush2.msra.mxu0 0.0
        %2020 = vmatprep.subr.mxu0 0.0
        %2021 = vmatpush2.msra.mxu0 0.0
        %2022 = vmatprep.subr.mxu0 0.0
        %2023 = vmatpush2.msra.mxu0 0.0
        %2024 = vmatprep.subr.mxu0 0.0
        %2025 = vmatpush2.msra.mxu0 0.0
        %2026 = vmatprep.subr.mxu0 0.0
        %2027 = vmatpush2.msra.mxu0 0.0
        %2028 = vmatprep.subr.mxu0 0.0
        %2029 = vmatpush2.msra.mxu0 0.0
        %2030 = vmatprep.subr.mxu0 0.0
        %2031 = vmatpush2.msra.mxu0 0.0
        %2032 = vmatprep.subr.mxu0 0.0
        %2033 = vmatpush2.msra.mxu0 0.0
        %2034 = vmatprep.subr.mxu0 0.0
        %2035 = vmatpush2.msra.mxu0 0.0
        %2036 = vmatprep.subr.mxu0 0.0
        %2037 = vmatpush2.msra.mxu0 0.0
        %2038 = vmatprep.mubr.f32.mxu0 0.0
        %2039 = vmatmul.mubr.f32.gmra.mxu0 %v1969
        %v2040 = vpop.f32.mrf.mxu0
        %v2041 = vadd.f32 %v1965, %v2040
        %v2042 = vpop.f32.mrf.mxu0
        %2043 = vmatprep.mubr.f32.mxu0 0.0
        %2044 = vmatmul.mubr.f32.gmra.mxu0 %v1972
        %v2045 = vpop.f32.mrf.mxu0
        %v2046 = vadd.f32 %v1965, %v2045
        %v2047 = vpop.f32.mrf.mxu0
        %2048 = vdwg.mxu0
        %v2049 = vadd.f32 %v2041, %v1840
        %v2050 = vadd.f32 %v2046, %v1841
        %v2051 = vld [vmem:[%s838] sm:$0x1]
        %v2052 = vld [vmem:[%s841] sm:$0x1]
        %v2053 = vsel %vm909, %v2049, 0.0
        %2054 = vadd.xlane.f32.xlu0 %v2053
        %v2055 = vpop.xlane.xlu0 %2054
        %v2056 = vsel %vm909, %v2050, 0.0
        %2057 = vadd.xlane.f32.xlu0 %v2056
        %v2058 = vpop.xlane.xlu0 %2057
        %v2059 = vmul.f32 %v2055, %v1805
        %v2060 = vmul.f32 %v2058, %v1805
        %v2061 = vsub.f32 %v2049, %v2059
        %v2062 = vsub.f32 %v2050, %v2060
        %v2063 = vmul.f32 %v2061, %v2061
        %v2064 = vmul.f32 %v2062, %v2062
        %v2065 = vsel %vm909, %v2063, 0.0
        %2066 = vadd.xlane.f32.xlu0 %v2065
        %v2067 = vpop.xlane.xlu0 %2066
        %v2068 = vsel %vm909, %v2064, 0.0
        %2069 = vadd.xlane.f32.xlu0 %v2068
        %v2070 = vpop.xlane.xlu0 %2069
        %v2071 = vmul.f32 %v2067, %v1805
        %v2072 = vmul.f32 %v2070, %v1805
        %v2073 = vadd.f32 %v2071, 1e-12
        %v2074 = vadd.f32 %v2072, 1e-12
        %v2075 = vrsqrt.pop %v2073
        %v2076 = vrsqrt.pop %v2074
        %v2077 = vmul.f32 %v2061, %v2075
        %v2078 = vmul.f32 %v2062, %v2076
        %v2080 = vlaneseq
        %v2081 = vshrl.u32 %v2080, 7
        %v2082 = vsub.s32 0, %v2081
        %v2083 = vrot.slane %v2051, %v2082
        %v2085 = vmul.f32 %v2077, %v2083
        %v2086 = vmul.f32 %v2078, %v2083
        %v2088 = vlaneseq
        %v2089 = vshrl.u32 %v2088, 7
        %v2090 = vsub.s32 0, %v2089
        %v2091 = vrot.slane %v2052, %v2090
        %v2093 = vadd.f32 %v2085, %v2091
        %v2094 = vadd.f32 %v2086, %v2091
        %2095 = vst.msk [vmem:[#allocation2] sm:$0xff] %vm909, %v2093
        %2096 = vst.msk [vmem:[#allocation2 + $0x8] sm:$0xff] %vm909, %v2094
        %p2097 = scmp.eq.s32.totalorder %s34, 1
        // Predicated region
        $region113: #{forward.1} parent=107 // pred_check
          %p2098 = pneg %p2097
        $region114: #{forward.1} parent=107 // pred_check_branch
          %2100 = sbr.rel (%p2098) target = $region116
        $region115: #{forward.1} parent=107 // pred_region
          %v2101 = vld [vmem:[%s16] sm:$0xff]
          %v2102 = vld [vmem:[%s16 + $0x8] sm:$0xff]
          %v2103 = vld [vmem:[%s16 + $0x10] sm:$0xff]
          %v2104 = vld [vmem:[%s16 + $0x18] sm:$0xff]
          %v2105 = vld [vmem:[%s17] sm:$0x1]
          %v2107 = vlaneseq
          %v2108 = vshrl.u32 %v2107, 7
          %v2109 = vsub.s32 0, %v2108
          %v2110 = vrot.slane %v2105, %v2109
          %v2113 = vsel %vm909, %v2093, 0
          %v2116 = vsel %vm909, %v2094, 0
          %2118 = vmatprep.subr.mxu0 0.0
          %2119 = vmatpush1.msra.mxu0 0.0
          %2120 = vmatprep.subr.mxu0 0.0
          %2121 = vmatpush1.msra.mxu0 0.0
          %2122 = vmatprep.subr.mxu0 0.0
          %2123 = vmatpush1.msra.mxu0 0.0
          %2124 = vmatprep.subr.mxu0 0.0
          %2125 = vmatpush1.msra.mxu0 0.0
          %2126 = vmatprep.subr.mxu0 0.0
          %2127 = vmatpush1.msra.mxu0 0.0
          %2128 = vmatprep.subr.mxu0 0.0
          %2129 = vmatpush1.msra.mxu0 0.0
          %2130 = vmatprep.subr.mxu0 0.0
          %2131 = vmatpush1.msra.mxu0 0.0
          %2132 = vmatprep.subr.mxu0 0.0
          %2133 = vmatpush1.msra.mxu0 0.0
          %2134 = vmatprep.subr.mxu0 0.0
          %2135 = vmatpush1.msra.mxu0 0.0
          %2136 = vmatprep.subr.mxu0 0.0
          %2137 = vmatpush1.msra.mxu0 0.0
          %2138 = vmatprep.subr.mxu0 0.0
          %2139 = vmatpush1.msra.mxu0 0.0
          %2140 = vmatprep.subr.mxu0 0.0
          %2141 = vmatpush1.msra.mxu0 0.0
          %2142 = vmatprep.subr.mxu0 0.0
          %2143 = vmatpush1.msra.mxu0 %v2104
          %2144 = vmatprep.subr.mxu0 0.0
          %2145 = vmatpush1.msra.mxu0 %v2103
          %2146 = vmatprep.subr.mxu0 0.0
          %2147 = vmatpush1.msra.mxu0 %v2102
          %2148 = vmatprep.subr.mxu0 0.0
          %2149 = vmatpush1.msra.mxu0 %v2101
          %2150 = vmatprep.subr.mxu0 0.0
          %2151 = vmatpush2.msra.mxu0 0.0
          %2152 = vmatprep.subr.mxu0 0.0
          %2153 = vmatpush2.msra.mxu0 0.0
          %2154 = vmatprep.subr.mxu0 0.0
          %2155 = vmatpush2.msra.mxu0 0.0
          %2156 = vmatprep.subr.mxu0 0.0
          %2157 = vmatpush2.msra.mxu0 0.0
          %2158 = vmatprep.subr.mxu0 0.0
          %2159 = vmatpush2.msra.mxu0 0.0
          %2160 = vmatprep.subr.mxu0 0.0
          %2161 = vmatpush2.msra.mxu0 0.0
          %2162 = vmatprep.subr.mxu0 0.0
          %2163 = vmatpush2.msra.mxu0 0.0
          %2164 = vmatprep.subr.mxu0 0.0
          %2165 = vmatpush2.msra.mxu0 0.0
          %2166 = vmatprep.subr.mxu0 0.0
          %2167 = vmatpush2.msra.mxu0 0.0
          %2168 = vmatprep.subr.mxu0 0.0
          %2169 = vmatpush2.msra.mxu0 0.0
          %2170 = vmatprep.subr.mxu0 0.0
          %2171 = vmatpush2.msra.mxu0 0.0
          %2172 = vmatprep.subr.mxu0 0.0
          %2173 = vmatpush2.msra.mxu0 0.0
          %2174 = vmatprep.subr.mxu0 0.0
          %2175 = vmatpush2.msra.mxu0 0.0
          %2176 = vmatprep.subr.mxu0 0.0
          %2177 = vmatpush2.msra.mxu0 0.0
          %2178 = vmatprep.subr.mxu0 0.0
          %2179 = vmatpush2.msra.mxu0 0.0
          %2180 = vmatprep.subr.mxu0 0.0
          %2181 = vmatpush2.msra.mxu0 0.0
          %2182 = vmatprep.mubr.f32.mxu0 0.0
          %2183 = vmatmul.mubr.f32.gmra.mxu0 %v2113
          %v2184 = vpop.f32.mrf.mxu0
          %v2185 = vadd.f32 %v2110, %v2184
          %v2186 = vpop.f32.mrf.mxu0
          %2187 = vmatprep.mubr.f32.mxu0 0.0
          %2188 = vmatmul.mubr.f32.gmra.mxu0 %v2116
          %v2189 = vpop.f32.mrf.mxu0
          %v2190 = vadd.f32 %v2110, %v2189
          %v2191 = vpop.f32.mrf.mxu0
          %2192 = vdwg.mxu0
          %v2193 = vld [vmem:[%s18] sm:$0xff]
          %v2194 = vld [vmem:[%s18 + $0x8] sm:$0xff]
          %v2196 = vsel %vm995, 0.0, 0
          %2198 = vmatprep.subr.mxu0 0.0
          %2199 = vmatpush1.msra.mxu0 0.0
          %2200 = vmatprep.subr.mxu0 0.0
          %2201 = vmatpush1.msra.mxu0 0.0
          %2202 = vmatprep.subr.mxu0 0.0
          %2203 = vmatpush1.msra.mxu0 0.0
          %2204 = vmatprep.subr.mxu0 0.0
          %2205 = vmatpush1.msra.mxu0 0.0
          %2206 = vmatprep.subr.mxu0 0.0
          %2207 = vmatpush1.msra.mxu0 0.0
          %2208 = vmatprep.subr.mxu0 0.0
          %2209 = vmatpush1.msra.mxu0 0.0
          %2210 = vmatprep.subr.mxu0 0.0
          %2211 = vmatpush1.msra.mxu0 0.0
          %2212 = vmatprep.subr.mxu0 0.0
          %2213 = vmatpush1.msra.mxu0 0.0
          %2214 = vmatprep.subr.mxu0 0.0
          %2215 = vmatpush1.msra.mxu0 0.0
          %2216 = vmatprep.subr.mxu0 0.0
          %2217 = vmatpush1.msra.mxu0 0.0
          %2218 = vmatprep.subr.mxu0 0.0
          %2219 = vmatpush1.msra.mxu0 0.0
          %2220 = vmatprep.subr.mxu0 0.0
          %2221 = vmatpush1.msra.mxu0 0.0
          %2222 = vmatprep.subr.mxu0 0.0
          %2223 = vmatpush1.msra.mxu0 0.0
          %2224 = vmatprep.subr.mxu0 0.0
          %2225 = vmatpush1.msra.mxu0 0.0
          %2226 = vmatprep.subr.mxu0 0.0
          %2227 = vmatpush1.msra.mxu0 %v2194
          %2228 = vmatprep.subr.mxu0 0.0
          %2229 = vmatpush1.msra.mxu0 %v2193
          %2230 = vmatprep.subr.mxu0 0.0
          %2231 = vmatpush2.msra.mxu0 0.0
          %2232 = vmatprep.subr.mxu0 0.0
          %2233 = vmatpush2.msra.mxu0 0.0
          %2234 = vmatprep.subr.mxu0 0.0
          %2235 = vmatpush2.msra.mxu0 0.0
          %2236 = vmatprep.subr.mxu0 0.0
          %2237 = vmatpush2.msra.mxu0 0.0
          %2238 = vmatprep.subr.mxu0 0.0
          %2239 = vmatpush2.msra.mxu0 0.0
          %2240 = vmatprep.subr.mxu0 0.0
          %2241 = vmatpush2.msra.mxu0 0.0
          %2242 = vmatprep.subr.mxu0 0.0
          %2243 = vmatpush2.msra.mxu0 0.0
          %2244 = vmatprep.subr.mxu0 0.0
          %2245 = vmatpush2.msra.mxu0 0.0
          %2246 = vmatprep.subr.mxu0 0.0
          %2247 = vmatpush2.msra.mxu0 0.0
          %2248 = vmatprep.subr.mxu0 0.0
          %2249 = vmatpush2.msra.mxu0 0.0
          %2250 = vmatprep.subr.mxu0 0.0
          %2251 = vmatpush2.msra.mxu0 0.0
          %2252 = vmatprep.subr.mxu0 0.0
          %2253 = vmatpush2.msra.mxu0 0.0
          %2254 = vmatprep.subr.mxu0 0.0
          %2255 = vmatpush2.msra.mxu0 0.0
          %2256 = vmatprep.subr.mxu0 0.0
          %2257 = vmatpush2.msra.mxu0 0.0
          %2258 = vmatprep.subr.mxu0 0.0
          %2259 = vmatpush2.msra.mxu0 0.0
          %2260 = vmatprep.subr.mxu0 0.0
          %2261 = vmatpush2.msra.mxu0 0.0
          %2262 = vmatprep.mubr.f32.mxu0 0.0
          %2263 = vmatmul.mubr.f32.gmra.mxu0 %v2196
          %v2264 = vpop.f32.mrf.mxu0
          %v2265 = vadd.f32 0.0, %v2264
          %v2266 = vpop.f32.mrf.mxu0
          %2267 = vdwg.mxu0
          %v2269 = vrot.slane %v2265, 1
          %v2272 = vadd.f32 %v2185, %v2265
          %v2273 = vadd.f32 %v2190, %v2269
          %v2274 = vld [vmem:[%s19] sm:$0xff]
          %v2275 = vld [vmem:[%s19 + $0x8] sm:$0xff]
          %2276 = vmatprep.subr.mxu0 0.0
          %2277 = vmatpush1.msra.mxu0 0.0
          %2278 = vmatprep.subr.mxu0 0.0
          %2279 = vmatpush1.msra.mxu0 0.0
          %2280 = vmatprep.subr.mxu0 0.0
          %2281 = vmatpush1.msra.mxu0 0.0
          %2282 = vmatprep.subr.mxu0 0.0
          %2283 = vmatpush1.msra.mxu0 0.0
          %2284 = vmatprep.subr.mxu0 0.0
          %2285 = vmatpush1.msra.mxu0 0.0
          %2286 = vmatprep.subr.mxu0 0.0
          %2287 = vmatpush1.msra.mxu0 0.0
          %2288 = vmatprep.subr.mxu0 0.0
          %2289 = vmatpush1.msra.mxu0 0.0
          %2290 = vmatprep.subr.mxu0 0.0
          %2291 = vmatpush1.msra.mxu0 0.0
          %2292 = vmatprep.subr.mxu0 0.0
          %2293 = vmatpush1.msra.mxu0 0.0
          %2294 = vmatprep.subr.mxu0 0.0
          %2295 = vmatpush1.msra.mxu0 0.0
          %2296 = vmatprep.subr.mxu0 0.0
          %2297 = vmatpush1.msra.mxu0 0.0
          %2298 = vmatprep.subr.mxu0 0.0
          %2299 = vmatpush1.msra.mxu0 0.0
          %2300 = vmatprep.subr.mxu0 0.0
          %2301 = vmatpush1.msra.mxu0 0.0
          %2302 = vmatprep.subr.mxu0 0.0
          %2303 = vmatpush1.msra.mxu0 0.0
          %2304 = vmatprep.subr.mxu0 0.0
          %2305 = vmatpush1.msra.mxu0 %v2275
          %2306 = vmatprep.subr.mxu0 0.0
          %2307 = vmatpush1.msra.mxu0 %v2274
          %2308 = vmatprep.subr.mxu0 0.0
          %2309 = vmatpush2.msra.mxu0 0.0
          %2310 = vmatprep.subr.mxu0 0.0
          %2311 = vmatpush2.msra.mxu0 0.0
          %2312 = vmatprep.subr.mxu0 0.0
          %2313 = vmatpush2.msra.mxu0 0.0
          %2314 = vmatprep.subr.mxu0 0.0
          %2315 = vmatpush2.msra.mxu0 0.0
          %2316 = vmatprep.subr.mxu0 0.0
          %2317 = vmatpush2.msra.mxu0 0.0
          %2318 = vmatprep.subr.mxu0 0.0
          %2319 = vmatpush2.msra.mxu0 0.0
          %2320 = vmatprep.subr.mxu0 0.0
          %2321 = vmatpush2.msra.mxu0 0.0
          %2322 = vmatprep.subr.mxu0 0.0
          %2323 = vmatpush2.msra.mxu0 0.0
          %2324 = vmatprep.subr.mxu0 0.0
          %2325 = vmatpush2.msra.mxu0 0.0
          %2326 = vmatprep.subr.mxu0 0.0
          %2327 = vmatpush2.msra.mxu0 0.0
          %2328 = vmatprep.subr.mxu0 0.0
          %2329 = vmatpush2.msra.mxu0 0.0
          %2330 = vmatprep.subr.mxu0 0.0
          %2331 = vmatpush2.msra.mxu0 0.0
          %2332 = vmatprep.subr.mxu0 0.0
          %2333 = vmatpush2.msra.mxu0 0.0
          %2334 = vmatprep.subr.mxu0 0.0
          %2335 = vmatpush2.msra.mxu0 0.0
          %2336 = vmatprep.subr.mxu0 0.0
          %2337 = vmatpush2.msra.mxu0 0.0
          %2338 = vmatprep.subr.mxu0 0.0
          %2339 = vmatpush2.msra.mxu0 0.0
          %2340 = vmatprep.mubr.f32.mxu0 0.0
          %2341 = vmatmul.mubr.f32.gmra.mxu0 %v2196
          %v2342 = vpop.f32.mrf.mxu0
          %v2343 = vadd.f32 0.0, %v2342
          %v2344 = vpop.f32.mrf.mxu0
          %2345 = vdwg.mxu0
          %v2347 = vrot.slane %v2343, 1
          %v2348 = vrot.slane %v2343, 2
          %2349 = vrot.lane.b32.xlu0 %v2347, 64
          %v2350 = vpop.permute.xlu0 %2349
          %2351 = vrot.lane.b32.xlu0 %v2348, 64
          %v2352 = vpop.permute.xlu0 %2351
          %v2355 = vadd.f32 %v2185, %v2350
          %v2356 = vadd.f32 %v2190, %v2352
          %v2357 = vsub.f32 0.0, %v2272
          %v2358 = vsub.f32 0.0, %v2273
          %v2359 = vmul.f32 %v2357, 1.442695
          %v2360 = vpow.pop %v2359
          %v2361 = vmul.f32 %v2358, 1.442695
          %v2362 = vpow.pop %v2361
          %v2363 = vadd.f32 %v2360, 1.0
          %v2364 = vadd.f32 %v2362, 1.0
          %v2365 = vrcp.pop %v2363
          %v2366 = vmul.f32 1.0, %v2365
          %v2367 = vrcp.pop %v2364
          %v2368 = vmul.f32 1.0, %v2367
          %v2369 = vtanh.pop %v2272
          %v2370 = vtanh.pop %v2273
          %v2371 = vmul.f32 %v2366, 0.0
          %v2372 = vmul.f32 %v2368, 0.0
          %2375 = vrot.lane.b32.xlu0 %v2369, 80
          %v2376 = vpop.permute.xlu0 %2375
          %2377 = vrot.lane.b32.xlu0 %v2370, 80
          %v2378 = vpop.permute.xlu0 %2377
          %v2381 = vmul.f32 %v2366, %v2376
          %v2382 = vmul.f32 %v2368, %v2378
          %2385 = vrot.lane.b32.xlu0 %v2381, 16
          %v2386 = vpop.permute.xlu0 %2385
          %2387 = vrot.lane.b32.xlu0 %v2382, 16
          %v2388 = vpop.permute.xlu0 %2387
          %v2391 = vadd.f32 %v2371, %v2386
          %v2392 = vadd.f32 %v2372, %v2388
          %v2393 = vtanh.pop %v2391
          %v2394 = vtanh.pop %v2392
          %2397 = vrot.lane.b32.xlu0 %v2393, 16
          %v2398 = vpop.permute.xlu0 %2397
          %2399 = vrot.lane.b32.xlu0 %v2394, 16
          %v2400 = vpop.permute.xlu0 %2399
          %v2403 = vmul.f32 %v2366, %v2398
          %v2404 = vmul.f32 %v2368, %v2400
          %v2405 = vsub.f32 0.0, %v2355
          %v2406 = vsub.f32 0.0, %v2356
          %v2407 = vmul.f32 %v2405, 1.442695
          %v2408 = vpow.pop %v2407
          %v2409 = vmul.f32 %v2406, 1.442695
          %v2410 = vpow.pop %v2409
          %v2411 = vadd.f32 %v2408, 1.0
          %v2412 = vadd.f32 %v2410, 1.0
          %v2413 = vrcp.pop %v2411
          %v2414 = vmul.f32 1.0, %v2413
          %v2415 = vrcp.pop %v2412
          %v2416 = vmul.f32 1.0, %v2415
          %v2417 = vtanh.pop %v2355
          %v2418 = vtanh.pop %v2356
          %v2419 = vmul.f32 %v2414, 0.0
          %v2420 = vmul.f32 %v2416, 0.0
          %2423 = vrot.lane.b32.xlu0 %v2417, 80
          %v2424 = vpop.permute.xlu0 %2423
          %2425 = vrot.lane.b32.xlu0 %v2418, 80
          %v2426 = vpop.permute.xlu0 %2425
          %v2429 = vmul.f32 %v2414, %v2424
          %v2430 = vmul.f32 %v2416, %v2426
          %2433 = vrot.lane.b32.xlu0 %v2429, 16
          %v2434 = vpop.permute.xlu0 %2433
          %2435 = vrot.lane.b32.xlu0 %v2430, 16
          %v2436 = vpop.permute.xlu0 %2435
          %v2439 = vadd.f32 %v2419, %v2434
          %v2440 = vadd.f32 %v2420, %v2436
          %v2441 = vtanh.pop %v2439
          %v2442 = vtanh.pop %v2440
          %2445 = vrot.lane.b32.xlu0 %v2441, 16
          %v2446 = vpop.permute.xlu0 %2445
          %2447 = vrot.lane.b32.xlu0 %v2442, 16
          %v2448 = vpop.permute.xlu0 %2447
          %v2451 = vmul.f32 %v2414, %v2446
          %v2452 = vmul.f32 %v2416, %v2448
          %v2453 = vadd.f32 %v2403, 0.0
          %v2454 = vadd.f32 %v2404, 0.0
          %v2455 = vadd.f32 %v2451, 0.0
          %v2456 = vadd.f32 %v2452, 0.0
          %v2459 = vrot.slane %v2404, 7
          %vm2460 = vcmask 1041409
          %v2461 = vsel %vm2460, %v2459, %v2403
          %2462 = vrot.lane.b32.xlu0 %v2461, 96
          %v2463 = vpop.permute.xlu0 %2462
          %v2464 = vsel %vm995, %v2463, 0
          %2466 = vmatprep.subr.mxu0 0.0
          %2467 = vmatpush1.msra.mxu0 0.0
          %2468 = vmatprep.subr.mxu0 0.0
          %2469 = vmatpush1.msra.mxu0 0.0
          %2470 = vmatprep.subr.mxu0 0.0
          %2471 = vmatpush1.msra.mxu0 0.0
          %2472 = vmatprep.subr.mxu0 0.0
          %2473 = vmatpush1.msra.mxu0 0.0
          %2474 = vmatprep.subr.mxu0 0.0
          %2475 = vmatpush1.msra.mxu0 0.0
          %2476 = vmatprep.subr.mxu0 0.0
          %2477 = vmatpush1.msra.mxu0 0.0
          %2478 = vmatprep.subr.mxu0 0.0
          %2479 = vmatpush1.msra.mxu0 0.0
          %2480 = vmatprep.subr.mxu0 0.0
          %2481 = vmatpush1.msra.mxu0 0.0
          %2482 = vmatprep.subr.mxu0 0.0
          %2483 = vmatpush1.msra.mxu0 0.0
          %2484 = vmatprep.subr.mxu0 0.0
          %2485 = vmatpush1.msra.mxu0 0.0
          %2486 = vmatprep.subr.mxu0 0.0
          %2487 = vmatpush1.msra.mxu0 0.0
          %2488 = vmatprep.subr.mxu0 0.0
          %2489 = vmatpush1.msra.mxu0 0.0
          %2490 = vmatprep.subr.mxu0 0.0
          %2491 = vmatpush1.msra.mxu0 0.0
          %2492 = vmatprep.subr.mxu0 0.0
          %2493 = vmatpush1.msra.mxu0 0.0
          %2494 = vmatprep.subr.mxu0 0.0
          %2495 = vmatpush1.msra.mxu0 %v2194
          %2496 = vmatprep.subr.mxu0 0.0
          %2497 = vmatpush1.msra.mxu0 %v2193
          %2498 = vmatprep.subr.mxu0 0.0
          %2499 = vmatpush2.msra.mxu0 0.0
          %2500 = vmatprep.subr.mxu0 0.0
          %2501 = vmatpush2.msra.mxu0 0.0
          %2502 = vmatprep.subr.mxu0 0.0
          %2503 = vmatpush2.msra.mxu0 0.0
          %2504 = vmatprep.subr.mxu0 0.0
          %2505 = vmatpush2.msra.mxu0 0.0
          %2506 = vmatprep.subr.mxu0 0.0
          %2507 = vmatpush2.msra.mxu0 0.0
          %2508 = vmatprep.subr.mxu0 0.0
          %2509 = vmatpush2.msra.mxu0 0.0
          %2510 = vmatprep.subr.mxu0 0.0
          %2511 = vmatpush2.msra.mxu0 0.0
          %2512 = vmatprep.subr.mxu0 0.0
          %2513 = vmatpush2.msra.mxu0 0.0
          %2514 = vmatprep.subr.mxu0 0.0
          %2515 = vmatpush2.msra.mxu0 0.0
          %2516 = vmatprep.subr.mxu0 0.0
          %2517 = vmatpush2.msra.mxu0 0.0
          %2518 = vmatprep.subr.mxu0 0.0
          %2519 = vmatpush2.msra.mxu0 0.0
          %2520 = vmatprep.subr.mxu0 0.0
          %2521 = vmatpush2.msra.mxu0 0.0
          %2522 = vmatprep.subr.mxu0 0.0
          %2523 = vmatpush2.msra.mxu0 0.0
          %2524 = vmatprep.subr.mxu0 0.0
          %2525 = vmatpush2.msra.mxu0 0.0
          %2526 = vmatprep.subr.mxu0 0.0
          %2527 = vmatpush2.msra.mxu0 0.0
          %2528 = vmatprep.subr.mxu0 0.0
          %2529 = vmatpush2.msra.mxu0 0.0
          %2530 = vmatprep.mubr.f32.mxu0 0.0
          %2531 = vmatmul.mubr.f32.gmra.mxu0 %v2464
          %v2532 = vpop.f32.mrf.mxu0
          %v2533 = vadd.f32 0.0, %v2532
          %v2534 = vpop.f32.mrf.mxu0
          %2535 = vdwg.mxu0
          %v2537 = vrot.slane %v2533, 7
          %v2540 = vadd.f32 %v2185, %v2537
          %v2541 = vadd.f32 %v2190, %v2533
          %v2544 = vrot.slane %v2451, 7
          %v2545 = vrot.slane %v2452, 6
          %v2546 = vsel %vm2460, %v2545, %v2544
          %2547 = vrot.lane.b32.xlu0 %v2546, 32
          %v2548 = vpop.permute.xlu0 %2547
          %v2549 = vsel %vm995, %v2548, 0
          %2551 = vmatprep.subr.mxu0 0.0
          %2552 = vmatpush1.msra.mxu0 0.0
          %2553 = vmatprep.subr.mxu0 0.0
          %2554 = vmatpush1.msra.mxu0 0.0
          %2555 = vmatprep.subr.mxu0 0.0
          %2556 = vmatpush1.msra.mxu0 0.0
          %2557 = vmatprep.subr.mxu0 0.0
          %2558 = vmatpush1.msra.mxu0 0.0
          %2559 = vmatprep.subr.mxu0 0.0
          %2560 = vmatpush1.msra.mxu0 0.0
          %2561 = vmatprep.subr.mxu0 0.0
          %2562 = vmatpush1.msra.mxu0 0.0
          %2563 = vmatprep.subr.mxu0 0.0
          %2564 = vmatpush1.msra.mxu0 0.0
          %2565 = vmatprep.subr.mxu0 0.0
          %2566 = vmatpush1.msra.mxu0 0.0
          %2567 = vmatprep.subr.mxu0 0.0
          %2568 = vmatpush1.msra.mxu0 0.0
          %2569 = vmatprep.subr.mxu0 0.0
          %2570 = vmatpush1.msra.mxu0 0.0
          %2571 = vmatprep.subr.mxu0 0.0
          %2572 = vmatpush1.msra.mxu0 0.0
          %2573 = vmatprep.subr.mxu0 0.0
          %2574 = vmatpush1.msra.mxu0 0.0
          %2575 = vmatprep.subr.mxu0 0.0
          %2576 = vmatpush1.msra.mxu0 0.0
          %2577 = vmatprep.subr.mxu0 0.0
          %2578 = vmatpush1.msra.mxu0 0.0
          %2579 = vmatprep.subr.mxu0 0.0
          %2580 = vmatpush1.msra.mxu0 %v2275
          %2581 = vmatprep.subr.mxu0 0.0
          %2582 = vmatpush1.msra.mxu0 %v2274
          %2583 = vmatprep.subr.mxu0 0.0
          %2584 = vmatpush2.msra.mxu0 0.0
          %2585 = vmatprep.subr.mxu0 0.0
          %2586 = vmatpush2.msra.mxu0 0.0
          %2587 = vmatprep.subr.mxu0 0.0
          %2588 = vmatpush2.msra.mxu0 0.0
          %2589 = vmatprep.subr.mxu0 0.0
          %2590 = vmatpush2.msra.mxu0 0.0
          %2591 = vmatprep.subr.mxu0 0.0
          %2592 = vmatpush2.msra.mxu0 0.0
          %2593 = vmatprep.subr.mxu0 0.0
          %2594 = vmatpush2.msra.mxu0 0.0
          %2595 = vmatprep.subr.mxu0 0.0
          %2596 = vmatpush2.msra.mxu0 0.0
          %2597 = vmatprep.subr.mxu0 0.0
          %2598 = vmatpush2.msra.mxu0 0.0
          %2599 = vmatprep.subr.mxu0 0.0
          %2600 = vmatpush2.msra.mxu0 0.0
          %2601 = vmatprep.subr.mxu0 0.0
          %2602 = vmatpush2.msra.mxu0 0.0
          %2603 = vmatprep.subr.mxu0 0.0
          %2604 = vmatpush2.msra.mxu0 0.0
          %2605 = vmatprep.subr.mxu0 0.0
          %2606 = vmatpush2.msra.mxu0 0.0
          %2607 = vmatprep.subr.mxu0 0.0
          %2608 = vmatpush2.msra.mxu0 0.0
          %2609 = vmatprep.subr.mxu0 0.0
          %2610 = vmatpush2.msra.mxu0 0.0
          %2611 = vmatprep.subr.mxu0 0.0
          %2612 = vmatpush2.msra.mxu0 0.0
          %2613 = vmatprep.subr.mxu0 0.0
          %2614 = vmatpush2.msra.mxu0 0.0
          %2615 = vmatprep.mubr.f32.mxu0 0.0
          %2616 = vmatmul.mubr.f32.gmra.mxu0 %v2549
          %v2617 = vpop.f32.mrf.mxu0
          %v2618 = vadd.f32 0.0, %v2617
          %v2619 = vpop.f32.mrf.mxu0
          %2620 = vdwg.mxu0
          %v2622 = vrot.slane %v2618, 2
          %v2623 = vrot.slane %v2618, 3
          %2624 = vrot.lane.b32.xlu0 %v2622, 64
          %v2625 = vpop.permute.xlu0 %2624
          %2626 = vrot.lane.b32.xlu0 %v2623, 64
          %v2627 = vpop.permute.xlu0 %2626
          %v2630 = vadd.f32 %v2185, %v2625
          %v2631 = vadd.f32 %v2190, %v2627
          %v2632 = vsub.f32 0.0, %v2540
          %v2633 = vsub.f32 0.0, %v2541
          %v2634 = vmul.f32 %v2632, 1.442695
          %v2635 = vpow.pop %v2634
          %v2636 = vmul.f32 %v2633, 1.442695
          %v2637 = vpow.pop %v2636
          %v2638 = vadd.f32 %v2635, 1.0
          %v2639 = vadd.f32 %v2637, 1.0
          %v2640 = vrcp.pop %v2638
          %v2641 = vmul.f32 1.0, %v2640
          %v2642 = vrcp.pop %v2639
          %v2643 = vmul.f32 1.0, %v2642
          %v2644 = vtanh.pop %v2540
          %v2645 = vtanh.pop %v2541
          %v2648 = vrot.slane %v2391, 7
          %v2649 = vrot.slane %v2392, 7
          %v2652 = vmul.f32 %v2641, %v2648
          %v2653 = vmul.f32 %v2643, %v2649
          %2656 = vrot.lane.b32.xlu0 %v2644, 80
          %v2657 = vpop.permute.xlu0 %2656
          %2658 = vrot.lane.b32.xlu0 %v2645, 80
          %v2659 = vpop.permute.xlu0 %2658
          %v2662 = vmul.f32 %v2641, %v2657
          %v2663 = vmul.f32 %v2643, %v2659
          %2666 = vrot.lane.b32.xlu0 %v2662, 16
          %v2667 = vpop.permute.xlu0 %2666
          %2668 = vrot.lane.b32.xlu0 %v2663, 16
          %v2669 = vpop.permute.xlu0 %2668
          %v2672 = vadd.f32 %v2652, %v2667
          %v2673 = vadd.f32 %v2653, %v2669
          %v2674 = vtanh.pop %v2672
          %v2675 = vtanh.pop %v2673
          %2678 = vrot.lane.b32.xlu0 %v2674, 16
          %v2679 = vpop.permute.xlu0 %2678
          %2680 = vrot.lane.b32.xlu0 %v2675, 16
          %v2681 = vpop.permute.xlu0 %2680
          %v2684 = vmul.f32 %v2641, %v2679
          %v2685 = vmul.f32 %v2643, %v2681
          %v2686 = vsub.f32 0.0, %v2630
          %v2687 = vsub.f32 0.0, %v2631
          %v2688 = vmul.f32 %v2686, 1.442695
          %v2689 = vpow.pop %v2688
          %v2690 = vmul.f32 %v2687, 1.442695
          %v2691 = vpow.pop %v2690
          %v2692 = vadd.f32 %v2689, 1.0
          %v2693 = vadd.f32 %v2691, 1.0
          %v2694 = vrcp.pop %v2692
          %v2695 = vmul.f32 1.0, %v2694
          %v2696 = vrcp.pop %v2693
          %v2697 = vmul.f32 1.0, %v2696
          %v2698 = vtanh.pop %v2630
          %v2699 = vtanh.pop %v2631
          %v2702 = vrot.slane %v2439, 1
          %v2703 = vrot.slane %v2440, 1
          %v2706 = vmul.f32 %v2695, %v2702
          %v2707 = vmul.f32 %v2697, %v2703
          %2710 = vrot.lane.b32.xlu0 %v2698, 80
          %v2711 = vpop.permute.xlu0 %2710
          %2712 = vrot.lane.b32.xlu0 %v2699, 80
          %v2713 = vpop.permute.xlu0 %2712
          %v2716 = vmul.f32 %v2695, %v2711
          %v2717 = vmul.f32 %v2697, %v2713
          %2720 = vrot.lane.b32.xlu0 %v2716, 16
          %v2721 = vpop.permute.xlu0 %2720
          %2722 = vrot.lane.b32.xlu0 %v2717, 16
          %v2723 = vpop.permute.xlu0 %2722
          %v2726 = vadd.f32 %v2706, %v2721
          %v2727 = vadd.f32 %v2707, %v2723
          %v2728 = vtanh.pop %v2726
          %v2729 = vtanh.pop %v2727
          %2732 = vrot.lane.b32.xlu0 %v2728, 16
          %v2733 = vpop.permute.xlu0 %2732
          %2734 = vrot.lane.b32.xlu0 %v2729, 16
          %v2735 = vpop.permute.xlu0 %2734
          %v2738 = vmul.f32 %v2695, %v2733
          %v2739 = vmul.f32 %v2697, %v2735
          %v2742 = vrot.slane %v2684, 1
          %v2743 = vrot.slane %v2685, 1
          %v2746 = vadd.f32 %v2453, %v2742
          %v2747 = vadd.f32 %v2454, %v2743
          %v2750 = vrot.slane %v2738, 7
          %v2751 = vrot.slane %v2739, 7
          %v2754 = vadd.f32 %v2455, %v2750
          %v2755 = vadd.f32 %v2456, %v2751
          %v2756 = vsel %vm2460, %v2685, %v2742
          %2757 = vrot.lane.b32.xlu0 %v2756, 96
          %v2758 = vpop.permute.xlu0 %2757
          %v2759 = vsel %vm995, %v2758, 0
          %2761 = vmatprep.subr.mxu0 0.0
          %2762 = vmatpush1.msra.mxu0 0.0
          %2763 = vmatprep.subr.mxu0 0.0
          %2764 = vmatpush1.msra.mxu0 0.0
          %2765 = vmatprep.subr.mxu0 0.0
          %2766 = vmatpush1.msra.mxu0 0.0
          %2767 = vmatprep.subr.mxu0 0.0
          %2768 = vmatpush1.msra.mxu0 0.0
          %2769 = vmatprep.subr.mxu0 0.0
          %2770 = vmatpush1.msra.mxu0 0.0
          %2771 = vmatprep.subr.mxu0 0.0
          %2772 = vmatpush1.msra.mxu0 0.0
          %2773 = vmatprep.subr.mxu0 0.0
          %2774 = vmatpush1.msra.mxu0 0.0
          %2775 = vmatprep.subr.mxu0 0.0
          %2776 = vmatpush1.msra.mxu0 0.0
          %2777 = vmatprep.subr.mxu0 0.0
          %2778 = vmatpush1.msra.mxu0 0.0
          %2779 = vmatprep.subr.mxu0 0.0
          %2780 = vmatpush1.msra.mxu0 0.0
          %2781 = vmatprep.subr.mxu0 0.0
          %2782 = vmatpush1.msra.mxu0 0.0
          %2783 = vmatprep.subr.mxu0 0.0
          %2784 = vmatpush1.msra.mxu0 0.0
          %2785 = vmatprep.subr.mxu0 0.0
          %2786 = vmatpush1.msra.mxu0 0.0
          %2787 = vmatprep.subr.mxu0 0.0
          %2788 = vmatpush1.msra.mxu0 0.0
          %2789 = vmatprep.subr.mxu0 0.0
          %2790 = vmatpush1.msra.mxu0 %v2194
          %2791 = vmatprep.subr.mxu0 0.0
          %2792 = vmatpush1.msra.mxu0 %v2193
          %2793 = vmatprep.subr.mxu0 0.0
          %2794 = vmatpush2.msra.mxu0 0.0
          %2795 = vmatprep.subr.mxu0 0.0
          %2796 = vmatpush2.msra.mxu0 0.0
          %2797 = vmatprep.subr.mxu0 0.0
          %2798 = vmatpush2.msra.mxu0 0.0
          %2799 = vmatprep.subr.mxu0 0.0
          %2800 = vmatpush2.msra.mxu0 0.0
          %2801 = vmatprep.subr.mxu0 0.0
          %2802 = vmatpush2.msra.mxu0 0.0
          %2803 = vmatprep.subr.mxu0 0.0
          %2804 = vmatpush2.msra.mxu0 0.0
          %2805 = vmatprep.subr.mxu0 0.0
          %2806 = vmatpush2.msra.mxu0 0.0
          %2807 = vmatprep.subr.mxu0 0.0
          %2808 = vmatpush2.msra.mxu0 0.0
          %2809 = vmatprep.subr.mxu0 0.0
          %2810 = vmatpush2.msra.mxu0 0.0
          %2811 = vmatprep.subr.mxu0 0.0
          %2812 = vmatpush2.msra.mxu0 0.0
          %2813 = vmatprep.subr.mxu0 0.0
          %2814 = vmatpush2.msra.mxu0 0.0
          %2815 = vmatprep.subr.mxu0 0.0
          %2816 = vmatpush2.msra.mxu0 0.0
          %2817 = vmatprep.subr.mxu0 0.0
          %2818 = vmatpush2.msra.mxu0 0.0
          %2819 = vmatprep.subr.mxu0 0.0
          %2820 = vmatpush2.msra.mxu0 0.0
          %2821 = vmatprep.subr.mxu0 0.0
          %2822 = vmatpush2.msra.mxu0 0.0
          %2823 = vmatprep.subr.mxu0 0.0
          %2824 = vmatpush2.msra.mxu0 0.0
          %2825 = vmatprep.mubr.f32.mxu0 0.0
          %2826 = vmatmul.mubr.f32.gmra.mxu0 %v2759
          %v2827 = vpop.f32.mrf.mxu0
          %v2828 = vadd.f32 0.0, %v2827
          %v2829 = vpop.f32.mrf.mxu0
          %2830 = vdwg.mxu0
          %v2832 = vrot.slane %v2828, 6
          %v2833 = vrot.slane %v2828, 7
          %v2836 = vadd.f32 %v2185, %v2832
          %v2837 = vadd.f32 %v2190, %v2833
          %v2838 = vrot.slane %v2738, 6
          %v2839 = vrot.slane %v2739, 5
          %v2840 = vsel %vm2460, %v2839, %v2838
          %2841 = vrot.lane.b32.xlu0 %v2840, 32
          %v2842 = vpop.permute.xlu0 %2841
          %v2843 = vsel %vm995, %v2842, 0
          %2845 = vmatprep.subr.mxu0 0.0
          %2846 = vmatpush1.msra.mxu0 0.0
          %2847 = vmatprep.subr.mxu0 0.0
          %2848 = vmatpush1.msra.mxu0 0.0
          %2849 = vmatprep.subr.mxu0 0.0
          %2850 = vmatpush1.msra.mxu0 0.0
          %2851 = vmatprep.subr.mxu0 0.0
          %2852 = vmatpush1.msra.mxu0 0.0
          %2853 = vmatprep.subr.mxu0 0.0
          %2854 = vmatpush1.msra.mxu0 0.0
          %2855 = vmatprep.subr.mxu0 0.0
          %2856 = vmatpush1.msra.mxu0 0.0
          %2857 = vmatprep.subr.mxu0 0.0
          %2858 = vmatpush1.msra.mxu0 0.0
          %2859 = vmatprep.subr.mxu0 0.0
          %2860 = vmatpush1.msra.mxu0 0.0
          %2861 = vmatprep.subr.mxu0 0.0
          %2862 = vmatpush1.msra.mxu0 0.0
          %2863 = vmatprep.subr.mxu0 0.0
          %2864 = vmatpush1.msra.mxu0 0.0
          %2865 = vmatprep.subr.mxu0 0.0
          %2866 = vmatpush1.msra.mxu0 0.0
          %2867 = vmatprep.subr.mxu0 0.0
          %2868 = vmatpush1.msra.mxu0 0.0
          %2869 = vmatprep.subr.mxu0 0.0
          %2870 = vmatpush1.msra.mxu0 0.0
          %2871 = vmatprep.subr.mxu0 0.0
          %2872 = vmatpush1.msra.mxu0 0.0
          %2873 = vmatprep.subr.mxu0 0.0
          %2874 = vmatpush1.msra.mxu0 %v2275
          %2875 = vmatprep.subr.mxu0 0.0
          %2876 = vmatpush1.msra.mxu0 %v2274
          %2877 = vmatprep.subr.mxu0 0.0
          %2878 = vmatpush2.msra.mxu0 0.0
          %2879 = vmatprep.subr.mxu0 0.0
          %2880 = vmatpush2.msra.mxu0 0.0
          %2881 = vmatprep.subr.mxu0 0.0
          %2882 = vmatpush2.msra.mxu0 0.0
          %2883 = vmatprep.subr.mxu0 0.0
          %2884 = vmatpush2.msra.mxu0 0.0
          %2885 = vmatprep.subr.mxu0 0.0
          %2886 = vmatpush2.msra.mxu0 0.0
          %2887 = vmatprep.subr.mxu0 0.0
          %2888 = vmatpush2.msra.mxu0 0.0
          %2889 = vmatprep.subr.mxu0 0.0
          %2890 = vmatpush2.msra.mxu0 0.0
          %2891 = vmatprep.subr.mxu0 0.0
          %2892 = vmatpush2.msra.mxu0 0.0
          %2893 = vmatprep.subr.mxu0 0.0
          %2894 = vmatpush2.msra.mxu0 0.0
          %2895 = vmatprep.subr.mxu0 0.0
          %2896 = vmatpush2.msra.mxu0 0.0
          %2897 = vmatprep.subr.mxu0 0.0
          %2898 = vmatpush2.msra.mxu0 0.0
          %2899 = vmatprep.subr.mxu0 0.0
          %2900 = vmatpush2.msra.mxu0 0.0
          %2901 = vmatprep.subr.mxu0 0.0
          %2902 = vmatpush2.msra.mxu0 0.0
          %2903 = vmatprep.subr.mxu0 0.0
          %2904 = vmatpush2.msra.mxu0 0.0
          %2905 = vmatprep.subr.mxu0 0.0
          %2906 = vmatpush2.msra.mxu0 0.0
          %2907 = vmatprep.subr.mxu0 0.0
          %2908 = vmatpush2.msra.mxu0 0.0
          %2909 = vmatprep.mubr.f32.mxu0 0.0
          %2910 = vmatmul.mubr.f32.gmra.mxu0 %v2843
          %v2911 = vpop.f32.mrf.mxu0
          %v2912 = vadd.f32 0.0, %v2911
          %v2913 = vpop.f32.mrf.mxu0
          %2914 = vdwg.mxu0
          %v2916 = vrot.slane %v2912, 3
          %v2917 = vrot.slane %v2912, 4
          %2918 = vrot.lane.b32.xlu0 %v2916, 64
          %v2919 = vpop.permute.xlu0 %2918
          %2920 = vrot.lane.b32.xlu0 %v2917, 64
          %v2921 = vpop.permute.xlu0 %2920
          %v2924 = vadd.f32 %v2185, %v2919
          %v2925 = vadd.f32 %v2190, %v2921
          %v2926 = vsub.f32 0.0, %v2836
          %v2927 = vsub.f32 0.0, %v2837
          %v2928 = vmul.f32 %v2926, 1.442695
          %v2929 = vpow.pop %v2928
          %v2930 = vmul.f32 %v2927, 1.442695
          %v2931 = vpow.pop %v2930
          %v2932 = vadd.f32 %v2929, 1.0
          %v2933 = vadd.f32 %v2931, 1.0
          %v2934 = vrcp.pop %v2932
          %v2935 = vmul.f32 1.0, %v2934
          %v2936 = vrcp.pop %v2933
          %v2937 = vmul.f32 1.0, %v2936
          %v2938 = vtanh.pop %v2836
          %v2939 = vtanh.pop %v2837
          %v2942 = vrot.slane %v2672, 7
          %v2943 = vrot.slane %v2673, 7
          %v2946 = vmul.f32 %v2935, %v2942
          %v2947 = vmul.f32 %v2937, %v2943
          %2950 = vrot.lane.b32.xlu0 %v2938, 80
          %v2951 = vpop.permute.xlu0 %2950
          %2952 = vrot.lane.b32.xlu0 %v2939, 80
          %v2953 = vpop.permute.xlu0 %2952
          %v2956 = vmul.f32 %v2935, %v2951
          %v2957 = vmul.f32 %v2937, %v2953
          %2960 = vrot.lane.b32.xlu0 %v2956, 16
          %v2961 = vpop.permute.xlu0 %2960
          %2962 = vrot.lane.b32.xlu0 %v2957, 16
          %v2963 = vpop.permute.xlu0 %2962
          %v2966 = vadd.f32 %v2946, %v2961
          %v2967 = vadd.f32 %v2947, %v2963
          %v2968 = vtanh.pop %v2966
          %v2969 = vtanh.pop %v2967
          %2972 = vrot.lane.b32.xlu0 %v2968, 16
          %v2973 = vpop.permute.xlu0 %2972
          %2974 = vrot.lane.b32.xlu0 %v2969, 16
          %v2975 = vpop.permute.xlu0 %2974
          %v2978 = vmul.f32 %v2935, %v2973
          %v2979 = vmul.f32 %v2937, %v2975
          %v2980 = vsub.f32 0.0, %v2924
          %v2981 = vsub.f32 0.0, %v2925
          %v2982 = vmul.f32 %v2980, 1.442695
          %v2983 = vpow.pop %v2982
          %v2984 = vmul.f32 %v2981, 1.442695
          %v2985 = vpow.pop %v2984
          %v2986 = vadd.f32 %v2983, 1.0
          %v2987 = vadd.f32 %v2985, 1.0
          %v2988 = vrcp.pop %v2986
          %v2989 = vmul.f32 1.0, %v2988
          %v2990 = vrcp.pop %v2987
          %v2991 = vmul.f32 1.0, %v2990
          %v2992 = vtanh.pop %v2924
          %v2993 = vtanh.pop %v2925
          %v2996 = vrot.slane %v2726, 1
          %v2997 = vrot.slane %v2727, 1
          %v3000 = vmul.f32 %v2989, %v2996
          %v3001 = vmul.f32 %v2991, %v2997
          %3004 = vrot.lane.b32.xlu0 %v2992, 80
          %v3005 = vpop.permute.xlu0 %3004
          %3006 = vrot.lane.b32.xlu0 %v2993, 80
          %v3007 = vpop.permute.xlu0 %3006
          %v3010 = vmul.f32 %v2989, %v3005
          %v3011 = vmul.f32 %v2991, %v3007
          %3014 = vrot.lane.b32.xlu0 %v3010, 16
          %v3015 = vpop.permute.xlu0 %3014
          %3016 = vrot.lane.b32.xlu0 %v3011, 16
          %v3017 = vpop.permute.xlu0 %3016
          %v3020 = vadd.f32 %v3000, %v3015
          %v3021 = vadd.f32 %v3001, %v3017
          %v3022 = vtanh.pop %v3020
          %v3023 = vtanh.pop %v3021
          %3026 = vrot.lane.b32.xlu0 %v3022, 16
          %v3027 = vpop.permute.xlu0 %3026
          %3028 = vrot.lane.b32.xlu0 %v3023, 16
          %v3029 = vpop.permute.xlu0 %3028
          %v3032 = vmul.f32 %v2989, %v3027
          %v3033 = vmul.f32 %v2991, %v3029
          %v3036 = vrot.slane %v2978, 2
          %v3037 = vrot.slane %v2979, 2
          %v3040 = vadd.f32 %v2746, %v3036
          %v3041 = vadd.f32 %v2747, %v3037
          %v3044 = vrot.slane %v3032, 6
          %v3045 = vrot.slane %v3033, 6
          %v3048 = vadd.f32 %v2754, %v3044
          %v3049 = vadd.f32 %v2755, %v3045
          %v3050 = vrot.slane %v2979, 1
          %v3051 = vsel %vm2460, %v3050, %v3036
          %3052 = vrot.lane.b32.xlu0 %v3051, 96
          %v3053 = vpop.permute.xlu0 %3052
          %v3054 = vsel %vm995, %v3053, 0
          %3056 = vmatprep.subr.mxu0 0.0
          %3057 = vmatpush1.msra.mxu0 0.0
          %3058 = vmatprep.subr.mxu0 0.0
          %3059 = vmatpush1.msra.mxu0 0.0
          %3060 = vmatprep.subr.mxu0 0.0
          %3061 = vmatpush1.msra.mxu0 0.0
          %3062 = vmatprep.subr.mxu0 0.0
          %3063 = vmatpush1.msra.mxu0 0.0
          %3064 = vmatprep.subr.mxu0 0.0
          %3065 = vmatpush1.msra.mxu0 0.0
          %3066 = vmatprep.subr.mxu0 0.0
          %3067 = vmatpush1.msra.mxu0 0.0
          %3068 = vmatprep.subr.mxu0 0.0
          %3069 = vmatpush1.msra.mxu0 0.0
          %3070 = vmatprep.subr.mxu0 0.0
          %3071 = vmatpush1.msra.mxu0 0.0
          %3072 = vmatprep.subr.mxu0 0.0
          %3073 = vmatpush1.msra.mxu0 0.0
          %3074 = vmatprep.subr.mxu0 0.0
          %3075 = vmatpush1.msra.mxu0 0.0
          %3076 = vmatprep.subr.mxu0 0.0
          %3077 = vmatpush1.msra.mxu0 0.0
          %3078 = vmatprep.subr.mxu0 0.0
          %3079 = vmatpush1.msra.mxu0 0.0
          %3080 = vmatprep.subr.mxu0 0.0
          %3081 = vmatpush1.msra.mxu0 0.0
          %3082 = vmatprep.subr.mxu0 0.0
          %3083 = vmatpush1.msra.mxu0 0.0
          %3084 = vmatprep.subr.mxu0 0.0
          %3085 = vmatpush1.msra.mxu0 %v2194
          %3086 = vmatprep.subr.mxu0 0.0
          %3087 = vmatpush1.msra.mxu0 %v2193
          %3088 = vmatprep.subr.mxu0 0.0
          %3089 = vmatpush2.msra.mxu0 0.0
          %3090 = vmatprep.subr.mxu0 0.0
          %3091 = vmatpush2.msra.mxu0 0.0
          %3092 = vmatprep.subr.mxu0 0.0
          %3093 = vmatpush2.msra.mxu0 0.0
          %3094 = vmatprep.subr.mxu0 0.0
          %3095 = vmatpush2.msra.mxu0 0.0
          %3096 = vmatprep.subr.mxu0 0.0
          %3097 = vmatpush2.msra.mxu0 0.0
          %3098 = vmatprep.subr.mxu0 0.0
          %3099 = vmatpush2.msra.mxu0 0.0
          %3100 = vmatprep.subr.mxu0 0.0
          %3101 = vmatpush2.msra.mxu0 0.0
          %3102 = vmatprep.subr.mxu0 0.0
          %3103 = vmatpush2.msra.mxu0 0.0
          %3104 = vmatprep.subr.mxu0 0.0
          %3105 = vmatpush2.msra.mxu0 0.0
          %3106 = vmatprep.subr.mxu0 0.0
          %3107 = vmatpush2.msra.mxu0 0.0
          %3108 = vmatprep.subr.mxu0 0.0
          %3109 = vmatpush2.msra.mxu0 0.0
          %3110 = vmatprep.subr.mxu0 0.0
          %3111 = vmatpush2.msra.mxu0 0.0
          %3112 = vmatprep.subr.mxu0 0.0
          %3113 = vmatpush2.msra.mxu0 0.0
          %3114 = vmatprep.subr.mxu0 0.0
          %3115 = vmatpush2.msra.mxu0 0.0
          %3116 = vmatprep.subr.mxu0 0.0
          %3117 = vmatpush2.msra.mxu0 0.0
          %3118 = vmatprep.subr.mxu0 0.0
          %3119 = vmatpush2.msra.mxu0 0.0
          %3120 = vmatprep.mubr.f32.mxu0 0.0
          %3121 = vmatmul.mubr.f32.gmra.mxu0 %v3054
          %v3122 = vpop.f32.mrf.mxu0
          %v3123 = vadd.f32 0.0, %v3122
          %v3124 = vpop.f32.mrf.mxu0
          %3125 = vdwg.mxu0
          %v3127 = vrot.slane %v3123, 5
          %v3128 = vrot.slane %v3123, 6
          %v3131 = vadd.f32 %v2185, %v3127
          %v3132 = vadd.f32 %v2190, %v3128
          %v3133 = vrot.slane %v3032, 5
          %v3134 = vrot.slane %v3033, 4
          %v3135 = vsel %vm2460, %v3134, %v3133
          %3136 = vrot.lane.b32.xlu0 %v3135, 32
          %v3137 = vpop.permute.xlu0 %3136
          %v3138 = vsel %vm995, %v3137, 0
          %3140 = vmatprep.subr.mxu0 0.0
          %3141 = vmatpush1.msra.mxu0 0.0
          %3142 = vmatprep.subr.mxu0 0.0
          %3143 = vmatpush1.msra.mxu0 0.0
          %3144 = vmatprep.subr.mxu0 0.0
          %3145 = vmatpush1.msra.mxu0 0.0
          %3146 = vmatprep.subr.mxu0 0.0
          %3147 = vmatpush1.msra.mxu0 0.0
          %3148 = vmatprep.subr.mxu0 0.0
          %3149 = vmatpush1.msra.mxu0 0.0
          %3150 = vmatprep.subr.mxu0 0.0
          %3151 = vmatpush1.msra.mxu0 0.0
          %3152 = vmatprep.subr.mxu0 0.0
          %3153 = vmatpush1.msra.mxu0 0.0
          %3154 = vmatprep.subr.mxu0 0.0
          %3155 = vmatpush1.msra.mxu0 0.0
          %3156 = vmatprep.subr.mxu0 0.0
          %3157 = vmatpush1.msra.mxu0 0.0
          %3158 = vmatprep.subr.mxu0 0.0
          %3159 = vmatpush1.msra.mxu0 0.0
          %3160 = vmatprep.subr.mxu0 0.0
          %3161 = vmatpush1.msra.mxu0 0.0
          %3162 = vmatprep.subr.mxu0 0.0
          %3163 = vmatpush1.msra.mxu0 0.0
          %3164 = vmatprep.subr.mxu0 0.0
          %3165 = vmatpush1.msra.mxu0 0.0
          %3166 = vmatprep.subr.mxu0 0.0
          %3167 = vmatpush1.msra.mxu0 0.0
          %3168 = vmatprep.subr.mxu0 0.0
          %3169 = vmatpush1.msra.mxu0 %v2275
          %3170 = vmatprep.subr.mxu0 0.0
          %3171 = vmatpush1.msra.mxu0 %v2274
          %3172 = vmatprep.subr.mxu0 0.0
          %3173 = vmatpush2.msra.mxu0 0.0
          %3174 = vmatprep.subr.mxu0 0.0
          %3175 = vmatpush2.msra.mxu0 0.0
          %3176 = vmatprep.subr.mxu0 0.0
          %3177 = vmatpush2.msra.mxu0 0.0
          %3178 = vmatprep.subr.mxu0 0.0
          %3179 = vmatpush2.msra.mxu0 0.0
          %3180 = vmatprep.subr.mxu0 0.0
          %3181 = vmatpush2.msra.mxu0 0.0
          %3182 = vmatprep.subr.mxu0 0.0
          %3183 = vmatpush2.msra.mxu0 0.0
          %3184 = vmatprep.subr.mxu0 0.0
          %3185 = vmatpush2.msra.mxu0 0.0
          %3186 = vmatprep.subr.mxu0 0.0
          %3187 = vmatpush2.msra.mxu0 0.0
          %3188 = vmatprep.subr.mxu0 0.0
          %3189 = vmatpush2.msra.mxu0 0.0
          %3190 = vmatprep.subr.mxu0 0.0
          %3191 = vmatpush2.msra.mxu0 0.0
          %3192 = vmatprep.subr.mxu0 0.0
          %3193 = vmatpush2.msra.mxu0 0.0
          %3194 = vmatprep.subr.mxu0 0.0
          %3195 = vmatpush2.msra.mxu0 0.0
          %3196 = vmatprep.subr.mxu0 0.0
          %3197 = vmatpush2.msra.mxu0 0.0
          %3198 = vmatprep.subr.mxu0 0.0
          %3199 = vmatpush2.msra.mxu0 0.0
          %3200 = vmatprep.subr.mxu0 0.0
          %3201 = vmatpush2.msra.mxu0 0.0
          %3202 = vmatprep.subr.mxu0 0.0
          %3203 = vmatpush2.msra.mxu0 0.0
          %3204 = vmatprep.mubr.f32.mxu0 0.0
          %3205 = vmatmul.mubr.f32.gmra.mxu0 %v3138
          %v3206 = vpop.f32.mrf.mxu0
          %v3207 = vadd.f32 0.0, %v3206
          %v3208 = vpop.f32.mrf.mxu0
          %3209 = vdwg.mxu0
          %v3211 = vrot.slane %v3207, 4
          %v3212 = vrot.slane %v3207, 5
          %3213 = vrot.lane.b32.xlu0 %v3211, 64
          %v3214 = vpop.permute.xlu0 %3213
          %3215 = vrot.lane.b32.xlu0 %v3212, 64
          %v3216 = vpop.permute.xlu0 %3215
          %v3219 = vadd.f32 %v2185, %v3214
          %v3220 = vadd.f32 %v2190, %v3216
          %v3221 = vsub.f32 0.0, %v3131
          %v3222 = vsub.f32 0.0, %v3132
          %v3223 = vmul.f32 %v3221, 1.442695
          %v3224 = vpow.pop %v3223
          %v3225 = vmul.f32 %v3222, 1.442695
          %v3226 = vpow.pop %v3225
          %v3227 = vadd.f32 %v3224, 1.0
          %v3228 = vadd.f32 %v3226, 1.0
          %v3229 = vrcp.pop %v3227
          %v3230 = vmul.f32 1.0, %v3229
          %v3231 = vrcp.pop %v3228
          %v3232 = vmul.f32 1.0, %v3231
          %v3233 = vtanh.pop %v3131
          %v3234 = vtanh.pop %v3132
          %v3237 = vrot.slane %v2966, 7
          %v3238 = vrot.slane %v2967, 7
          %v3241 = vmul.f32 %v3230, %v3237
          %v3242 = vmul.f32 %v3232, %v3238
          %3245 = vrot.lane.b32.xlu0 %v3233, 80
          %v3246 = vpop.permute.xlu0 %3245
          %3247 = vrot.lane.b32.xlu0 %v3234, 80
          %v3248 = vpop.permute.xlu0 %3247
          %v3251 = vmul.f32 %v3230, %v3246
          %v3252 = vmul.f32 %v3232, %v3248
          %3255 = vrot.lane.b32.xlu0 %v3251, 16
          %v3256 = vpop.permute.xlu0 %3255
          %3257 = vrot.lane.b32.xlu0 %v3252, 16
          %v3258 = vpop.permute.xlu0 %3257
          %v3261 = vadd.f32 %v3241, %v3256
          %v3262 = vadd.f32 %v3242, %v3258
          %v3263 = vtanh.pop %v3261
          %v3264 = vtanh.pop %v3262
          %3267 = vrot.lane.b32.xlu0 %v3263, 16
          %v3268 = vpop.permute.xlu0 %3267
          %3269 = vrot.lane.b32.xlu0 %v3264, 16
          %v3270 = vpop.permute.xlu0 %3269
          %v3273 = vmul.f32 %v3230, %v3268
          %v3274 = vmul.f32 %v3232, %v3270
          %v3275 = vsub.f32 0.0, %v3219
          %v3276 = vsub.f32 0.0, %v3220
          %v3277 = vmul.f32 %v3275, 1.442695
          %v3278 = vpow.pop %v3277
          %v3279 = vmul.f32 %v3276, 1.442695
          %v3280 = vpow.pop %v3279
          %v3281 = vadd.f32 %v3278, 1.0
          %v3282 = vadd.f32 %v3280, 1.0
          %v3283 = vrcp.pop %v3281
          %v3284 = vmul.f32 1.0, %v3283
          %v3285 = vrcp.pop %v3282
          %v3286 = vmul.f32 1.0, %v3285
          %v3287 = vtanh.pop %v3219
          %v3288 = vtanh.pop %v3220
          %v3291 = vrot.slane %v3020, 1
          %v3292 = vrot.slane %v3021, 1
          %v3295 = vmul.f32 %v3284, %v3291
          %v3296 = vmul.f32 %v3286, %v3292
          %3299 = vrot.lane.b32.xlu0 %v3287, 80
          %v3300 = vpop.permute.xlu0 %3299
          %3301 = vrot.lane.b32.xlu0 %v3288, 80
          %v3302 = vpop.permute.xlu0 %3301
          %v3305 = vmul.f32 %v3284, %v3300
          %v3306 = vmul.f32 %v3286, %v3302
          %3309 = vrot.lane.b32.xlu0 %v3305, 16
          %v3310 = vpop.permute.xlu0 %3309
          %3311 = vrot.lane.b32.xlu0 %v3306, 16
          %v3312 = vpop.permute.xlu0 %3311
          %v3315 = vadd.f32 %v3295, %v3310
          %v3316 = vadd.f32 %v3296, %v3312
          %v3317 = vtanh.pop %v3315
          %v3318 = vtanh.pop %v3316
          %3321 = vrot.lane.b32.xlu0 %v3317, 16
          %v3322 = vpop.permute.xlu0 %3321
          %3323 = vrot.lane.b32.xlu0 %v3318, 16
          %v3324 = vpop.permute.xlu0 %3323
          %v3327 = vmul.f32 %v3284, %v3322
          %v3328 = vmul.f32 %v3286, %v3324
          %v3331 = vrot.slane %v3273, 3
          %v3332 = vrot.slane %v3274, 3
          %v3335 = vadd.f32 %v3040, %v3331
          %v3336 = vadd.f32 %v3041, %v3332
          %v3339 = vrot.slane %v3327, 5
          %v3340 = vrot.slane %v3328, 5
          %v3343 = vadd.f32 %v3048, %v3339
          %v3344 = vadd.f32 %v3049, %v3340
          %v3345 = vrot.slane %v3274, 2
          %v3346 = vsel %vm2460, %v3345, %v3331
          %3347 = vrot.lane.b32.xlu0 %v3346, 96
          %v3348 = vpop.permute.xlu0 %3347
          %v3349 = vsel %vm995, %v3348, 0
          %3351 = vmatprep.subr.mxu0 0.0
          %3352 = vmatpush1.msra.mxu0 0.0
          %3353 = vmatprep.subr.mxu0 0.0
          %3354 = vmatpush1.msra.mxu0 0.0
          %3355 = vmatprep.subr.mxu0 0.0
          %3356 = vmatpush1.msra.mxu0 0.0
          %3357 = vmatprep.subr.mxu0 0.0
          %3358 = vmatpush1.msra.mxu0 0.0
          %3359 = vmatprep.subr.mxu0 0.0
          %3360 = vmatpush1.msra.mxu0 0.0
          %3361 = vmatprep.subr.mxu0 0.0
          %3362 = vmatpush1.msra.mxu0 0.0
          %3363 = vmatprep.subr.mxu0 0.0
          %3364 = vmatpush1.msra.mxu0 0.0
          %3365 = vmatprep.subr.mxu0 0.0
          %3366 = vmatpush1.msra.mxu0 0.0
          %3367 = vmatprep.subr.mxu0 0.0
          %3368 = vmatpush1.msra.mxu0 0.0
          %3369 = vmatprep.subr.mxu0 0.0
          %3370 = vmatpush1.msra.mxu0 0.0
          %3371 = vmatprep.subr.mxu0 0.0
          %3372 = vmatpush1.msra.mxu0 0.0
          %3373 = vmatprep.subr.mxu0 0.0
          %3374 = vmatpush1.msra.mxu0 0.0
          %3375 = vmatprep.subr.mxu0 0.0
          %3376 = vmatpush1.msra.mxu0 0.0
          %3377 = vmatprep.subr.mxu0 0.0
          %3378 = vmatpush1.msra.mxu0 0.0
          %3379 = vmatprep.subr.mxu0 0.0
          %3380 = vmatpush1.msra.mxu0 %v2194
          %3381 = vmatprep.subr.mxu0 0.0
          %3382 = vmatpush1.msra.mxu0 %v2193
          %3383 = vmatprep.subr.mxu0 0.0
          %3384 = vmatpush2.msra.mxu0 0.0
          %3385 = vmatprep.subr.mxu0 0.0
          %3386 = vmatpush2.msra.mxu0 0.0
          %3387 = vmatprep.subr.mxu0 0.0
          %3388 = vmatpush2.msra.mxu0 0.0
          %3389 = vmatprep.subr.mxu0 0.0
          %3390 = vmatpush2.msra.mxu0 0.0
          %3391 = vmatprep.subr.mxu0 0.0
          %3392 = vmatpush2.msra.mxu0 0.0
          %3393 = vmatprep.subr.mxu0 0.0
          %3394 = vmatpush2.msra.mxu0 0.0
          %3395 = vmatprep.subr.mxu0 0.0
          %3396 = vmatpush2.msra.mxu0 0.0
          %3397 = vmatprep.subr.mxu0 0.0
          %3398 = vmatpush2.msra.mxu0 0.0
          %3399 = vmatprep.subr.mxu0 0.0
          %3400 = vmatpush2.msra.mxu0 0.0
          %3401 = vmatprep.subr.mxu0 0.0
          %3402 = vmatpush2.msra.mxu0 0.0
          %3403 = vmatprep.subr.mxu0 0.0
          %3404 = vmatpush2.msra.mxu0 0.0
          %3405 = vmatprep.subr.mxu0 0.0
          %3406 = vmatpush2.msra.mxu0 0.0
          %3407 = vmatprep.subr.mxu0 0.0
          %3408 = vmatpush2.msra.mxu0 0.0
          %3409 = vmatprep.subr.mxu0 0.0
          %3410 = vmatpush2.msra.mxu0 0.0
          %3411 = vmatprep.subr.mxu0 0.0
          %3412 = vmatpush2.msra.mxu0 0.0
          %3413 = vmatprep.subr.mxu0 0.0
          %3414 = vmatpush2.msra.mxu0 0.0
          %3415 = vmatprep.mubr.f32.mxu0 0.0
          %3416 = vmatmul.mubr.f32.gmra.mxu0 %v3349
          %v3417 = vpop.f32.mrf.mxu0
          %v3418 = vadd.f32 0.0, %v3417
          %v3419 = vpop.f32.mrf.mxu0
          %3420 = vdwg.mxu0
          %v3422 = vrot.slane %v3418, 4
          %v3423 = vrot.slane %v3418, 5
          %v3426 = vadd.f32 %v2185, %v3422
          %v3427 = vadd.f32 %v2190, %v3423
          %v3428 = vrot.slane %v3327, 4
          %v3429 = vrot.slane %v3328, 3
          %v3430 = vsel %vm2460, %v3429, %v3428
          %3431 = vrot.lane.b32.xlu0 %v3430, 32
          %v3432 = vpop.permute.xlu0 %3431
          %v3433 = vsel %vm995, %v3432, 0
          %3435 = vmatprep.subr.mxu0 0.0
          %3436 = vmatpush1.msra.mxu0 0.0
          %3437 = vmatprep.subr.mxu0 0.0
          %3438 = vmatpush1.msra.mxu0 0.0
          %3439 = vmatprep.subr.mxu0 0.0
          %3440 = vmatpush1.msra.mxu0 0.0
          %3441 = vmatprep.subr.mxu0 0.0
          %3442 = vmatpush1.msra.mxu0 0.0
          %3443 = vmatprep.subr.mxu0 0.0
          %3444 = vmatpush1.msra.mxu0 0.0
          %3445 = vmatprep.subr.mxu0 0.0
          %3446 = vmatpush1.msra.mxu0 0.0
          %3447 = vmatprep.subr.mxu0 0.0
          %3448 = vmatpush1.msra.mxu0 0.0
          %3449 = vmatprep.subr.mxu0 0.0
          %3450 = vmatpush1.msra.mxu0 0.0
          %3451 = vmatprep.subr.mxu0 0.0
          %3452 = vmatpush1.msra.mxu0 0.0
          %3453 = vmatprep.subr.mxu0 0.0
          %3454 = vmatpush1.msra.mxu0 0.0
          %3455 = vmatprep.subr.mxu0 0.0
          %3456 = vmatpush1.msra.mxu0 0.0
          %3457 = vmatprep.subr.mxu0 0.0
          %3458 = vmatpush1.msra.mxu0 0.0
          %3459 = vmatprep.subr.mxu0 0.0
          %3460 = vmatpush1.msra.mxu0 0.0
          %3461 = vmatprep.subr.mxu0 0.0
          %3462 = vmatpush1.msra.mxu0 0.0
          %3463 = vmatprep.subr.mxu0 0.0
          %3464 = vmatpush1.msra.mxu0 %v2275
          %3465 = vmatprep.subr.mxu0 0.0
          %3466 = vmatpush1.msra.mxu0 %v2274
          %3467 = vmatprep.subr.mxu0 0.0
          %3468 = vmatpush2.msra.mxu0 0.0
          %3469 = vmatprep.subr.mxu0 0.0
          %3470 = vmatpush2.msra.mxu0 0.0
          %3471 = vmatprep.subr.mxu0 0.0
          %3472 = vmatpush2.msra.mxu0 0.0
          %3473 = vmatprep.subr.mxu0 0.0
          %3474 = vmatpush2.msra.mxu0 0.0
          %3475 = vmatprep.subr.mxu0 0.0
          %3476 = vmatpush2.msra.mxu0 0.0
          %3477 = vmatprep.subr.mxu0 0.0
          %3478 = vmatpush2.msra.mxu0 0.0
          %3479 = vmatprep.subr.mxu0 0.0
          %3480 = vmatpush2.msra.mxu0 0.0
          %3481 = vmatprep.subr.mxu0 0.0
          %3482 = vmatpush2.msra.mxu0 0.0
          %3483 = vmatprep.subr.mxu0 0.0
          %3484 = vmatpush2.msra.mxu0 0.0
          %3485 = vmatprep.subr.mxu0 0.0
          %3486 = vmatpush2.msra.mxu0 0.0
          %3487 = vmatprep.subr.mxu0 0.0
          %3488 = vmatpush2.msra.mxu0 0.0
          %3489 = vmatprep.subr.mxu0 0.0
          %3490 = vmatpush2.msra.mxu0 0.0
          %3491 = vmatprep.subr.mxu0 0.0
          %3492 = vmatpush2.msra.mxu0 0.0
          %3493 = vmatprep.subr.mxu0 0.0
          %3494 = vmatpush2.msra.mxu0 0.0
          %3495 = vmatprep.subr.mxu0 0.0
          %3496 = vmatpush2.msra.mxu0 0.0
          %3497 = vmatprep.subr.mxu0 0.0
          %3498 = vmatpush2.msra.mxu0 0.0
          %3499 = vmatprep.mubr.f32.mxu0 0.0
          %3500 = vmatmul.mubr.f32.gmra.mxu0 %v3433
          %v3501 = vpop.f32.mrf.mxu0
          %v3502 = vadd.f32 0.0, %v3501
          %v3503 = vpop.f32.mrf.mxu0
          %3504 = vdwg.mxu0
          %v3506 = vrot.slane %v3502, 5
          %v3507 = vrot.slane %v3502, 6
          %3508 = vrot.lane.b32.xlu0 %v3506, 64
          %v3509 = vpop.permute.xlu0 %3508
          %3510 = vrot.lane.b32.xlu0 %v3507, 64
          %v3511 = vpop.permute.xlu0 %3510
          %v3514 = vadd.f32 %v2185, %v3509
          %v3515 = vadd.f32 %v2190, %v3511
          %v3516 = vsub.f32 0.0, %v3426
          %v3517 = vsub.f32 0.0, %v3427
          %v3518 = vmul.f32 %v3516, 1.442695
          %v3519 = vpow.pop %v3518
          %v3520 = vmul.f32 %v3517, 1.442695
          %v3521 = vpow.pop %v3520
          %v3522 = vadd.f32 %v3519, 1.0
          %v3523 = vadd.f32 %v3521, 1.0
          %v3524 = vrcp.pop %v3522
          %v3525 = vmul.f32 1.0, %v3524
          %v3526 = vrcp.pop %v3523
          %v3527 = vmul.f32 1.0, %v3526
          %v3528 = vtanh.pop %v3426
          %v3529 = vtanh.pop %v3427
          %v3532 = vrot.slane %v3261, 7
          %v3533 = vrot.slane %v3262, 7
          %v3536 = vmul.f32 %v3525, %v3532
          %v3537 = vmul.f32 %v3527, %v3533
          %3540 = vrot.lane.b32.xlu0 %v3528, 80
          %v3541 = vpop.permute.xlu0 %3540
          %3542 = vrot.lane.b32.xlu0 %v3529, 80
          %v3543 = vpop.permute.xlu0 %3542
          %v3546 = vmul.f32 %v3525, %v3541
          %v3547 = vmul.f32 %v3527, %v3543
          %3550 = vrot.lane.b32.xlu0 %v3546, 16
          %v3551 = vpop.permute.xlu0 %3550
          %3552 = vrot.lane.b32.xlu0 %v3547, 16
          %v3553 = vpop.permute.xlu0 %3552
          %v3556 = vadd.f32 %v3536, %v3551
          %v3557 = vadd.f32 %v3537, %v3553
          %v3558 = vtanh.pop %v3556
          %v3559 = vtanh.pop %v3557
          %3562 = vrot.lane.b32.xlu0 %v3558, 16
          %v3563 = vpop.permute.xlu0 %3562
          %3564 = vrot.lane.b32.xlu0 %v3559, 16
          %v3565 = vpop.permute.xlu0 %3564
          %v3568 = vmul.f32 %v3525, %v3563
          %v3569 = vmul.f32 %v3527, %v3565
          %v3570 = vsub.f32 0.0, %v3514
          %v3571 = vsub.f32 0.0, %v3515
          %v3572 = vmul.f32 %v3570, 1.442695
          %v3573 = vpow.pop %v3572
          %v3574 = vmul.f32 %v3571, 1.442695
          %v3575 = vpow.pop %v3574
          %v3576 = vadd.f32 %v3573, 1.0
          %v3577 = vadd.f32 %v3575, 1.0
          %v3578 = vrcp.pop %v3576
          %v3579 = vmul.f32 1.0, %v3578
          %v3580 = vrcp.pop %v3577
          %v3581 = vmul.f32 1.0, %v3580
          %v3582 = vtanh.pop %v3514
          %v3583 = vtanh.pop %v3515
          %v3586 = vrot.slane %v3315, 1
          %v3587 = vrot.slane %v3316, 1
          %v3590 = vmul.f32 %v3579, %v3586
          %v3591 = vmul.f32 %v3581, %v3587
          %3594 = vrot.lane.b32.xlu0 %v3582, 80
          %v3595 = vpop.permute.xlu0 %3594
          %3596 = vrot.lane.b32.xlu0 %v3583, 80
          %v3597 = vpop.permute.xlu0 %3596
          %v3600 = vmul.f32 %v3579, %v3595
          %v3601 = vmul.f32 %v3581, %v3597
          %3604 = vrot.lane.b32.xlu0 %v3600, 16
          %v3605 = vpop.permute.xlu0 %3604
          %3606 = vrot.lane.b32.xlu0 %v3601, 16
          %v3607 = vpop.permute.xlu0 %3606
          %v3610 = vadd.f32 %v3590, %v3605
          %v3611 = vadd.f32 %v3591, %v3607
          %v3612 = vtanh.pop %v3610
          %v3613 = vtanh.pop %v3611
          %3616 = vrot.lane.b32.xlu0 %v3612, 16
          %v3617 = vpop.permute.xlu0 %3616
          %3618 = vrot.lane.b32.xlu0 %v3613, 16
          %v3619 = vpop.permute.xlu0 %3618
          %v3622 = vmul.f32 %v3579, %v3617
          %v3623 = vmul.f32 %v3581, %v3619
          %v3626 = vrot.slane %v3568, 4
          %v3627 = vrot.slane %v3569, 4
          %v3630 = vadd.f32 %v3335, %v3626
          %v3631 = vadd.f32 %v3336, %v3627
          %v3634 = vrot.slane %v3622, 4
          %v3635 = vrot.slane %v3623, 4
          %v3638 = vadd.f32 %v3343, %v3634
          %v3639 = vadd.f32 %v3344, %v3635
          %v3640 = vrot.slane %v3569, 3
          %v3641 = vsel %vm2460, %v3640, %v3626
          %3642 = vrot.lane.b32.xlu0 %v3641, 96
          %v3643 = vpop.permute.xlu0 %3642
          %v3644 = vsel %vm995, %v3643, 0
          %3646 = vmatprep.subr.mxu0 0.0
          %3647 = vmatpush1.msra.mxu0 0.0
          %3648 = vmatprep.subr.mxu0 0.0
          %3649 = vmatpush1.msra.mxu0 0.0
          %3650 = vmatprep.subr.mxu0 0.0
          %3651 = vmatpush1.msra.mxu0 0.0
          %3652 = vmatprep.subr.mxu0 0.0
          %3653 = vmatpush1.msra.mxu0 0.0
          %3654 = vmatprep.subr.mxu0 0.0
          %3655 = vmatpush1.msra.mxu0 0.0
          %3656 = vmatprep.subr.mxu0 0.0
          %3657 = vmatpush1.msra.mxu0 0.0
          %3658 = vmatprep.subr.mxu0 0.0
          %3659 = vmatpush1.msra.mxu0 0.0
          %3660 = vmatprep.subr.mxu0 0.0
          %3661 = vmatpush1.msra.mxu0 0.0
          %3662 = vmatprep.subr.mxu0 0.0
          %3663 = vmatpush1.msra.mxu0 0.0
          %3664 = vmatprep.subr.mxu0 0.0
          %3665 = vmatpush1.msra.mxu0 0.0
          %3666 = vmatprep.subr.mxu0 0.0
          %3667 = vmatpush1.msra.mxu0 0.0
          %3668 = vmatprep.subr.mxu0 0.0
          %3669 = vmatpush1.msra.mxu0 0.0
          %3670 = vmatprep.subr.mxu0 0.0
          %3671 = vmatpush1.msra.mxu0 0.0
          %3672 = vmatprep.subr.mxu0 0.0
          %3673 = vmatpush1.msra.mxu0 0.0
          %3674 = vmatprep.subr.mxu0 0.0
          %3675 = vmatpush1.msra.mxu0 %v2194
          %3676 = vmatprep.subr.mxu0 0.0
          %3677 = vmatpush1.msra.mxu0 %v2193
          %3678 = vmatprep.subr.mxu0 0.0
          %3679 = vmatpush2.msra.mxu0 0.0
          %3680 = vmatprep.subr.mxu0 0.0
          %3681 = vmatpush2.msra.mxu0 0.0
          %3682 = vmatprep.subr.mxu0 0.0
          %3683 = vmatpush2.msra.mxu0 0.0
          %3684 = vmatprep.subr.mxu0 0.0
          %3685 = vmatpush2.msra.mxu0 0.0
          %3686 = vmatprep.subr.mxu0 0.0
          %3687 = vmatpush2.msra.mxu0 0.0
          %3688 = vmatprep.subr.mxu0 0.0
          %3689 = vmatpush2.msra.mxu0 0.0
          %3690 = vmatprep.subr.mxu0 0.0
          %3691 = vmatpush2.msra.mxu0 0.0
          %3692 = vmatprep.subr.mxu0 0.0
          %3693 = vmatpush2.msra.mxu0 0.0
          %3694 = vmatprep.subr.mxu0 0.0
          %3695 = vmatpush2.msra.mxu0 0.0
          %3696 = vmatprep.subr.mxu0 0.0
          %3697 = vmatpush2.msra.mxu0 0.0
          %3698 = vmatprep.subr.mxu0 0.0
          %3699 = vmatpush2.msra.mxu0 0.0
          %3700 = vmatprep.subr.mxu0 0.0
          %3701 = vmatpush2.msra.mxu0 0.0
          %3702 = vmatprep.subr.mxu0 0.0
          %3703 = vmatpush2.msra.mxu0 0.0
          %3704 = vmatprep.subr.mxu0 0.0
          %3705 = vmatpush2.msra.mxu0 0.0
          %3706 = vmatprep.subr.mxu0 0.0
          %3707 = vmatpush2.msra.mxu0 0.0
          %3708 = vmatprep.subr.mxu0 0.0
          %3709 = vmatpush2.msra.mxu0 0.0
          %3710 = vmatprep.mubr.f32.mxu0 0.0
          %3711 = vmatmul.mubr.f32.gmra.mxu0 %v3644
          %v3712 = vpop.f32.mrf.mxu0
          %v3713 = vadd.f32 0.0, %v3712
          %v3714 = vpop.f32.mrf.mxu0
          %3715 = vdwg.mxu0
          %v3717 = vrot.slane %v3713, 3
          %v3718 = vrot.slane %v3713, 4
          %v3721 = vadd.f32 %v2185, %v3717
          %v3722 = vadd.f32 %v2190, %v3718
          %v3723 = vrot.slane %v3622, 3
          %v3724 = vrot.slane %v3623, 2
          %v3725 = vsel %vm2460, %v3724, %v3723
          %3726 = vrot.lane.b32.xlu0 %v3725, 32
          %v3727 = vpop.permute.xlu0 %3726
          %v3728 = vsel %vm995, %v3727, 0
          %3730 = vmatprep.subr.mxu0 0.0
          %3731 = vmatpush1.msra.mxu0 0.0
          %3732 = vmatprep.subr.mxu0 0.0
          %3733 = vmatpush1.msra.mxu0 0.0
          %3734 = vmatprep.subr.mxu0 0.0
          %3735 = vmatpush1.msra.mxu0 0.0
          %3736 = vmatprep.subr.mxu0 0.0
          %3737 = vmatpush1.msra.mxu0 0.0
          %3738 = vmatprep.subr.mxu0 0.0
          %3739 = vmatpush1.msra.mxu0 0.0
          %3740 = vmatprep.subr.mxu0 0.0
          %3741 = vmatpush1.msra.mxu0 0.0
          %3742 = vmatprep.subr.mxu0 0.0
          %3743 = vmatpush1.msra.mxu0 0.0
          %3744 = vmatprep.subr.mxu0 0.0
          %3745 = vmatpush1.msra.mxu0 0.0
          %3746 = vmatprep.subr.mxu0 0.0
          %3747 = vmatpush1.msra.mxu0 0.0
          %3748 = vmatprep.subr.mxu0 0.0
          %3749 = vmatpush1.msra.mxu0 0.0
          %3750 = vmatprep.subr.mxu0 0.0
          %3751 = vmatpush1.msra.mxu0 0.0
          %3752 = vmatprep.subr.mxu0 0.0
          %3753 = vmatpush1.msra.mxu0 0.0
          %3754 = vmatprep.subr.mxu0 0.0
          %3755 = vmatpush1.msra.mxu0 0.0
          %3756 = vmatprep.subr.mxu0 0.0
          %3757 = vmatpush1.msra.mxu0 0.0
          %3758 = vmatprep.subr.mxu0 0.0
          %3759 = vmatpush1.msra.mxu0 %v2275
          %3760 = vmatprep.subr.mxu0 0.0
          %3761 = vmatpush1.msra.mxu0 %v2274
          %3762 = vmatprep.subr.mxu0 0.0
          %3763 = vmatpush2.msra.mxu0 0.0
          %3764 = vmatprep.subr.mxu0 0.0
          %3765 = vmatpush2.msra.mxu0 0.0
          %3766 = vmatprep.subr.mxu0 0.0
          %3767 = vmatpush2.msra.mxu0 0.0
          %3768 = vmatprep.subr.mxu0 0.0
          %3769 = vmatpush2.msra.mxu0 0.0
          %3770 = vmatprep.subr.mxu0 0.0
          %3771 = vmatpush2.msra.mxu0 0.0
          %3772 = vmatprep.subr.mxu0 0.0
          %3773 = vmatpush2.msra.mxu0 0.0
          %3774 = vmatprep.subr.mxu0 0.0
          %3775 = vmatpush2.msra.mxu0 0.0
          %3776 = vmatprep.subr.mxu0 0.0
          %3777 = vmatpush2.msra.mxu0 0.0
          %3778 = vmatprep.subr.mxu0 0.0
          %3779 = vmatpush2.msra.mxu0 0.0
          %3780 = vmatprep.subr.mxu0 0.0
          %3781 = vmatpush2.msra.mxu0 0.0
          %3782 = vmatprep.subr.mxu0 0.0
          %3783 = vmatpush2.msra.mxu0 0.0
          %3784 = vmatprep.subr.mxu0 0.0
          %3785 = vmatpush2.msra.mxu0 0.0
          %3786 = vmatprep.subr.mxu0 0.0
          %3787 = vmatpush2.msra.mxu0 0.0
          %3788 = vmatprep.subr.mxu0 0.0
          %3789 = vmatpush2.msra.mxu0 0.0
          %3790 = vmatprep.subr.mxu0 0.0
          %3791 = vmatpush2.msra.mxu0 0.0
          %3792 = vmatprep.subr.mxu0 0.0
          %3793 = vmatpush2.msra.mxu0 0.0
          %3794 = vmatprep.mubr.f32.mxu0 0.0
          %3795 = vmatmul.mubr.f32.gmra.mxu0 %v3728
          %v3796 = vpop.f32.mrf.mxu0
          %v3797 = vadd.f32 0.0, %v3796
          %v3798 = vpop.f32.mrf.mxu0
          %3799 = vdwg.mxu0
          %v3801 = vrot.slane %v3797, 6
          %v3802 = vrot.slane %v3797, 7
          %3803 = vrot.lane.b32.xlu0 %v3801, 64
          %v3804 = vpop.permute.xlu0 %3803
          %3805 = vrot.lane.b32.xlu0 %v3802, 64
          %v3806 = vpop.permute.xlu0 %3805
          %v3809 = vadd.f32 %v2185, %v3804
          %v3810 = vadd.f32 %v2190, %v3806
          %v3811 = vsub.f32 0.0, %v3721
          %v3812 = vsub.f32 0.0, %v3722
          %v3813 = vmul.f32 %v3811, 1.442695
          %v3814 = vpow.pop %v3813
          %v3815 = vmul.f32 %v3812, 1.442695
          %v3816 = vpow.pop %v3815
          %v3817 = vadd.f32 %v3814, 1.0
          %v3818 = vadd.f32 %v3816, 1.0
          %v3819 = vrcp.pop %v3817
          %v3820 = vmul.f32 1.0, %v3819
          %v3821 = vrcp.pop %v3818
          %v3822 = vmul.f32 1.0, %v3821
          %v3823 = vtanh.pop %v3721
          %v3824 = vtanh.pop %v3722
          %v3827 = vrot.slane %v3556, 7
          %v3828 = vrot.slane %v3557, 7
          %v3831 = vmul.f32 %v3820, %v3827
          %v3832 = vmul.f32 %v3822, %v3828
          %3835 = vrot.lane.b32.xlu0 %v3823, 80
          %v3836 = vpop.permute.xlu0 %3835
          %3837 = vrot.lane.b32.xlu0 %v3824, 80
          %v3838 = vpop.permute.xlu0 %3837
          %v3841 = vmul.f32 %v3820, %v3836
          %v3842 = vmul.f32 %v3822, %v3838
          %3845 = vrot.lane.b32.xlu0 %v3841, 16
          %v3846 = vpop.permute.xlu0 %3845
          %3847 = vrot.lane.b32.xlu0 %v3842, 16
          %v3848 = vpop.permute.xlu0 %3847
          %v3851 = vadd.f32 %v3831, %v3846
          %v3852 = vadd.f32 %v3832, %v3848
          %v3853 = vtanh.pop %v3851
          %v3854 = vtanh.pop %v3852
          %3857 = vrot.lane.b32.xlu0 %v3853, 16
          %v3858 = vpop.permute.xlu0 %3857
          %3859 = vrot.lane.b32.xlu0 %v3854, 16
          %v3860 = vpop.permute.xlu0 %3859
          %v3863 = vmul.f32 %v3820, %v3858
          %v3864 = vmul.f32 %v3822, %v3860
          %v3865 = vsub.f32 0.0, %v3809
          %v3866 = vsub.f32 0.0, %v3810
          %v3867 = vmul.f32 %v3865, 1.442695
          %v3868 = vpow.pop %v3867
          %v3869 = vmul.f32 %v3866, 1.442695
          %v3870 = vpow.pop %v3869
          %v3871 = vadd.f32 %v3868, 1.0
          %v3872 = vadd.f32 %v3870, 1.0
          %v3873 = vrcp.pop %v3871
          %v3874 = vmul.f32 1.0, %v3873
          %v3875 = vrcp.pop %v3872
          %v3876 = vmul.f32 1.0, %v3875
          %v3877 = vtanh.pop %v3809
          %v3878 = vtanh.pop %v3810
          %v3881 = vrot.slane %v3610, 1
          %v3882 = vrot.slane %v3611, 1
          %v3885 = vmul.f32 %v3874, %v3881
          %v3886 = vmul.f32 %v3876, %v3882
          %3889 = vrot.lane.b32.xlu0 %v3877, 80
          %v3890 = vpop.permute.xlu0 %3889
          %3891 = vrot.lane.b32.xlu0 %v3878, 80
          %v3892 = vpop.permute.xlu0 %3891
          %v3895 = vmul.f32 %v3874, %v3890
          %v3896 = vmul.f32 %v3876, %v3892
          %3899 = vrot.lane.b32.xlu0 %v3895, 16
          %v3900 = vpop.permute.xlu0 %3899
          %3901 = vrot.lane.b32.xlu0 %v3896, 16
          %v3902 = vpop.permute.xlu0 %3901
          %v3905 = vadd.f32 %v3885, %v3900
          %v3906 = vadd.f32 %v3886, %v3902
          %v3907 = vtanh.pop %v3905
          %v3908 = vtanh.pop %v3906
          %3911 = vrot.lane.b32.xlu0 %v3907, 16
          %v3912 = vpop.permute.xlu0 %3911
          %3913 = vrot.lane.b32.xlu0 %v3908, 16
          %v3914 = vpop.permute.xlu0 %3913
          %v3917 = vmul.f32 %v3874, %v3912
          %v3918 = vmul.f32 %v3876, %v3914
          %v3921 = vrot.slane %v3863, 5
          %v3922 = vrot.slane %v3864, 5
          %v3925 = vadd.f32 %v3630, %v3921
          %v3926 = vadd.f32 %v3631, %v3922
          %v3929 = vrot.slane %v3917, 3
          %v3930 = vrot.slane %v3918, 3
          %v3933 = vadd.f32 %v3638, %v3929
          %v3934 = vadd.f32 %v3639, %v3930
          %v3935 = vrot.slane %v3864, 4
          %v3936 = vsel %vm2460, %v3935, %v3921
          %3937 = vrot.lane.b32.xlu0 %v3936, 96
          %v3938 = vpop.permute.xlu0 %3937
          %v3939 = vsel %vm995, %v3938, 0
          %3941 = vmatprep.subr.mxu0 0.0
          %3942 = vmatpush1.msra.mxu0 0.0
          %3943 = vmatprep.subr.mxu0 0.0
          %3944 = vmatpush1.msra.mxu0 0.0
          %3945 = vmatprep.subr.mxu0 0.0
          %3946 = vmatpush1.msra.mxu0 0.0
          %3947 = vmatprep.subr.mxu0 0.0
          %3948 = vmatpush1.msra.mxu0 0.0
          %3949 = vmatprep.subr.mxu0 0.0
          %3950 = vmatpush1.msra.mxu0 0.0
          %3951 = vmatprep.subr.mxu0 0.0
          %3952 = vmatpush1.msra.mxu0 0.0
          %3953 = vmatprep.subr.mxu0 0.0
          %3954 = vmatpush1.msra.mxu0 0.0
          %3955 = vmatprep.subr.mxu0 0.0
          %3956 = vmatpush1.msra.mxu0 0.0
          %3957 = vmatprep.subr.mxu0 0.0
          %3958 = vmatpush1.msra.mxu0 0.0
          %3959 = vmatprep.subr.mxu0 0.0
          %3960 = vmatpush1.msra.mxu0 0.0
          %3961 = vmatprep.subr.mxu0 0.0
          %3962 = vmatpush1.msra.mxu0 0.0
          %3963 = vmatprep.subr.mxu0 0.0
          %3964 = vmatpush1.msra.mxu0 0.0
          %3965 = vmatprep.subr.mxu0 0.0
          %3966 = vmatpush1.msra.mxu0 0.0
          %3967 = vmatprep.subr.mxu0 0.0
          %3968 = vmatpush1.msra.mxu0 0.0
          %3969 = vmatprep.subr.mxu0 0.0
          %3970 = vmatpush1.msra.mxu0 %v2194
          %3971 = vmatprep.subr.mxu0 0.0
          %3972 = vmatpush1.msra.mxu0 %v2193
          %3973 = vmatprep.subr.mxu0 0.0
          %3974 = vmatpush2.msra.mxu0 0.0
          %3975 = vmatprep.subr.mxu0 0.0
          %3976 = vmatpush2.msra.mxu0 0.0
          %3977 = vmatprep.subr.mxu0 0.0
          %3978 = vmatpush2.msra.mxu0 0.0
          %3979 = vmatprep.subr.mxu0 0.0
          %3980 = vmatpush2.msra.mxu0 0.0
          %3981 = vmatprep.subr.mxu0 0.0
          %3982 = vmatpush2.msra.mxu0 0.0
          %3983 = vmatprep.subr.mxu0 0.0
          %3984 = vmatpush2.msra.mxu0 0.0
          %3985 = vmatprep.subr.mxu0 0.0
          %3986 = vmatpush2.msra.mxu0 0.0
          %3987 = vmatprep.subr.mxu0 0.0
          %3988 = vmatpush2.msra.mxu0 0.0
          %3989 = vmatprep.subr.mxu0 0.0
          %3990 = vmatpush2.msra.mxu0 0.0
          %3991 = vmatprep.subr.mxu0 0.0
          %3992 = vmatpush2.msra.mxu0 0.0
          %3993 = vmatprep.subr.mxu0 0.0
          %3994 = vmatpush2.msra.mxu0 0.0
          %3995 = vmatprep.subr.mxu0 0.0
          %3996 = vmatpush2.msra.mxu0 0.0
          %3997 = vmatprep.subr.mxu0 0.0
          %3998 = vmatpush2.msra.mxu0 0.0
          %3999 = vmatprep.subr.mxu0 0.0
          %4000 = vmatpush2.msra.mxu0 0.0
          %4001 = vmatprep.subr.mxu0 0.0
          %4002 = vmatpush2.msra.mxu0 0.0
          %4003 = vmatprep.subr.mxu0 0.0
          %4004 = vmatpush2.msra.mxu0 0.0
          %4005 = vmatprep.mubr.f32.mxu0 0.0
          %4006 = vmatmul.mubr.f32.gmra.mxu0 %v3939
          %v4007 = vpop.f32.mrf.mxu0
          %v4008 = vadd.f32 0.0, %v4007
          %v4009 = vpop.f32.mrf.mxu0
          %4010 = vdwg.mxu0
          %v4012 = vrot.slane %v4008, 2
          %v4013 = vrot.slane %v4008, 3
          %v4016 = vadd.f32 %v2185, %v4012
          %v4017 = vadd.f32 %v2190, %v4013
          %v4018 = vrot.slane %v3917, 2
          %v4019 = vrot.slane %v3918, 1
          %v4020 = vsel %vm2460, %v4019, %v4018
          %4021 = vrot.lane.b32.xlu0 %v4020, 32
          %v4022 = vpop.permute.xlu0 %4021
          %v4023 = vsel %vm995, %v4022, 0
          %4025 = vmatprep.subr.mxu0 0.0
          %4026 = vmatpush1.msra.mxu0 0.0
          %4027 = vmatprep.subr.mxu0 0.0
          %4028 = vmatpush1.msra.mxu0 0.0
          %4029 = vmatprep.subr.mxu0 0.0
          %4030 = vmatpush1.msra.mxu0 0.0
          %4031 = vmatprep.subr.mxu0 0.0
          %4032 = vmatpush1.msra.mxu0 0.0
          %4033 = vmatprep.subr.mxu0 0.0
          %4034 = vmatpush1.msra.mxu0 0.0
          %4035 = vmatprep.subr.mxu0 0.0
          %4036 = vmatpush1.msra.mxu0 0.0
          %4037 = vmatprep.subr.mxu0 0.0
          %4038 = vmatpush1.msra.mxu0 0.0
          %4039 = vmatprep.subr.mxu0 0.0
          %4040 = vmatpush1.msra.mxu0 0.0
          %4041 = vmatprep.subr.mxu0 0.0
          %4042 = vmatpush1.msra.mxu0 0.0
          %4043 = vmatprep.subr.mxu0 0.0
          %4044 = vmatpush1.msra.mxu0 0.0
          %4045 = vmatprep.subr.mxu0 0.0
          %4046 = vmatpush1.msra.mxu0 0.0
          %4047 = vmatprep.subr.mxu0 0.0
          %4048 = vmatpush1.msra.mxu0 0.0
          %4049 = vmatprep.subr.mxu0 0.0
          %4050 = vmatpush1.msra.mxu0 0.0
          %4051 = vmatprep.subr.mxu0 0.0
          %4052 = vmatpush1.msra.mxu0 0.0
          %4053 = vmatprep.subr.mxu0 0.0
          %4054 = vmatpush1.msra.mxu0 %v2275
          %4055 = vmatprep.subr.mxu0 0.0
          %4056 = vmatpush1.msra.mxu0 %v2274
          %4057 = vmatprep.subr.mxu0 0.0
          %4058 = vmatpush2.msra.mxu0 0.0
          %4059 = vmatprep.subr.mxu0 0.0
          %4060 = vmatpush2.msra.mxu0 0.0
          %4061 = vmatprep.subr.mxu0 0.0
          %4062 = vmatpush2.msra.mxu0 0.0
          %4063 = vmatprep.subr.mxu0 0.0
          %4064 = vmatpush2.msra.mxu0 0.0
          %4065 = vmatprep.subr.mxu0 0.0
          %4066 = vmatpush2.msra.mxu0 0.0
          %4067 = vmatprep.subr.mxu0 0.0
          %4068 = vmatpush2.msra.mxu0 0.0
          %4069 = vmatprep.subr.mxu0 0.0
          %4070 = vmatpush2.msra.mxu0 0.0
          %4071 = vmatprep.subr.mxu0 0.0
          %4072 = vmatpush2.msra.mxu0 0.0
          %4073 = vmatprep.subr.mxu0 0.0
          %4074 = vmatpush2.msra.mxu0 0.0
          %4075 = vmatprep.subr.mxu0 0.0
          %4076 = vmatpush2.msra.mxu0 0.0
          %4077 = vmatprep.subr.mxu0 0.0
          %4078 = vmatpush2.msra.mxu0 0.0
          %4079 = vmatprep.subr.mxu0 0.0
          %4080 = vmatpush2.msra.mxu0 0.0
          %4081 = vmatprep.subr.mxu0 0.0
          %4082 = vmatpush2.msra.mxu0 0.0
          %4083 = vmatprep.subr.mxu0 0.0
          %4084 = vmatpush2.msra.mxu0 0.0
          %4085 = vmatprep.subr.mxu0 0.0
          %4086 = vmatpush2.msra.mxu0 0.0
          %4087 = vmatprep.subr.mxu0 0.0
          %4088 = vmatpush2.msra.mxu0 0.0
          %4089 = vmatprep.mubr.f32.mxu0 0.0
          %4090 = vmatmul.mubr.f32.gmra.mxu0 %v4023
          %v4091 = vpop.f32.mrf.mxu0
          %v4092 = vadd.f32 0.0, %v4091
          %v4093 = vpop.f32.mrf.mxu0
          %4094 = vdwg.mxu0
          %v4096 = vrot.slane %v4092, 7
          %4097 = vrot.lane.b32.xlu0 %v4096, 64
          %v4098 = vpop.permute.xlu0 %4097
          %4099 = vrot.lane.b32.xlu0 %v4092, 64
          %v4100 = vpop.permute.xlu0 %4099
          %v4103 = vadd.f32 %v2185, %v4098
          %v4104 = vadd.f32 %v2190, %v4100
          %v4105 = vsub.f32 0.0, %v4016
          %v4106 = vsub.f32 0.0, %v4017
          %v4107 = vmul.f32 %v4105, 1.442695
          %v4108 = vpow.pop %v4107
          %v4109 = vmul.f32 %v4106, 1.442695
          %v4110 = vpow.pop %v4109
          %v4111 = vadd.f32 %v4108, 1.0
          %v4112 = vadd.f32 %v4110, 1.0
          %v4113 = vrcp.pop %v4111
          %v4114 = vmul.f32 1.0, %v4113
          %v4115 = vrcp.pop %v4112
          %v4116 = vmul.f32 1.0, %v4115
          %v4117 = vtanh.pop %v4016
          %v4118 = vtanh.pop %v4017
          %v4121 = vrot.slane %v3851, 7
          %v4122 = vrot.slane %v3852, 7
          %v4125 = vmul.f32 %v4114, %v4121
          %v4126 = vmul.f32 %v4116, %v4122
          %4129 = vrot.lane.b32.xlu0 %v4117, 80
          %v4130 = vpop.permute.xlu0 %4129
          %4131 = vrot.lane.b32.xlu0 %v4118, 80
          %v4132 = vpop.permute.xlu0 %4131
          %v4135 = vmul.f32 %v4114, %v4130
          %v4136 = vmul.f32 %v4116, %v4132
          %4139 = vrot.lane.b32.xlu0 %v4135, 16
          %v4140 = vpop.permute.xlu0 %4139
          %4141 = vrot.lane.b32.xlu0 %v4136, 16
          %v4142 = vpop.permute.xlu0 %4141
          %v4145 = vadd.f32 %v4125, %v4140
          %v4146 = vadd.f32 %v4126, %v4142
          %v4147 = vtanh.pop %v4145
          %v4148 = vtanh.pop %v4146
          %4151 = vrot.lane.b32.xlu0 %v4147, 16
          %v4152 = vpop.permute.xlu0 %4151
          %4153 = vrot.lane.b32.xlu0 %v4148, 16
          %v4154 = vpop.permute.xlu0 %4153
          %v4157 = vmul.f32 %v4114, %v4152
          %v4158 = vmul.f32 %v4116, %v4154
          %v4159 = vsub.f32 0.0, %v4103
          %v4160 = vsub.f32 0.0, %v4104
          %v4161 = vmul.f32 %v4159, 1.442695
          %v4162 = vpow.pop %v4161
          %v4163 = vmul.f32 %v4160, 1.442695
          %v4164 = vpow.pop %v4163
          %v4165 = vadd.f32 %v4162, 1.0
          %v4166 = vadd.f32 %v4164, 1.0
          %v4167 = vrcp.pop %v4165
          %v4168 = vmul.f32 1.0, %v4167
          %v4169 = vrcp.pop %v4166
          %v4170 = vmul.f32 1.0, %v4169
          %v4171 = vtanh.pop %v4103
          %v4172 = vtanh.pop %v4104
          %v4175 = vrot.slane %v3905, 1
          %v4176 = vrot.slane %v3906, 1
          %v4179 = vmul.f32 %v4168, %v4175
          %v4180 = vmul.f32 %v4170, %v4176
          %4183 = vrot.lane.b32.xlu0 %v4171, 80
          %v4184 = vpop.permute.xlu0 %4183
          %4185 = vrot.lane.b32.xlu0 %v4172, 80
          %v4186 = vpop.permute.xlu0 %4185
          %v4189 = vmul.f32 %v4168, %v4184
          %v4190 = vmul.f32 %v4170, %v4186
          %4193 = vrot.lane.b32.xlu0 %v4189, 16
          %v4194 = vpop.permute.xlu0 %4193
          %4195 = vrot.lane.b32.xlu0 %v4190, 16
          %v4196 = vpop.permute.xlu0 %4195
          %v4199 = vadd.f32 %v4179, %v4194
          %v4200 = vadd.f32 %v4180, %v4196
          %v4201 = vtanh.pop %v4199
          %v4202 = vtanh.pop %v4200
          %4205 = vrot.lane.b32.xlu0 %v4201, 16
          %v4206 = vpop.permute.xlu0 %4205
          %4207 = vrot.lane.b32.xlu0 %v4202, 16
          %v4208 = vpop.permute.xlu0 %4207
          %v4211 = vmul.f32 %v4168, %v4206
          %v4212 = vmul.f32 %v4170, %v4208
          %v4215 = vrot.slane %v4157, 6
          %v4216 = vrot.slane %v4158, 6
          %v4219 = vadd.f32 %v3925, %v4215
          %v4220 = vadd.f32 %v3926, %v4216
          %v4223 = vrot.slane %v4211, 2
          %v4224 = vrot.slane %v4212, 2
          %v4227 = vadd.f32 %v3933, %v4223
          %v4228 = vadd.f32 %v3934, %v4224
          %v4229 = vrot.slane %v4158, 5
          %v4230 = vsel %vm2460, %v4229, %v4215
          %4231 = vrot.lane.b32.xlu0 %v4230, 96
          %v4232 = vpop.permute.xlu0 %4231
          %v4233 = vsel %vm995, %v4232, 0
          %4235 = vmatprep.subr.mxu0 0.0
          %4236 = vmatpush1.msra.mxu0 0.0
          %4237 = vmatprep.subr.mxu0 0.0
          %4238 = vmatpush1.msra.mxu0 0.0
          %4239 = vmatprep.subr.mxu0 0.0
          %4240 = vmatpush1.msra.mxu0 0.0
          %4241 = vmatprep.subr.mxu0 0.0
          %4242 = vmatpush1.msra.mxu0 0.0
          %4243 = vmatprep.subr.mxu0 0.0
          %4244 = vmatpush1.msra.mxu0 0.0
          %4245 = vmatprep.subr.mxu0 0.0
          %4246 = vmatpush1.msra.mxu0 0.0
          %4247 = vmatprep.subr.mxu0 0.0
          %4248 = vmatpush1.msra.mxu0 0.0
          %4249 = vmatprep.subr.mxu0 0.0
          %4250 = vmatpush1.msra.mxu0 0.0
          %4251 = vmatprep.subr.mxu0 0.0
          %4252 = vmatpush1.msra.mxu0 0.0
          %4253 = vmatprep.subr.mxu0 0.0
          %4254 = vmatpush1.msra.mxu0 0.0
          %4255 = vmatprep.subr.mxu0 0.0
          %4256 = vmatpush1.msra.mxu0 0.0
          %4257 = vmatprep.subr.mxu0 0.0
          %4258 = vmatpush1.msra.mxu0 0.0
          %4259 = vmatprep.subr.mxu0 0.0
          %4260 = vmatpush1.msra.mxu0 0.0
          %4261 = vmatprep.subr.mxu0 0.0
          %4262 = vmatpush1.msra.mxu0 0.0
          %4263 = vmatprep.subr.mxu0 0.0
          %4264 = vmatpush1.msra.mxu0 %v2194
          %4265 = vmatprep.subr.mxu0 0.0
          %4266 = vmatpush1.msra.mxu0 %v2193
          %4267 = vmatprep.subr.mxu0 0.0
          %4268 = vmatpush2.msra.mxu0 0.0
          %4269 = vmatprep.subr.mxu0 0.0
          %4270 = vmatpush2.msra.mxu0 0.0
          %4271 = vmatprep.subr.mxu0 0.0
          %4272 = vmatpush2.msra.mxu0 0.0
          %4273 = vmatprep.subr.mxu0 0.0
          %4274 = vmatpush2.msra.mxu0 0.0
          %4275 = vmatprep.subr.mxu0 0.0
          %4276 = vmatpush2.msra.mxu0 0.0
          %4277 = vmatprep.subr.mxu0 0.0
          %4278 = vmatpush2.msra.mxu0 0.0
          %4279 = vmatprep.subr.mxu0 0.0
          %4280 = vmatpush2.msra.mxu0 0.0
          %4281 = vmatprep.subr.mxu0 0.0
          %4282 = vmatpush2.msra.mxu0 0.0
          %4283 = vmatprep.subr.mxu0 0.0
          %4284 = vmatpush2.msra.mxu0 0.0
          %4285 = vmatprep.subr.mxu0 0.0
          %4286 = vmatpush2.msra.mxu0 0.0
          %4287 = vmatprep.subr.mxu0 0.0
          %4288 = vmatpush2.msra.mxu0 0.0
          %4289 = vmatprep.subr.mxu0 0.0
          %4290 = vmatpush2.msra.mxu0 0.0
          %4291 = vmatprep.subr.mxu0 0.0
          %4292 = vmatpush2.msra.mxu0 0.0
          %4293 = vmatprep.subr.mxu0 0.0
          %4294 = vmatpush2.msra.mxu0 0.0
          %4295 = vmatprep.subr.mxu0 0.0
          %4296 = vmatpush2.msra.mxu0 0.0
          %4297 = vmatprep.subr.mxu0 0.0
          %4298 = vmatpush2.msra.mxu0 0.0
          %4299 = vmatprep.mubr.f32.mxu0 0.0
          %4300 = vmatmul.mubr.f32.gmra.mxu0 %v4233
          %v4301 = vpop.f32.mrf.mxu0
          %v4302 = vadd.f32 0.0, %v4301
          %v4303 = vpop.f32.mrf.mxu0
          %4304 = vdwg.mxu0
          %v4306 = vrot.slane %v4302, 1
          %v4307 = vrot.slane %v4302, 2
          %v4310 = vadd.f32 %v2185, %v4306
          %v4311 = vadd.f32 %v2190, %v4307
          %v4312 = vrot.slane %v4211, 1
          %v4313 = vsel %vm2460, %v4212, %v4312
          %4314 = vrot.lane.b32.xlu0 %v4313, 32
          %v4315 = vpop.permute.xlu0 %4314
          %v4316 = vsel %vm995, %v4315, 0
          %4318 = vmatprep.subr.mxu0 0.0
          %4319 = vmatpush1.msra.mxu0 0.0
          %4320 = vmatprep.subr.mxu0 0.0
          %4321 = vmatpush1.msra.mxu0 0.0
          %4322 = vmatprep.subr.mxu0 0.0
          %4323 = vmatpush1.msra.mxu0 0.0
          %4324 = vmatprep.subr.mxu0 0.0
          %4325 = vmatpush1.msra.mxu0 0.0
          %4326 = vmatprep.subr.mxu0 0.0
          %4327 = vmatpush1.msra.mxu0 0.0
          %4328 = vmatprep.subr.mxu0 0.0
          %4329 = vmatpush1.msra.mxu0 0.0
          %4330 = vmatprep.subr.mxu0 0.0
          %4331 = vmatpush1.msra.mxu0 0.0
          %4332 = vmatprep.subr.mxu0 0.0
          %4333 = vmatpush1.msra.mxu0 0.0
          %4334 = vmatprep.subr.mxu0 0.0
          %4335 = vmatpush1.msra.mxu0 0.0
          %4336 = vmatprep.subr.mxu0 0.0
          %4337 = vmatpush1.msra.mxu0 0.0
          %4338 = vmatprep.subr.mxu0 0.0
          %4339 = vmatpush1.msra.mxu0 0.0
          %4340 = vmatprep.subr.mxu0 0.0
          %4341 = vmatpush1.msra.mxu0 0.0
          %4342 = vmatprep.subr.mxu0 0.0
          %4343 = vmatpush1.msra.mxu0 0.0
          %4344 = vmatprep.subr.mxu0 0.0
          %4345 = vmatpush1.msra.mxu0 0.0
          %4346 = vmatprep.subr.mxu0 0.0
          %4347 = vmatpush1.msra.mxu0 %v2275
          %4348 = vmatprep.subr.mxu0 0.0
          %4349 = vmatpush1.msra.mxu0 %v2274
          %4350 = vmatprep.subr.mxu0 0.0
          %4351 = vmatpush2.msra.mxu0 0.0
          %4352 = vmatprep.subr.mxu0 0.0
          %4353 = vmatpush2.msra.mxu0 0.0
          %4354 = vmatprep.subr.mxu0 0.0
          %4355 = vmatpush2.msra.mxu0 0.0
          %4356 = vmatprep.subr.mxu0 0.0
          %4357 = vmatpush2.msra.mxu0 0.0
          %4358 = vmatprep.subr.mxu0 0.0
          %4359 = vmatpush2.msra.mxu0 0.0
          %4360 = vmatprep.subr.mxu0 0.0
          %4361 = vmatpush2.msra.mxu0 0.0
          %4362 = vmatprep.subr.mxu0 0.0
          %4363 = vmatpush2.msra.mxu0 0.0
          %4364 = vmatprep.subr.mxu0 0.0
          %4365 = vmatpush2.msra.mxu0 0.0
          %4366 = vmatprep.subr.mxu0 0.0
          %4367 = vmatpush2.msra.mxu0 0.0
          %4368 = vmatprep.subr.mxu0 0.0
          %4369 = vmatpush2.msra.mxu0 0.0
          %4370 = vmatprep.subr.mxu0 0.0
          %4371 = vmatpush2.msra.mxu0 0.0
          %4372 = vmatprep.subr.mxu0 0.0
          %4373 = vmatpush2.msra.mxu0 0.0
          %4374 = vmatprep.subr.mxu0 0.0
          %4375 = vmatpush2.msra.mxu0 0.0
          %4376 = vmatprep.subr.mxu0 0.0
          %4377 = vmatpush2.msra.mxu0 0.0
          %4378 = vmatprep.subr.mxu0 0.0
          %4379 = vmatpush2.msra.mxu0 0.0
          %4380 = vmatprep.subr.mxu0 0.0
          %4381 = vmatpush2.msra.mxu0 0.0
          %4382 = vmatprep.mubr.f32.mxu0 0.0
          %4383 = vmatmul.mubr.f32.gmra.mxu0 %v4316
          %v4384 = vpop.f32.mrf.mxu0
          %v4385 = vadd.f32 0.0, %v4384
          %v4386 = vpop.f32.mrf.mxu0
          %4387 = vdwg.mxu0
          %v4389 = vrot.slane %v4385, 1
          %4390 = vrot.lane.b32.xlu0 %v4385, 64
          %v4391 = vpop.permute.xlu0 %4390
          %4392 = vrot.lane.b32.xlu0 %v4389, 64
          %v4393 = vpop.permute.xlu0 %4392
          %v4396 = vadd.f32 %v2185, %v4391
          %v4397 = vadd.f32 %v2190, %v4393
          %v4398 = vsub.f32 0.0, %v4310
          %v4399 = vsub.f32 0.0, %v4311
          %v4400 = vmul.f32 %v4398, 1.442695
          %v4401 = vpow.pop %v4400
          %v4402 = vmul.f32 %v4399, 1.442695
          %v4403 = vpow.pop %v4402
          %v4404 = vadd.f32 %v4401, 1.0
          %v4405 = vadd.f32 %v4403, 1.0
          %v4406 = vrcp.pop %v4404
          %v4407 = vmul.f32 1.0, %v4406
          %v4408 = vrcp.pop %v4405
          %v4409 = vmul.f32 1.0, %v4408
          %v4410 = vtanh.pop %v4310
          %v4411 = vtanh.pop %v4311
          %v4414 = vrot.slane %v4145, 7
          %v4415 = vrot.slane %v4146, 7
          %v4418 = vmul.f32 %v4407, %v4414
          %v4419 = vmul.f32 %v4409, %v4415
          %4422 = vrot.lane.b32.xlu0 %v4410, 80
          %v4423 = vpop.permute.xlu0 %4422
          %4424 = vrot.lane.b32.xlu0 %v4411, 80
          %v4425 = vpop.permute.xlu0 %4424
          %v4428 = vmul.f32 %v4407, %v4423
          %v4429 = vmul.f32 %v4409, %v4425
          %4432 = vrot.lane.b32.xlu0 %v4428, 16
          %v4433 = vpop.permute.xlu0 %4432
          %4434 = vrot.lane.b32.xlu0 %v4429, 16
          %v4435 = vpop.permute.xlu0 %4434
          %v4438 = vadd.f32 %v4418, %v4433
          %v4439 = vadd.f32 %v4419, %v4435
          %v4440 = vtanh.pop %v4438
          %v4441 = vtanh.pop %v4439
          %4444 = vrot.lane.b32.xlu0 %v4440, 16
          %v4445 = vpop.permute.xlu0 %4444
          %4446 = vrot.lane.b32.xlu0 %v4441, 16
          %v4447 = vpop.permute.xlu0 %4446
          %v4450 = vmul.f32 %v4407, %v4445
          %v4451 = vmul.f32 %v4409, %v4447
          %v4452 = vsub.f32 0.0, %v4396
          %v4453 = vsub.f32 0.0, %v4397
          %v4454 = vmul.f32 %v4452, 1.442695
          %v4455 = vpow.pop %v4454
          %v4456 = vmul.f32 %v4453, 1.442695
          %v4457 = vpow.pop %v4456
          %v4458 = vadd.f32 %v4455, 1.0
          %v4459 = vadd.f32 %v4457, 1.0
          %v4460 = vrcp.pop %v4458
          %v4461 = vmul.f32 1.0, %v4460
          %v4462 = vrcp.pop %v4459
          %v4463 = vmul.f32 1.0, %v4462
          %v4464 = vtanh.pop %v4396
          %v4465 = vtanh.pop %v4397
          %v4468 = vrot.slane %v4199, 1
          %v4469 = vrot.slane %v4200, 1
          %v4472 = vmul.f32 %v4461, %v4468
          %v4473 = vmul.f32 %v4463, %v4469
          %4476 = vrot.lane.b32.xlu0 %v4464, 80
          %v4477 = vpop.permute.xlu0 %4476
          %4478 = vrot.lane.b32.xlu0 %v4465, 80
          %v4479 = vpop.permute.xlu0 %4478
          %v4482 = vmul.f32 %v4461, %v4477
          %v4483 = vmul.f32 %v4463, %v4479
          %4486 = vrot.lane.b32.xlu0 %v4482, 16
          %v4487 = vpop.permute.xlu0 %4486
          %4488 = vrot.lane.b32.xlu0 %v4483, 16
          %v4489 = vpop.permute.xlu0 %4488
          %v4492 = vadd.f32 %v4472, %v4487
          %v4493 = vadd.f32 %v4473, %v4489
          %v4494 = vtanh.pop %v4492
          %v4495 = vtanh.pop %v4493
          %4498 = vrot.lane.b32.xlu0 %v4494, 16
          %v4499 = vpop.permute.xlu0 %4498
          %4500 = vrot.lane.b32.xlu0 %v4495, 16
          %v4501 = vpop.permute.xlu0 %4500
          %v4504 = vmul.f32 %v4461, %v4499
          %v4505 = vmul.f32 %v4463, %v4501
          %v4508 = vrot.slane %v4450, 7
          %v4509 = vrot.slane %v4451, 7
          %v4512 = vadd.f32 %v4219, %v4508
          %v4513 = vadd.f32 %v4220, %v4509
          %v4516 = vrot.slane %v4504, 1
          %v4517 = vrot.slane %v4505, 1
          %v4520 = vadd.f32 %v4227, %v4516
          %v4521 = vadd.f32 %v4228, %v4517
          %v4524 = vrot.slane %v4513, 7
          %v4525 = vsel %vm2460, %v4524, %v4512
          %4526 = vrot.lane.b32.xlu0 %v4525, 96
          %v4527 = vpop.permute.xlu0 %4526
          %v4531 = vrot.slane %v4520, 7
          %v4532 = vrot.slane %v4521, 6
          %v4533 = vsel %vm2460, %v4532, %v4531
          %4534 = vrot.lane.b32.xlu0 %v4533, 48
          %v4535 = vpop.permute.xlu0 %4534
          %v4537 = vsel %vm995, %v4527, %v4535
          %v4538 = vmul.f32 %v4537, 0.125
          %v4539 = vld [vmem:[%s20] sm:$0xff]
          %v4540 = vld [vmem:[%s20 + $0x8] sm:$0xff]
          %v4541 = vld [vmem:[%s20 + $0x10] sm:$0xff]
          %v4542 = vld [vmem:[%s20 + $0x18] sm:$0xff]
          %v4543 = vld [vmem:[%s21] sm:$0x1]
          %v4545 = vlaneseq
          %v4546 = vshrl.u32 %v4545, 7
          %v4547 = vsub.s32 0, %v4546
          %v4548 = vrot.slane %v4543, %v4547
          %v4551 = vsel %vm909, %v4538, 0
          %4553 = vmatprep.subr.mxu0 0.0
          %4554 = vmatpush1.msra.mxu0 0.0
          %4555 = vmatprep.subr.mxu0 0.0
          %4556 = vmatpush1.msra.mxu0 0.0
          %4557 = vmatprep.subr.mxu0 0.0
          %4558 = vmatpush1.msra.mxu0 0.0
          %4559 = vmatprep.subr.mxu0 0.0
          %4560 = vmatpush1.msra.mxu0 0.0
          %4561 = vmatprep.subr.mxu0 0.0
          %4562 = vmatpush1.msra.mxu0 0.0
          %4563 = vmatprep.subr.mxu0 0.0
          %4564 = vmatpush1.msra.mxu0 0.0
          %4565 = vmatprep.subr.mxu0 0.0
          %4566 = vmatpush1.msra.mxu0 0.0
          %4567 = vmatprep.subr.mxu0 0.0
          %4568 = vmatpush1.msra.mxu0 0.0
          %4569 = vmatprep.subr.mxu0 0.0
          %4570 = vmatpush1.msra.mxu0 0.0
          %4571 = vmatprep.subr.mxu0 0.0
          %4572 = vmatpush1.msra.mxu0 0.0
          %4573 = vmatprep.subr.mxu0 0.0
          %4574 = vmatpush1.msra.mxu0 0.0
          %4575 = vmatprep.subr.mxu0 0.0
          %4576 = vmatpush1.msra.mxu0 0.0
          %4577 = vmatprep.subr.mxu0 0.0
          %4578 = vmatpush1.msra.mxu0 %v4542
          %4579 = vmatprep.subr.mxu0 0.0
          %4580 = vmatpush1.msra.mxu0 %v4541
          %4581 = vmatprep.subr.mxu0 0.0
          %4582 = vmatpush1.msra.mxu0 %v4540
          %4583 = vmatprep.subr.mxu0 0.0
          %4584 = vmatpush1.msra.mxu0 %v4539
          %4585 = vmatprep.subr.mxu0 0.0
          %4586 = vmatpush2.msra.mxu0 0.0
          %4587 = vmatprep.subr.mxu0 0.0
          %4588 = vmatpush2.msra.mxu0 0.0
          %4589 = vmatprep.subr.mxu0 0.0
          %4590 = vmatpush2.msra.mxu0 0.0
          %4591 = vmatprep.subr.mxu0 0.0
          %4592 = vmatpush2.msra.mxu0 0.0
          %4593 = vmatprep.subr.mxu0 0.0
          %4594 = vmatpush2.msra.mxu0 0.0
          %4595 = vmatprep.subr.mxu0 0.0
          %4596 = vmatpush2.msra.mxu0 0.0
          %4597 = vmatprep.subr.mxu0 0.0
          %4598 = vmatpush2.msra.mxu0 0.0
          %4599 = vmatprep.subr.mxu0 0.0
          %4600 = vmatpush2.msra.mxu0 0.0
          %4601 = vmatprep.subr.mxu0 0.0
          %4602 = vmatpush2.msra.mxu0 0.0
          %4603 = vmatprep.subr.mxu0 0.0
          %4604 = vmatpush2.msra.mxu0 0.0
          %4605 = vmatprep.subr.mxu0 0.0
          %4606 = vmatpush2.msra.mxu0 0.0
          %4607 = vmatprep.subr.mxu0 0.0
          %4608 = vmatpush2.msra.mxu0 0.0
          %4609 = vmatprep.subr.mxu0 0.0
          %4610 = vmatpush2.msra.mxu0 0.0
          %4611 = vmatprep.subr.mxu0 0.0
          %4612 = vmatpush2.msra.mxu0 0.0
          %4613 = vmatprep.subr.mxu0 0.0
          %4614 = vmatpush2.msra.mxu0 0.0
          %4615 = vmatprep.subr.mxu0 0.0
          %4616 = vmatpush2.msra.mxu0 0.0
          %4617 = vmatprep.mubr.f32.mxu0 0.0
          %4618 = vmatmul.mubr.f32.gmra.mxu0 %v4551
          %v4619 = vpop.f32.mrf.mxu0
          %v4620 = vadd.f32 %v4548, %v4619
          %v4621 = vpop.f32.mrf.mxu0
          %4622 = vdwg.mxu0
          %4623 = vst [vmem:[#allocation3] sm:$0x3] %v4620
        $region116: #{forward.1} parent=107 // pred_fallthru
          _
        // Predicated region
        $region117: #{forward.1} parent=107 // pred_check
          %p4624 = pneg %p569
        $region118: #{forward.1} parent=107 // pred_check_branch
          %4626 = sbr.rel (%p4624) target = $region120
        $region119: #{forward.1} parent=107 // pred_region
          %s4628 = ssub.s32 32, 32
          %4629 = vsyncadd [#allocation4], %s4628
          %s4631 = sshll.u32 [#allocation3], 4
          %s4632 = int_to_ptr.vmem [resolvable:$true] %s4631
          %4634 = dma.vmem_to_hbm [thread:$0]  %s4632, 32, %s22, [#allocation4]
        $region120: #{forward.1} parent=107 // pred_fallthru
          _
        // Predicated region
        $region121: #{forward.1} parent=107 // pred_check
          %p4635 = pneg %p569
        $region122: #{forward.1} parent=107 // pred_check_branch
          %4637 = sbr.rel (%p4635) target = $region124
        $region123: #{forward.1} parent=107 // pred_region
          %4638 = dma.done [#allocation4], 32
        $region124: #{forward.1} parent=107 // pred_fallthru
          _
      $region108: #{forward.1} parent=5 // pred_fallthru
        _
      %p4639 = scmp.le.s32.totalorder 2, %s29
      // Predicated region
      $region125: #{forward.1} parent=5 // pred_check
        %p4640 = pneg %p4639
      $region126: #{forward.1} parent=5 // pred_check_branch
        %4642 = sbr.rel (%p4640) target = $region128
      $region127: #{forward.1} parent=5 // pred_region
        %s4643 = ssub.s32 %s29, 2
      $region128: #{forward.1} parent=5 // pred_fallthru
        _
    $region6: #{forward.1} parent=1 // loop_footer
      %s33 = sadd.s32 1, %s29
    $region7: #{forward.1} parent=1 // loop_footer_branch
      %28 = sbr.rel target = $region3
    $region8: #{forward.1} parent=1 // loop_exit
      _
    %4644 = vsyncpa [#allocation4], 1
    %s4645 = scalar_lea.sflag [#allocation4], 1
    %4646 = vsyncpa %s4645, 1

</llo_original>
